<compile_context>
chip_gen: v7x
topology: tpu7x:2x2x1
jax: 0.10.0
libtpu: 0.0.40
codegen_flags: <defaults>
</compile_context>

<pallas_src>
import math

import jax
import jax.numpy as jnp
from jax import lax
from jax.experimental import pallas as pl
from jax.experimental.pallas import tpu as pltpu


_F_CHUNK = 512  # width of the 4H intermediate handled per MXU pass


def ffn_kernel(x_ref, w1_ref, b1_ref, w2_ref, b2_ref, gamma_ref, beta_ref, out_ref):
    x = x_ref[...]                                   # (bm, H) f32 — residual path
    xb = x.astype(w1_ref.dtype)                      # bf16 copy for the MXU

    bm, hd = x.shape
    f = w1_ref.shape[1]
    fc = _F_CHUNK if f % _F_CHUNK == 0 else f

    c0 = jnp.float32(math.sqrt(2.0 / math.pi))
    c1 = jnp.float32(0.044715)
    half = jnp.float32(0.5)
    one = jnp.float32(1.0)

    # fc1 -> tanh-GELU -> fc2, chunked over the 4H axis so live (bm, fc)
    # intermediates stay small (caps spill traffic at large bm).  Static
    # slices, lane-dense 512-wide pieces -> unmasked vld/vst, full MXU tiles.
    acc = jnp.zeros((bm, hd), jnp.float32)
    for f0 in range(0, f, fc):
        h = jnp.dot(xb, w1_ref[:, f0:f0 + fc],
                    preferred_element_type=jnp.float32) + b1_ref[:, f0:f0 + fc]
        cdf = half * (one + jnp.tanh(c0 * (h + c1 * h * h * h)))   # tanh -> EUP
        g = (h * cdf).astype(w2_ref.dtype)
        acc = acc + jnp.dot(g, w2_ref[f0:f0 + fc, :],
                            preferred_element_type=jnp.float32)

    # fc2 bias + residual, then Norm(): mean / *unbiased* variance (torch.var
    # default) over the feature dim, eps=1e-8, scalar gamma/beta from SMEM.
    y = acc + b2_ref[...] + x
    mu = jnp.mean(y, axis=-1, keepdims=True)
    diff = y - mu
    var = jnp.sum(diff * diff, axis=-1, keepdims=True) * jnp.float32(1.0 / (hd - 1))
    inv_std = lax.rsqrt(var + jnp.float32(1e-8))     # EUP rsqrt + mul, no divide
    gamma = gamma_ref[0]
    beta = beta_ref[0]
    out_ref[...] = (gamma * (diff * inv_std) + beta).astype(out_ref.dtype)


def prepare_ffn_params(params, matmul_dtype=jnp.bfloat16):
    """One-time parameter prep (hoisted out of the per-call path): transpose to
    x @ W layout and cast the large weights to bf16 (halves weight DMA bytes).
    Biases / gamma / beta stay f32."""
    w1, b1 = params["w1"], params["b1"]              # (4H, H), (4H,)  PyTorch layout
    w2, b2 = params["w2"], params["b2"]              # (H, 4H), (H,)
    F, H = w1.shape
    return {
        "w1_t": jnp.asarray(w1.T, matmul_dtype),     # (H, 4H)
        "b1": jnp.asarray(b1, jnp.float32).reshape(1, F),
        "w2_t": jnp.asarray(w2.T, matmul_dtype),     # (4H, H)
        "b2": jnp.asarray(b2, jnp.float32).reshape(1, H),
        "gamma": jnp.asarray(params["gamma"], jnp.float32).reshape(1),
        "beta": jnp.asarray(params["beta"], jnp.float32).reshape(1),
    }


def ffn_pallas(x, prep, *, block_m=None):
    B, L, H = x.shape
    M = B * L
    w1_t, b1 = prep["w1_t"], prep["b1"]
    w2_t, b2 = prep["w2_t"], prep["b2"]
    gamma, beta = prep["gamma"], prep["beta"]
    F = w1_t.shape[1]
    assert H % 128 == 0 and F % 128 == 0, (H, F)     # lane-dense widths

    if block_m is None:
        # <=128 rows: v5e 16 MiB scoped-VMEM safe, keeps the MXU fed; small
        # calls use one padded block.
        block_m = min(128, -(-M // 8) * 8)
    assert block_m % 8 == 0, block_m

    Mp = -(-M // block_m) * block_m                  # pad rows to a block multiple
    x2 = x.reshape(M, H)
    if Mp != M:
        x2 = jnp.pad(x2, ((0, Mp - M), (0, 0)))

    # Only split the row grid across TensorCores once per-core compute
    # outweighs duplicating the weight stream (kernel is weight-DMA bound
    # at small M).
    semantics = ("parallel",) if Mp >= 1024 else ("arbitrary",)

    w_item = jnp.dtype(w1_t.dtype).itemsize
    cost = pl.CostEstimate(
        flops=4 * Mp * H * F,                        # two matmuls
        transcendentals=Mp * F,                      # tanh in the GELU
        bytes_accessed=2 * H * F * w_item + (F + H) * 4 + 2 * Mp * H * 4,
    )

    rep = lambda i: (0, 0)                           # weights replicated per step
    single = pl.Buffered(1)                          # constant blocks: no double-buffer
    out2 = pl.pallas_call(
        ffn_kernel,
        out_shape=jax.ShapeDtypeStruct((Mp, H), x.dtype),
        grid=(Mp // block_m,),
        in_specs=[
            pl.BlockSpec((block_m, H), lambda i: (i, 0)),               # x rows
            pl.BlockSpec((H, F), rep, pipeline_mode=single),            # w1^T (bf16)
            pl.BlockSpec((1, F), rep, pipeline_mode=single),            # b1   (f32)
            pl.BlockSpec((F, H), rep, pipeline_mode=single),            # w2^T (bf16)
            pl.BlockSpec((1, H), rep, pipeline_mode=single),            # b2   (f32)
            pl.BlockSpec(memory_space=pltpu.MemorySpace.SMEM),          # gamma
            pl.BlockSpec(memory_space=pltpu.MemorySpace.SMEM),          # beta
        ],
        out_specs=pl.BlockSpec((block_m, H), lambda i: (i, 0)),
        compiler_params=pltpu.CompilerParams(dimension_semantics=semantics),
        cost_estimate=cost,
    )(x2, w1_t, b1, w2_t, b2, gamma, beta)

    if Mp != M:
        out2 = out2[:M]
    return out2.reshape(B, L, H)


def ffn_ref(x, params):
    """Pure-JAX transcription of the PyTorch FFN.forward (dropout=False), f32."""
    w1, b1 = params["w1"], params["b1"]
    w2, b2 = params["w2"], params["b2"]
    gamma, beta = params["gamma"], params["beta"]
    h = x @ w1.T + b1
    cdf = 0.5 * (1.0 + jnp.tanh(math.sqrt(2.0 / math.pi) * (h + 0.044715 * h ** 3)))
    g = h * cdf
    out = g @ w2.T + b2
    y = out + x
    H = y.shape[-1]
    mu = jnp.mean(y, axis=2, keepdims=True)
    var = jnp.sum((y - mu) ** 2, axis=2, keepdims=True) / (H - 1)     # unbiased
    return gamma * ((y - mu) / jnp.sqrt(var + 1e-8)) + beta


def init_params(key, hidden_dim):
    F = 4 * hidden_dim
    k1, k2, k3, k4 = jax.random.split(key, 4)
    xavier1 = math.sqrt(2.0 / (hidden_dim + F))
    xavier2 = math.sqrt(2.0 / (F + hidden_dim))
    b1_bnd = 1.0 / math.sqrt(hidden_dim)
    b2_bnd = 1.0 / math.sqrt(F)
    return {
        "w1": xavier1 * jax.random.normal(k1, (F, hidden_dim), jnp.float32),
        "b1": jax.random.uniform(k2, (F,), jnp.float32, -b1_bnd, b1_bnd),
        "w2": xavier2 * jax.random.normal(k3, (hidden_dim, F), jnp.float32),
        "b2": jax.random.uniform(k4, (hidden_dim,), jnp.float32, -b2_bnd, b2_bnd),
        "gamma": jnp.float32(1.0),
        "beta": jnp.float32(0.0),
    }


if __name__ == "__main__":
    # Small shapes consistent with the module: batch=2, seq=8, hidden_dim=384.
    B, L, H = 2, 8, 384
    key = jax.random.PRNGKey(0)
    kx, kp = jax.random.split(key)

    x = jax.random.normal(kx, (B, L, H), jnp.float32)
    params = init_params(kp, H)
    prep = prepare_ffn_params(params)      # one-time transpose + bf16 cast

    # TODO(synk): nn.Dropout (dropout=True) branch not implemented; forward default
    # is dropout=False so it is a no-op here.
    # TODO(synk): at M=16 the call is weight-DMA bound; hiding the weight fetch would
    # need cross-call prefetch or fusing FFN into a larger per-layer kernel.

    out = jax.block_until_ready(ffn_pallas(x, prep))
    ref = ffn_ref(x, params)

    assert out.shape == (B, L, H) and out.dtype == jnp.float32
    max_err = float(jnp.max(jnp.abs(out - ref)))
    # bf16 matmuls with f32 accumulation: tolerance loosened vs the pure-f32 ref.
    assert jnp.allclose(out, ref, atol=2e-2, rtol=2e-2), max_err

    print("KERNEL_OK")
</pallas_src>

<mosaic_0001>
module attributes {stable_mosaic.version = 11 : i64} {
  func.func @ffn_kernel(%arg0: i32, %arg1: memref<16x384xf32, #tpu.memory_space<vmem>>, %arg2: memref<384x1536xbf16, #tpu.memory_space<vmem>>, %arg3: memref<1x1536xf32, #tpu.memory_space<vmem>>, %arg4: memref<1536x384xbf16, #tpu.memory_space<vmem>>, %arg5: memref<1x384xf32, #tpu.memory_space<vmem>>, %arg6: memref<1xf32, #tpu.memory_space<smem>>, %arg7: memref<1xf32, #tpu.memory_space<smem>>, %arg8: memref<16x384xf32, #tpu.memory_space<vmem>>) attributes {dimension_semantics = [#tpu.dimension_semantics<arbitrary>], iteration_bounds = array<i64: 1>, scalar_prefetch = 0 : i64, scratch_operands = 0 : i64, tpu.core_type = #tpu.core_type<tc>, window_params = [{transform_indices = @transform_0, window_bounds = array<i64: 16, 384>}, {pipeline_mode = #tpu.pipeline_mode<synchronous>, transform_indices = @transform_1, window_bounds = array<i64: 384, 1536>}, {pipeline_mode = #tpu.pipeline_mode<synchronous>, transform_indices = @transform_2, window_bounds = array<i64: 1, 1536>}, {pipeline_mode = #tpu.pipeline_mode<synchronous>, transform_indices = @transform_3, window_bounds = array<i64: 1536, 384>}, {pipeline_mode = #tpu.pipeline_mode<synchronous>, transform_indices = @transform_4, window_bounds = array<i64: 1, 384>}, {transform_indices = @transform_5, window_bounds = array<i64: 1>}, {transform_indices = @transform_6, window_bounds = array<i64: 1>}, {transform_indices = @transform_7, window_bounds = array<i64: 16, 384>}]} {
    %c0 = arith.constant 0 : index
    %c0_0 = arith.constant 0 : index
    %0 = vector.load %arg1[%c0, %c0_0] : memref<16x384xf32, #tpu.memory_space<vmem>>, vector<16x384xf32>
    %1 = arith.truncf %0 : vector<16x384xf32> to vector<16x384xbf16>
    %cst = arith.constant 0.000000e+00 : f32
    %2 = vector.broadcast %cst : f32 to vector<16x384xf32>
    %c0_1 = arith.constant 0 : index
    %c0_2 = arith.constant 0 : index
    %3 = vector.load %arg2[%c0_1, %c0_2] : memref<384x1536xbf16, #tpu.memory_space<vmem>>, vector<384x512xbf16>
    %cst_3 = arith.constant dense<0.000000e+00> : vector<16x512xf32>
    %4 = tpu.matmul %1, %3, %cst_3 {dimension_numbers = #tpu.dot_dimension_numbers<[1], [0], [0], [1], [0, 0, 1, 1], [], []>} : vector<16x384xbf16>, vector<384x512xbf16>, vector<16x512xf32> -> vector<16x512xf32>
    %c0_4 = arith.constant 0 : index
    %c0_5 = arith.constant 0 : index
    %5 = vector.load %arg3[%c0_4, %c0_5] : memref<1x1536xf32, #tpu.memory_space<vmem>>, vector<1x512xf32>
    %6 = vector.broadcast %5 : vector<1x512xf32> to vector<16x512xf32>
    %7 = arith.addf %4, %6 : vector<16x512xf32>
    %cst_6 = arith.constant 4.471500e-02 : f32
    %8 = vector.broadcast %cst_6 : f32 to vector<16x512xf32>
    %9 = arith.mulf %8, %7 : vector<16x512xf32>
    %10 = arith.mulf %9, %7 : vector<16x512xf32>
    %11 = arith.mulf %10, %7 : vector<16x512xf32>
    %12 = arith.addf %7, %11 : vector<16x512xf32>
    %cst_7 = arith.constant 0.797884583 : f32
    %13 = vector.broadcast %cst_7 : f32 to vector<16x512xf32>
    %14 = arith.mulf %13, %12 : vector<16x512xf32>
    %15 = math.tanh %14 : vector<16x512xf32>
    %cst_8 = arith.constant 1.000000e+00 : f32
    %16 = vector.broadcast %cst_8 : f32 to vector<16x512xf32>
    %17 = arith.addf %16, %15 : vector<16x512xf32>
    %cst_9 = arith.constant 5.000000e-01 : f32
    %18 = vector.broadcast %cst_9 : f32 to vector<16x512xf32>
    %19 = arith.mulf %18, %17 : vector<16x512xf32>
    %20 = arith.mulf %7, %19 : vector<16x512xf32>
    %21 = arith.truncf %20 : vector<16x512xf32> to vector<16x512xbf16>
    %c0_10 = arith.constant 0 : index
    %c0_11 = arith.constant 0 : index
    %22 = vector.load %arg4[%c0_10, %c0_11] : memref<1536x384xbf16, #tpu.memory_space<vmem>>, vector<512x384xbf16>
    %cst_12 = arith.constant dense<0.000000e+00> : vector<16x384xf32>
    %23 = tpu.matmul %21, %22, %cst_12 {dimension_numbers = #tpu.dot_dimension_numbers<[1], [0], [0], [1], [0, 0, 1, 1], [], []>} : vector<16x512xbf16>, vector<512x384xbf16>, vector<16x384xf32> -> vector<16x384xf32>
    %24 = arith.addf %2, %23 : vector<16x384xf32>
    %c0_13 = arith.constant 0 : index
    %c512 = arith.constant 512 : index
    %25 = vector.load %arg2[%c0_13, %c512] : memref<384x1536xbf16, #tpu.memory_space<vmem>>, vector<384x512xbf16>
    %cst_14 = arith.constant dense<0.000000e+00> : vector<16x512xf32>
    %26 = tpu.matmul %1, %25, %cst_14 {dimension_numbers = #tpu.dot_dimension_numbers<[1], [0], [0], [1], [0, 0, 1, 1], [], []>} : vector<16x384xbf16>, vector<384x512xbf16>, vector<16x512xf32> -> vector<16x512xf32>
    %c0_15 = arith.constant 0 : index
    %c512_16 = arith.constant 512 : index
    %27 = vector.load %arg3[%c0_15, %c512_16] : memref<1x1536xf32, #tpu.memory_space<vmem>>, vector<1x512xf32>
    %28 = vector.broadcast %27 : vector<1x512xf32> to vector<16x512xf32>
    %29 = arith.addf %26, %28 : vector<16x512xf32>
    %cst_17 = arith.constant 4.471500e-02 : f32
    %30 = vector.broadcast %cst_17 : f32 to vector<16x512xf32>
    %31 = arith.mulf %30, %29 : vector<16x512xf32>
    %32 = arith.mulf %31, %29 : vector<16x512xf32>
    %33 = arith.mulf %32, %29 : vector<16x512xf32>
    %34 = arith.addf %29, %33 : vector<16x512xf32>
    %cst_18 = arith.constant 0.797884583 : f32
    %35 = vector.broadcast %cst_18 : f32 to vector<16x512xf32>
    %36 = arith.mulf %35, %34 : vector<16x512xf32>
    %37 = math.tanh %36 : vector<16x512xf32>
    %cst_19 = arith.constant 1.000000e+00 : f32
    %38 = vector.broadcast %cst_19 : f32 to vector<16x512xf32>
    %39 = arith.addf %38, %37 : vector<16x512xf32>
    %cst_20 = arith.constant 5.000000e-01 : f32
    %40 = vector.broadcast %cst_20 : f32 to vector<16x512xf32>
    %41 = arith.mulf %40, %39 : vector<16x512xf32>
    %42 = arith.mulf %29, %41 : vector<16x512xf32>
    %43 = arith.truncf %42 : vector<16x512xf32> to vector<16x512xbf16>
    %c512_21 = arith.constant 512 : index
    %c0_22 = arith.constant 0 : index
    %44 = vector.load %arg4[%c512_21, %c0_22] : memref<1536x384xbf16, #tpu.memory_space<vmem>>, vector<512x384xbf16>
    %cst_23 = arith.constant dense<0.000000e+00> : vector<16x384xf32>
    %45 = tpu.matmul %43, %44, %cst_23 {dimension_numbers = #tpu.dot_dimension_numbers<[1], [0], [0], [1], [0, 0, 1, 1], [], []>} : vector<16x512xbf16>, vector<512x384xbf16>, vector<16x384xf32> -> vector<16x384xf32>
    %46 = arith.addf %24, %45 : vector<16x384xf32>
    %c0_24 = arith.constant 0 : index
    %c1024 = arith.constant 1024 : index
    %47 = vector.load %arg2[%c0_24, %c1024] : memref<384x1536xbf16, #tpu.memory_space<vmem>>, vector<384x512xbf16>
    %cst_25 = arith.constant dense<0.000000e+00> : vector<16x512xf32>
    %48 = tpu.matmul %1, %47, %cst_25 {dimension_numbers = #tpu.dot_dimension_numbers<[1], [0], [0], [1], [0, 0, 1, 1], [], []>} : vector<16x384xbf16>, vector<384x512xbf16>, vector<16x512xf32> -> vector<16x512xf32>
    %c0_26 = arith.constant 0 : index
    %c1024_27 = arith.constant 1024 : index
    %49 = vector.load %arg3[%c0_26, %c1024_27] : memref<1x1536xf32, #tpu.memory_space<vmem>>, vector<1x512xf32>
    %50 = vector.broadcast %49 : vector<1x512xf32> to vector<16x512xf32>
    %51 = arith.addf %48, %50 : vector<16x512xf32>
    %cst_28 = arith.constant 4.471500e-02 : f32
    %52 = vector.broadcast %cst_28 : f32 to vector<16x512xf32>
    %53 = arith.mulf %52, %51 : vector<16x512xf32>
    %54 = arith.mulf %53, %51 : vector<16x512xf32>
    %55 = arith.mulf %54, %51 : vector<16x512xf32>
    %56 = arith.addf %51, %55 : vector<16x512xf32>
    %cst_29 = arith.constant 0.797884583 : f32
    %57 = vector.broadcast %cst_29 : f32 to vector<16x512xf32>
    %58 = arith.mulf %57, %56 : vector<16x512xf32>
    %59 = math.tanh %58 : vector<16x512xf32>
    %cst_30 = arith.constant 1.000000e+00 : f32
    %60 = vector.broadcast %cst_30 : f32 to vector<16x512xf32>
    %61 = arith.addf %60, %59 : vector<16x512xf32>
    %cst_31 = arith.constant 5.000000e-01 : f32
    %62 = vector.broadcast %cst_31 : f32 to vector<16x512xf32>
    %63 = arith.mulf %62, %61 : vector<16x512xf32>
    %64 = arith.mulf %51, %63 : vector<16x512xf32>
    %65 = arith.truncf %64 : vector<16x512xf32> to vector<16x512xbf16>
    %c1024_32 = arith.constant 1024 : index
    %c0_33 = arith.constant 0 : index
    %66 = vector.load %arg4[%c1024_32, %c0_33] : memref<1536x384xbf16, #tpu.memory_space<vmem>>, vector<512x384xbf16>
    %cst_34 = arith.constant dense<0.000000e+00> : vector<16x384xf32>
    %67 = tpu.matmul %65, %66, %cst_34 {dimension_numbers = #tpu.dot_dimension_numbers<[1], [0], [0], [1], [0, 0, 1, 1], [], []>} : vector<16x512xbf16>, vector<512x384xbf16>, vector<16x384xf32> -> vector<16x384xf32>
    %68 = arith.addf %46, %67 : vector<16x384xf32>
    %c0_35 = arith.constant 0 : index
    %c0_36 = arith.constant 0 : index
    %69 = vector.load %arg5[%c0_35, %c0_36] : memref<1x384xf32, #tpu.memory_space<vmem>>, vector<1x384xf32>
    %70 = vector.broadcast %69 : vector<1x384xf32> to vector<16x384xf32>
    %71 = arith.addf %68, %70 : vector<16x384xf32>
    %72 = arith.addf %71, %0 : vector<16x384xf32>
    %cst_37 = arith.constant dense<0.000000e+00> : vector<16xf32>
    %73 = vector.multi_reduction <add>, %72, %cst_37 [1] : vector<16x384xf32> to vector<16xf32>
    %74 = vector.shape_cast %73 : vector<16xf32> to vector<16x1xf32>
    %cst_38 = arith.constant 3.840000e+02 : f32
    %75 = vector.broadcast %cst_38 : f32 to vector<16x1xf32>
    %76 = arith.divf %74, %75 : vector<16x1xf32>
    %77 = vector.broadcast %76 : vector<16x1xf32> to vector<16x384xf32>
    %78 = arith.subf %72, %77 : vector<16x384xf32>
    %79 = arith.mulf %78, %78 : vector<16x384xf32>
    %cst_39 = arith.constant dense<0.000000e+00> : vector<16xf32>
    %80 = vector.multi_reduction <add>, %79, %cst_39 [1] : vector<16x384xf32> to vector<16xf32>
    %81 = vector.shape_cast %80 : vector<16xf32> to vector<16x1xf32>
    %cst_40 = arith.constant 0.0026109661 : f32
    %82 = vector.broadcast %cst_40 : f32 to vector<16x1xf32>
    %83 = arith.mulf %81, %82 : vector<16x1xf32>
    %cst_41 = arith.constant 9.99999993E-9 : f32
    %84 = vector.broadcast %cst_41 : f32 to vector<16x1xf32>
    %85 = arith.addf %83, %84 : vector<16x1xf32>
    %86 = math.rsqrt %85 : vector<16x1xf32>
    %c0_42 = arith.constant 0 : index
    %87 = memref.load %arg6[%c0_42] : memref<1xf32, #tpu.memory_space<smem>>
    %c0_43 = arith.constant 0 : index
    %88 = memref.load %arg7[%c0_43] : memref<1xf32, #tpu.memory_space<smem>>
    %89 = vector.broadcast %86 : vector<16x1xf32> to vector<16x384xf32>
    %90 = arith.mulf %78, %89 : vector<16x384xf32>
    %91 = vector.broadcast %87 : f32 to vector<16x384xf32>
    %92 = arith.mulf %91, %90 : vector<16x384xf32>
    %93 = vector.broadcast %88 : f32 to vector<16x384xf32>
    %94 = arith.addf %92, %93 : vector<16x384xf32>
    %c0_44 = arith.constant 0 : index
    %c0_45 = arith.constant 0 : index
    %95 = vector.load %arg8[%c0_44, %c0_45] : memref<16x384xf32, #tpu.memory_space<vmem>>, vector<16x384xf32>
    tpu.vector_store %arg8[%c0_44, %c0_45], %94 {strides = array<i32>} : memref<16x384xf32, #tpu.memory_space<vmem>>, vector<16x384xf32>,
    return
  }
  func.func @transform_0(%arg0: i32) -> (i32, i32) {
    %c0_i32 = arith.constant 0 : i32
    %c0_i32_0 = arith.constant 0 : i32
    return %arg0, %c0_i32 : i32, i32
  }
  func.func @transform_1(%arg0: i32) -> (i32, i32) {
    %c0_i32 = arith.constant 0 : i32
    %c0_i32_0 = arith.constant 0 : i32
    %c0_i32_1 = arith.constant 0 : i32
    return %c0_i32, %c0_i32_0 : i32, i32
  }
  func.func @transform_2(%arg0: i32) -> (i32, i32) {
    %c0_i32 = arith.constant 0 : i32
    %c0_i32_0 = arith.constant 0 : i32
    %c0_i32_1 = arith.constant 0 : i32
    return %c0_i32, %c0_i32_0 : i32, i32
  }
  func.func @transform_3(%arg0: i32) -> (i32, i32) {
    %c0_i32 = arith.constant 0 : i32
    %c0_i32_0 = arith.constant 0 : i32
    %c0_i32_1 = arith.constant 0 : i32
    return %c0_i32, %c0_i32_0 : i32, i32
  }
  func.func @transform_4(%arg0: i32) -> (i32, i32) {
    %c0_i32 = arith.constant 0 : i32
    %c0_i32_0 = arith.constant 0 : i32
    %c0_i32_1 = arith.constant 0 : i32
    return %c0_i32, %c0_i32_0 : i32, i32
  }
  func.func @transform_5(%arg0: i32) -> i32 {
    %c0_i32 = arith.constant 0 : i32
    %c0_i32_0 = arith.constant 0 : i32
    return %c0_i32 : i32
  }
  func.func @transform_6(%arg0: i32) -> i32 {
    %c0_i32 = arith.constant 0 : i32
    %c0_i32_0 = arith.constant 0 : i32
    return %c0_i32 : i32
  }
  func.func @transform_7(%arg0: i32) -> (i32, i32) {
    %c0_i32 = arith.constant 0 : i32
    %c0_i32_0 = arith.constant 0 : i32
    return %arg0, %c0_i32 : i32, i32
  }
}

</mosaic_0001>

<llo_original>
// kernel: tpu_custom_call.1
$region0: #{tpu_custom_call.1}
  #allocation0 [shape = 'u32[]', space=smem, size = 0x4, offset = 0x4, fixed_abs, tag = 'smem constant byte address 0x4 - core index']
  #allocation1 [shape = 'u32[144,128]{1,0:T(1,128)}', space=vmem, size = 0x12000, scoped, tag = 'internal scratch']
  #allocation2 [shape = 'f32[1]{0:T(128)S(6)}', space=smem, size = 0x200, scoped, tag = 'scoped memory for tpu_custom_call.1']
  #allocation3 [shape = 'f32[1]{0:T(128)S(6)}', space=smem, size = 0x200, scoped, tag = 'scoped memory for tpu_custom_call.1']
  %s0 = inlined_call_operand.hbm [shape: f32[16,384], index: 0, kind: input, shape index: {}]
  %s1 = inlined_call_operand.hbm [shape: bf16[384,1536], index: 1, kind: input, shape index: {}]
  %s2 = inlined_call_operand.hbm [shape: f32[1,1536], index: 2, kind: input, shape index: {}]
  %s3 = inlined_call_operand.hbm [shape: bf16[1536,384], index: 3, kind: input, shape index: {}]
  %s4 = inlined_call_operand.hbm [shape: f32[1,384], index: 4, kind: input, shape index: {}]
  %s5 = inlined_call_operand.<no memory space> [shape: f32[1], index: 5, kind: input, shape index: {}]
  %s6 = inlined_call_operand.<no memory space> [shape: f32[1], index: 6, kind: input, shape index: {}]
  %s7 = inlined_call_operand.hbm [shape: f32[16,384], index: 7, kind: output, shape index: {}]
  %s8 = sld [smem:[#allocation0]]
  $region58: #{tpu_custom_call.1} parent=0
    _
  %s10 = ssub.s32 1, %s8
  %s11 = scalar_select 0, %s10, %s8
  %12 = sst [smem:[#allocation2]] %s5
  %13 = sst [smem:[#allocation3]] %s6
  $region1: #{tpu_custom_call.1} parent=0
    #allocation4 [shape = 'u8[24576]{0}', space=vmem, size = 0x6000, scoped, tag = 'input window, operand 0, single buffered']
    #allocation5 [shape = 's32[1]{0}', space=sflag, size = 0x4, scoped, tag = 'scoped memory for tpu_custom_call.1']
    #allocation6 [shape = 's32[1]{0}', space=sflag, size = 0x4, scoped, tag = 'scoped memory for tpu_custom_call.1']
    #allocation7 [shape = 'u8[1179648]{0}', space=vmem, size = 0x120000, scoped, tag = 'input window, operand 1, single buffered']
    #allocation8 [shape = 's32[1]{0}', space=sflag, size = 0x4, scoped, tag = 'scoped memory for tpu_custom_call.1']
    #allocation9 [shape = 'u8[6144]{0}', space=vmem, size = 0x1800, scoped, tag = 'input window, operand 2, single buffered']
    #allocation10 [shape = 'u8[1179648]{0}', space=vmem, size = 0x120000, scoped, tag = 'input window, operand 3, single buffered']
    #allocation11 [shape = 's32[1]{0}', space=sflag, size = 0x4, scoped, tag = 'scoped memory for tpu_custom_call.1']
    #allocation12 [shape = 'u8[1536]{0}', space=vmem, size = 0x800, scoped, tag = 'input window, operand 4, single buffered']
    #allocation13 [shape = 'u8[24576]{0}', space=vmem, size = 0x6000, scoped, tag = 'output window, operand 0, single buffered']
    %14 = vsyncpa [#allocation5], 0
    %15 = vsyncpa [#allocation8], 0
    %16 = vsyncpa [#allocation11], 0
    %17 = vsyncpa [#allocation6], 0
    // Predicated region
    $region2: #{tpu_custom_call.1} parent=1 // pred_check
      _
    $region3: #{tpu_custom_call.1} parent=1 // pred_check_branch
      %19 = sbr.rel (0) target = $region5
    $region4: #{tpu_custom_call.1} parent=1 // pred_region
      %s21 = ssub.s32 768, 768
      %22 = vsyncadd [#allocation5], %s21
      %s23 = sshll.u32 [#allocation4], 4
      %s24 = int_to_ptr.vmem [resolvable:$true] %s23
      %29 = dma.hbm_to_vmem [thread:$0]  %s0, 768, %s24, [#allocation5], 384, 384, 24
    $region5: #{tpu_custom_call.1} parent=1 // pred_fallthru
      _
    // Predicated region
    $region6: #{tpu_custom_call.1} parent=1 // pred_check
      _
    $region7: #{tpu_custom_call.1} parent=1 // pred_check_branch
      %31 = sbr.rel (0) target = $region9
    $region8: #{tpu_custom_call.1} parent=1 // pred_region
      %s33 = ssub.s32 36864, 36864
      %34 = vsyncadd [#allocation8], %s33
      %s35 = sshll.u32 [#allocation7], 4
      %s36 = int_to_ptr.vmem [resolvable:$true] %s35
      %41 = dma.hbm_to_vmem [thread:$0]  %s1, 36864, %s36, [#allocation8], 768, 768, 48
    $region9: #{tpu_custom_call.1} parent=1 // pred_fallthru
      _
    // Predicated region
    $region10: #{tpu_custom_call.1} parent=1 // pred_check
      _
    $region11: #{tpu_custom_call.1} parent=1 // pred_check_branch
      %43 = sbr.rel (0) target = $region13
    $region12: #{tpu_custom_call.1} parent=1 // pred_region
      %s45 = ssub.s32 192, 192
      %46 = vsyncadd [#allocation8], %s45
      %s48 = sshll.u32 [#allocation9], 4
      %s49 = int_to_ptr.vmem [resolvable:$true] %s48
      %51 = dma.hbm_to_vmem [thread:$0]  %s2, 192, %s49, [#allocation8]
    $region13: #{tpu_custom_call.1} parent=1 // pred_fallthru
      _
    // Predicated region
    $region14: #{tpu_custom_call.1} parent=1 // pred_check
      _
    $region15: #{tpu_custom_call.1} parent=1 // pred_check_branch
      %53 = sbr.rel (0) target = $region17
    $region16: #{tpu_custom_call.1} parent=1 // pred_region
      %s55 = ssub.s32 36864, 36864
      %56 = vsyncadd [#allocation11], %s55
      %s57 = sshll.u32 [#allocation10], 4
      %s58 = int_to_ptr.vmem [resolvable:$true] %s57
      %63 = dma.hbm_to_vmem [thread:$0]  %s3, 36864, %s58, [#allocation11], 192, 192, 12
    $region17: #{tpu_custom_call.1} parent=1 // pred_fallthru
      _
    // Predicated region
    $region18: #{tpu_custom_call.1} parent=1 // pred_check
      _
    $region19: #{tpu_custom_call.1} parent=1 // pred_check_branch
      %65 = sbr.rel (0) target = $region21
    $region20: #{tpu_custom_call.1} parent=1 // pred_region
      %s67 = ssub.s32 48, 48
      %68 = vsyncadd [#allocation11], %s67
      %s70 = sshll.u32 [#allocation12], 4
      %s71 = int_to_ptr.vmem [resolvable:$true] %s70
      %73 = dma.hbm_to_vmem [thread:$0]  %s4, 48, %s71, [#allocation11]
    $region21: #{tpu_custom_call.1} parent=1 // pred_fallthru
      _
    // Predicated region
    $region22: #{tpu_custom_call.1} parent=1 // pred_check
      _
    $region23: #{tpu_custom_call.1} parent=1 // pred_check_branch
      %75 = sbr.rel (0) target = $region25
    $region24: #{tpu_custom_call.1} parent=1 // pred_region
      _
    $region25: #{tpu_custom_call.1} parent=1 // pred_fallthru
      _
    // Predicated region
    $region26: #{tpu_custom_call.1} parent=1 // pred_check
      _
    $region27: #{tpu_custom_call.1} parent=1 // pred_check_branch
      %77 = sbr.rel (0) target = $region29
    $region28: #{tpu_custom_call.1} parent=1 // pred_region
      _
    $region29: #{tpu_custom_call.1} parent=1 // pred_fallthru
      _
    // Predicated region
    $region30: #{tpu_custom_call.1} parent=1 // pred_check
      _
    $region31: #{tpu_custom_call.1} parent=1 // pred_check_branch
      %79 = sbr.rel (0) target = $region33
    $region32: #{tpu_custom_call.1} parent=1 // pred_region
      %80 = dma.done [#allocation5], 768
    $region33: #{tpu_custom_call.1} parent=1 // pred_fallthru
      _
    // Predicated region
    $region34: #{tpu_custom_call.1} parent=1 // pred_check
      _
    $region35: #{tpu_custom_call.1} parent=1 // pred_check_branch
      %82 = sbr.rel (0) target = $region37
    $region36: #{tpu_custom_call.1} parent=1 // pred_region
      %83 = dma.done [#allocation8], 36864
    $region37: #{tpu_custom_call.1} parent=1 // pred_fallthru
      _
    // Predicated region
    $region38: #{tpu_custom_call.1} parent=1 // pred_check
      _
    $region39: #{tpu_custom_call.1} parent=1 // pred_check_branch
      %85 = sbr.rel (0) target = $region41
    $region40: #{tpu_custom_call.1} parent=1 // pred_region
      %86 = dma.done [#allocation8], 192
    $region41: #{tpu_custom_call.1} parent=1 // pred_fallthru
      _
    // Predicated region
    $region42: #{tpu_custom_call.1} parent=1 // pred_check
      _
    $region43: #{tpu_custom_call.1} parent=1 // pred_check_branch
      %88 = sbr.rel (0) target = $region45
    $region44: #{tpu_custom_call.1} parent=1 // pred_region
      %89 = dma.done [#allocation11], 36864
    $region45: #{tpu_custom_call.1} parent=1 // pred_fallthru
      _
    // Predicated region
    $region46: #{tpu_custom_call.1} parent=1 // pred_check
      _
    $region47: #{tpu_custom_call.1} parent=1 // pred_check_branch
      %91 = sbr.rel (0) target = $region49
    $region48: #{tpu_custom_call.1} parent=1 // pred_region
      %92 = dma.done [#allocation11], 48
    $region49: #{tpu_custom_call.1} parent=1 // pred_fallthru
      _
    %v94 = vld [vmem:[#allocation4] sm:$0xff]
    %v95 = vld [vmem:[#allocation4 + $0x8] sm:$0xff]
    %v96 = vld [vmem:[#allocation4 + $0x10] sm:$0xff]
    %v97 = vld [vmem:[#allocation4 + $0x18] sm:$0xff]
    %v98 = vld [vmem:[#allocation4 + $0x20] sm:$0xff]
    %v99 = vld [vmem:[#allocation4 + $0x28] sm:$0xff]
    %v100 = vpack.c.bf16 %v97, %v94
    %v101 = vpack.c.bf16 %v98, %v95
    %v102 = vpack.c.bf16 %v99, %v96
    %v103 = vld [vmem:[#allocation7] sm:$0xff]
    %v104 = vld [vmem:[#allocation7 + $0x8] sm:$0xff]
    %v105 = vld [vmem:[#allocation7 + $0x30] sm:$0xff]
    %v106 = vld [vmem:[#allocation7 + $0x38] sm:$0xff]
    %v107 = vld [vmem:[#allocation7 + $0x60] sm:$0xff]
    %v108 = vld [vmem:[#allocation7 + $0x68] sm:$0xff]
    %v109 = vld [vmem:[#allocation7 + $0x90] sm:$0xff]
    %v110 = vld [vmem:[#allocation7 + $0x98] sm:$0xff]
    %v111 = vld [vmem:[#allocation7 + $0xc0] sm:$0xff]
    %v112 = vld [vmem:[#allocation7 + $0xc8] sm:$0xff]
    %v113 = vld [vmem:[#allocation7 + $0xf0] sm:$0xff]
    %v114 = vld [vmem:[#allocation7 + $0xf8] sm:$0xff]
    %v115 = vld [vmem:[#allocation7 + $0x120] sm:$0xff]
    %v116 = vld [vmem:[#allocation7 + $0x128] sm:$0xff]
    %v117 = vld [vmem:[#allocation7 + $0x150] sm:$0xff]
    %v118 = vld [vmem:[#allocation7 + $0x158] sm:$0xff]
    %v119 = vld [vmem:[#allocation7 + $0x180] sm:$0xff]
    %v120 = vld [vmem:[#allocation7 + $0x188] sm:$0xff]
    %v121 = vld [vmem:[#allocation7 + $0x1b0] sm:$0xff]
    %v122 = vld [vmem:[#allocation7 + $0x1b8] sm:$0xff]
    %v123 = vld [vmem:[#allocation7 + $0x1e0] sm:$0xff]
    %v124 = vld [vmem:[#allocation7 + $0x1e8] sm:$0xff]
    %v125 = vld [vmem:[#allocation7 + $0x210] sm:$0xff]
    %v126 = vld [vmem:[#allocation7 + $0x218] sm:$0xff]
    %v127 = vld [vmem:[#allocation7 + $0x240] sm:$0xff]
    %v128 = vld [vmem:[#allocation7 + $0x248] sm:$0xff]
    %v129 = vld [vmem:[#allocation7 + $0x270] sm:$0xff]
    %v130 = vld [vmem:[#allocation7 + $0x278] sm:$0xff]
    %v131 = vld [vmem:[#allocation7 + $0x2a0] sm:$0xff]
    %v132 = vld [vmem:[#allocation7 + $0x2a8] sm:$0xff]
    %v133 = vld [vmem:[#allocation7 + $0x2d0] sm:$0xff]
    %v134 = vld [vmem:[#allocation7 + $0x2d8] sm:$0xff]
    %v135 = vld [vmem:[#allocation7 + $0x300] sm:$0xff]
    %v136 = vld [vmem:[#allocation7 + $0x308] sm:$0xff]
    %v137 = vld [vmem:[#allocation7 + $0x330] sm:$0xff]
    %v138 = vld [vmem:[#allocation7 + $0x338] sm:$0xff]
    %v139 = vld [vmem:[#allocation7 + $0x360] sm:$0xff]
    %v140 = vld [vmem:[#allocation7 + $0x368] sm:$0xff]
    %v141 = vld [vmem:[#allocation7 + $0x390] sm:$0xff]
    %v142 = vld [vmem:[#allocation7 + $0x398] sm:$0xff]
    %v143 = vld [vmem:[#allocation7 + $0x3c0] sm:$0xff]
    %v144 = vld [vmem:[#allocation7 + $0x3c8] sm:$0xff]
    %v145 = vld [vmem:[#allocation7 + $0x3f0] sm:$0xff]
    %v146 = vld [vmem:[#allocation7 + $0x3f8] sm:$0xff]
    %v147 = vld [vmem:[#allocation7 + $0x420] sm:$0xff]
    %v148 = vld [vmem:[#allocation7 + $0x428] sm:$0xff]
    %v149 = vld [vmem:[#allocation7 + $0x450] sm:$0xff]
    %v150 = vld [vmem:[#allocation7 + $0x458] sm:$0xff]
    %v151 = vld [vmem:[#allocation7 + $0x480] sm:$0xff]
    %v152 = vld [vmem:[#allocation7 + $0x488] sm:$0xff]
    %v153 = vld [vmem:[#allocation7 + $0x4b0] sm:$0xff]
    %v154 = vld [vmem:[#allocation7 + $0x4b8] sm:$0xff]
    %v155 = vld [vmem:[#allocation7 + $0x4e0] sm:$0xff]
    %v156 = vld [vmem:[#allocation7 + $0x4e8] sm:$0xff]
    %v157 = vld [vmem:[#allocation7 + $0x510] sm:$0xff]
    %v158 = vld [vmem:[#allocation7 + $0x518] sm:$0xff]
    %v159 = vld [vmem:[#allocation7 + $0x540] sm:$0xff]
    %v160 = vld [vmem:[#allocation7 + $0x548] sm:$0xff]
    %v161 = vld [vmem:[#allocation7 + $0x570] sm:$0xff]
    %v162 = vld [vmem:[#allocation7 + $0x578] sm:$0xff]
    %v163 = vld [vmem:[#allocation7 + $0x5a0] sm:$0xff]
    %v164 = vld [vmem:[#allocation7 + $0x5a8] sm:$0xff]
    %v165 = vld [vmem:[#allocation7 + $0x5d0] sm:$0xff]
    %v166 = vld [vmem:[#allocation7 + $0x5d8] sm:$0xff]
    %v167 = vld [vmem:[#allocation7 + $0x600] sm:$0xff]
    %v168 = vld [vmem:[#allocation7 + $0x608] sm:$0xff]
    %v169 = vld [vmem:[#allocation7 + $0x630] sm:$0xff]
    %v170 = vld [vmem:[#allocation7 + $0x638] sm:$0xff]
    %v171 = vld [vmem:[#allocation7 + $0x660] sm:$0xff]
    %v172 = vld [vmem:[#allocation7 + $0x668] sm:$0xff]
    %v173 = vld [vmem:[#allocation7 + $0x690] sm:$0xff]
    %v174 = vld [vmem:[#allocation7 + $0x698] sm:$0xff]
    %v175 = vld [vmem:[#allocation7 + $0x6c0] sm:$0xff]
    %v176 = vld [vmem:[#allocation7 + $0x6c8] sm:$0xff]
    %v177 = vld [vmem:[#allocation7 + $0x6f0] sm:$0xff]
    %v178 = vld [vmem:[#allocation7 + $0x6f8] sm:$0xff]
    %v179 = vld [vmem:[#allocation7 + $0x720] sm:$0xff]
    %v180 = vld [vmem:[#allocation7 + $0x728] sm:$0xff]
    %v181 = vld [vmem:[#allocation7 + $0x750] sm:$0xff]
    %v182 = vld [vmem:[#allocation7 + $0x758] sm:$0xff]
    %v183 = vld [vmem:[#allocation7 + $0x780] sm:$0xff]
    %v184 = vld [vmem:[#allocation7 + $0x788] sm:$0xff]
    %v185 = vld [vmem:[#allocation7 + $0x7b0] sm:$0xff]
    %v186 = vld [vmem:[#allocation7 + $0x7b8] sm:$0xff]
    %v187 = vld [vmem:[#allocation7 + $0x7e0] sm:$0xff]
    %v188 = vld [vmem:[#allocation7 + $0x7e8] sm:$0xff]
    %v189 = vld [vmem:[#allocation7 + $0x810] sm:$0xff]
    %v190 = vld [vmem:[#allocation7 + $0x818] sm:$0xff]
    %v191 = vld [vmem:[#allocation7 + $0x840] sm:$0xff]
    %v192 = vld [vmem:[#allocation7 + $0x848] sm:$0xff]
    %v193 = vld [vmem:[#allocation7 + $0x870] sm:$0xff]
    %v194 = vld [vmem:[#allocation7 + $0x878] sm:$0xff]
    %v195 = vld [vmem:[#allocation7 + $0x8a0] sm:$0xff]
    %v196 = vld [vmem:[#allocation7 + $0x8a8] sm:$0xff]
    %v197 = vld [vmem:[#allocation7 + $0x8d0] sm:$0xff]
    %v198 = vld [vmem:[#allocation7 + $0x8d8] sm:$0xff]
    %v199 = vld [vmem:[#allocation9] sm:$0xf]
    %v201 = vlaneseq
    %v202 = vshrl.u32 %v201, 7
    %v203 = vsub.s32 0, %v202
    %v204 = vrot.slane %v199, %v203
    %v205 = vlaneseq
    %v206 = vshrl.u32 %v205, 7
    %v207 = vsub.s32 1, %v206
    %v208 = vrot.slane %v199, %v207
    %v209 = vlaneseq
    %v210 = vshrl.u32 %v209, 7
    %v211 = vsub.s32 2, %v210
    %v212 = vrot.slane %v199, %v211
    %v213 = vlaneseq
    %v214 = vshrl.u32 %v213, 7
    %v215 = vsub.s32 3, %v214
    %v216 = vrot.slane %v199, %v215
    %v317 = vunpack.c.l.b16 %v103
    %v318 = vunpack.c.h.b16 %v103
    %v319 = vunpack.c.l.b16 %v104
    %v320 = vunpack.c.h.b16 %v104
    %v321 = vunpack.c.l.b16 %v105
    %v322 = vunpack.c.h.b16 %v105
    %v323 = vunpack.c.l.b16 %v106
    %v324 = vunpack.c.h.b16 %v106
    %v325 = vunpack.c.l.b16 %v107
    %v326 = vunpack.c.h.b16 %v107
    %v327 = vunpack.c.l.b16 %v108
    %v328 = vunpack.c.h.b16 %v108
    %v329 = vunpack.c.l.b16 %v109
    %v330 = vunpack.c.h.b16 %v109
    %v331 = vunpack.c.l.b16 %v110
    %v332 = vunpack.c.h.b16 %v110
    %v333 = vunpack.c.l.b16 %v111
    %v334 = vunpack.c.h.b16 %v111
    %v335 = vunpack.c.l.b16 %v112
    %v336 = vunpack.c.h.b16 %v112
    %v337 = vunpack.c.l.b16 %v113
    %v338 = vunpack.c.h.b16 %v113
    %v339 = vunpack.c.l.b16 %v114
    %v340 = vunpack.c.h.b16 %v114
    %v341 = vunpack.c.l.b16 %v115
    %v342 = vunpack.c.h.b16 %v115
    %v343 = vunpack.c.l.b16 %v116
    %v344 = vunpack.c.h.b16 %v116
    %v345 = vunpack.c.l.b16 %v117
    %v346 = vunpack.c.h.b16 %v117
    %v347 = vunpack.c.l.b16 %v118
    %v348 = vunpack.c.h.b16 %v118
    %v349 = vunpack.c.l.b16 %v119
    %v350 = vunpack.c.h.b16 %v119
    %v351 = vunpack.c.l.b16 %v120
    %v352 = vunpack.c.h.b16 %v120
    %v353 = vunpack.c.l.b16 %v121
    %v354 = vunpack.c.h.b16 %v121
    %v355 = vunpack.c.l.b16 %v122
    %v356 = vunpack.c.h.b16 %v122
    %v357 = vunpack.c.l.b16 %v123
    %v358 = vunpack.c.h.b16 %v123
    %v359 = vunpack.c.l.b16 %v124
    %v360 = vunpack.c.h.b16 %v124
    %v361 = vunpack.c.l.b16 %v125
    %v362 = vunpack.c.h.b16 %v125
    %v363 = vunpack.c.l.b16 %v126
    %v364 = vunpack.c.h.b16 %v126
    %v365 = vunpack.c.l.b16 %v127
    %v366 = vunpack.c.h.b16 %v127
    %v367 = vunpack.c.l.b16 %v128
    %v368 = vunpack.c.h.b16 %v128
    %v369 = vunpack.c.l.b16 %v129
    %v370 = vunpack.c.h.b16 %v129
    %v371 = vunpack.c.l.b16 %v130
    %v372 = vunpack.c.h.b16 %v130
    %v373 = vunpack.c.l.b16 %v131
    %v374 = vunpack.c.h.b16 %v131
    %v375 = vunpack.c.l.b16 %v132
    %v376 = vunpack.c.h.b16 %v132
    %v377 = vunpack.c.l.b16 %v133
    %v378 = vunpack.c.h.b16 %v133
    %v379 = vunpack.c.l.b16 %v134
    %v380 = vunpack.c.h.b16 %v134
    %v381 = vunpack.c.l.b16 %v135
    %v382 = vunpack.c.h.b16 %v135
    %v383 = vunpack.c.l.b16 %v136
    %v384 = vunpack.c.h.b16 %v136
    %v385 = vunpack.c.l.b16 %v137
    %v386 = vunpack.c.h.b16 %v137
    %v387 = vunpack.c.l.b16 %v138
    %v388 = vunpack.c.h.b16 %v138
    %v389 = vunpack.c.l.b16 %v139
    %v390 = vunpack.c.h.b16 %v139
    %v391 = vunpack.c.l.b16 %v140
    %v392 = vunpack.c.h.b16 %v140
    %v393 = vunpack.c.l.b16 %v141
    %v394 = vunpack.c.h.b16 %v141
    %v395 = vunpack.c.l.b16 %v142
    %v396 = vunpack.c.h.b16 %v142
    %v397 = vunpack.c.l.b16 %v143
    %v398 = vunpack.c.h.b16 %v143
    %v399 = vunpack.c.l.b16 %v144
    %v400 = vunpack.c.h.b16 %v144
    %v401 = vunpack.c.l.b16 %v145
    %v402 = vunpack.c.h.b16 %v145
    %v403 = vunpack.c.l.b16 %v146
    %v404 = vunpack.c.h.b16 %v146
    %v405 = vunpack.c.l.b16 %v147
    %v406 = vunpack.c.h.b16 %v147
    %v407 = vunpack.c.l.b16 %v148
    %v408 = vunpack.c.h.b16 %v148
    %v409 = vunpack.c.l.b16 %v149
    %v410 = vunpack.c.h.b16 %v149
    %v411 = vunpack.c.l.b16 %v150
    %v412 = vunpack.c.h.b16 %v150
    %v413 = vunpack.c.l.b16 %v151
    %v414 = vunpack.c.h.b16 %v151
    %v415 = vunpack.c.l.b16 %v152
    %v416 = vunpack.c.h.b16 %v152
    %v417 = vunpack.c.l.b16 %v153
    %v418 = vunpack.c.h.b16 %v153
    %v419 = vunpack.c.l.b16 %v154
    %v420 = vunpack.c.h.b16 %v154
    %v421 = vunpack.c.l.b16 %v155
    %v422 = vunpack.c.h.b16 %v155
    %v423 = vunpack.c.l.b16 %v156
    %v424 = vunpack.c.h.b16 %v156
    %v425 = vunpack.c.l.b16 %v157
    %v426 = vunpack.c.h.b16 %v157
    %v427 = vunpack.c.l.b16 %v158
    %v428 = vunpack.c.h.b16 %v158
    %v429 = vunpack.c.l.b16 %v159
    %v430 = vunpack.c.h.b16 %v159
    %v431 = vunpack.c.l.b16 %v160
    %v432 = vunpack.c.h.b16 %v160
    %v433 = vunpack.c.l.b16 %v161
    %v434 = vunpack.c.h.b16 %v161
    %v435 = vunpack.c.l.b16 %v162
    %v436 = vunpack.c.h.b16 %v162
    %v437 = vunpack.c.l.b16 %v163
    %v438 = vunpack.c.h.b16 %v163
    %v439 = vunpack.c.l.b16 %v164
    %v440 = vunpack.c.h.b16 %v164
    %v441 = vunpack.c.l.b16 %v165
    %v442 = vunpack.c.h.b16 %v165
    %v443 = vunpack.c.l.b16 %v166
    %v444 = vunpack.c.h.b16 %v166
    %v445 = vunpack.c.l.b16 %v167
    %v446 = vunpack.c.h.b16 %v167
    %v447 = vunpack.c.l.b16 %v168
    %v448 = vunpack.c.h.b16 %v168
    %v449 = vunpack.c.l.b16 %v169
    %v450 = vunpack.c.h.b16 %v169
    %v451 = vunpack.c.l.b16 %v170
    %v452 = vunpack.c.h.b16 %v170
    %v453 = vunpack.c.l.b16 %v171
    %v454 = vunpack.c.h.b16 %v171
    %v455 = vunpack.c.l.b16 %v172
    %v456 = vunpack.c.h.b16 %v172
    %v457 = vunpack.c.l.b16 %v173
    %v458 = vunpack.c.h.b16 %v173
    %v459 = vunpack.c.l.b16 %v174
    %v460 = vunpack.c.h.b16 %v174
    %v461 = vunpack.c.l.b16 %v175
    %v462 = vunpack.c.h.b16 %v175
    %v463 = vunpack.c.l.b16 %v176
    %v464 = vunpack.c.h.b16 %v176
    %v465 = vunpack.c.l.b16 %v177
    %v466 = vunpack.c.h.b16 %v177
    %v467 = vunpack.c.l.b16 %v178
    %v468 = vunpack.c.h.b16 %v178
    %v469 = vunpack.c.l.b16 %v179
    %v470 = vunpack.c.h.b16 %v179
    %v471 = vunpack.c.l.b16 %v180
    %v472 = vunpack.c.h.b16 %v180
    %v473 = vunpack.c.l.b16 %v181
    %v474 = vunpack.c.h.b16 %v181
    %v475 = vunpack.c.l.b16 %v182
    %v476 = vunpack.c.h.b16 %v182
    %v477 = vunpack.c.l.b16 %v183
    %v478 = vunpack.c.h.b16 %v183
    %v479 = vunpack.c.l.b16 %v184
    %v480 = vunpack.c.h.b16 %v184
    %v481 = vunpack.c.l.b16 %v185
    %v482 = vunpack.c.h.b16 %v185
    %v483 = vunpack.c.l.b16 %v186
    %v484 = vunpack.c.h.b16 %v186
    %v485 = vunpack.c.l.b16 %v187
    %v486 = vunpack.c.h.b16 %v187
    %v487 = vunpack.c.l.b16 %v188
    %v488 = vunpack.c.h.b16 %v188
    %v489 = vunpack.c.l.b16 %v189
    %v490 = vunpack.c.h.b16 %v189
    %v491 = vunpack.c.l.b16 %v190
    %v492 = vunpack.c.h.b16 %v190
    %v493 = vunpack.c.l.b16 %v191
    %v494 = vunpack.c.h.b16 %v191
    %v495 = vunpack.c.l.b16 %v192
    %v496 = vunpack.c.h.b16 %v192
    %v497 = vunpack.c.l.b16 %v193
    %v498 = vunpack.c.h.b16 %v193
    %v499 = vunpack.c.l.b16 %v194
    %v500 = vunpack.c.h.b16 %v194
    %v501 = vunpack.c.l.b16 %v195
    %v502 = vunpack.c.h.b16 %v195
    %v503 = vunpack.c.l.b16 %v196
    %v504 = vunpack.c.h.b16 %v196
    %v505 = vunpack.c.l.b16 %v197
    %v506 = vunpack.c.h.b16 %v197
    %v507 = vunpack.c.l.b16 %v198
    %v508 = vunpack.c.h.b16 %v198
    %v509 = vpack.c.b16 %v321, %v317
    %v510 = vpack.c.b16 %v322, %v318
    %v511 = vpack.c.b16 %v323, %v319
    %v512 = vpack.c.b16 %v324, %v320
    %v513 = vpack.c.b16 %v329, %v325
    %v514 = vpack.c.b16 %v330, %v326
    %v515 = vpack.c.b16 %v331, %v327
    %v516 = vpack.c.b16 %v332, %v328
    %v517 = vpack.c.b16 %v337, %v333
    %v518 = vpack.c.b16 %v338, %v334
    %v519 = vpack.c.b16 %v339, %v335
    %v520 = vpack.c.b16 %v340, %v336
    %v521 = vpack.c.b16 %v345, %v341
    %v522 = vpack.c.b16 %v346, %v342
    %v523 = vpack.c.b16 %v347, %v343
    %v524 = vpack.c.b16 %v348, %v344
    %v525 = vpack.c.b16 %v353, %v349
    %v526 = vpack.c.b16 %v354, %v350
    %v527 = vpack.c.b16 %v355, %v351
    %v528 = vpack.c.b16 %v356, %v352
    %v529 = vpack.c.b16 %v361, %v357
    %v530 = vpack.c.b16 %v362, %v358
    %v531 = vpack.c.b16 %v363, %v359
    %v532 = vpack.c.b16 %v364, %v360
    %v533 = vpack.c.b16 %v369, %v365
    %v534 = vpack.c.b16 %v370, %v366
    %v535 = vpack.c.b16 %v371, %v367
    %v536 = vpack.c.b16 %v372, %v368
    %v537 = vpack.c.b16 %v377, %v373
    %v538 = vpack.c.b16 %v378, %v374
    %v539 = vpack.c.b16 %v379, %v375
    %v540 = vpack.c.b16 %v380, %v376
    %v541 = vpack.c.b16 %v385, %v381
    %v542 = vpack.c.b16 %v386, %v382
    %v543 = vpack.c.b16 %v387, %v383
    %v544 = vpack.c.b16 %v388, %v384
    %v545 = vpack.c.b16 %v393, %v389
    %v546 = vpack.c.b16 %v394, %v390
    %v547 = vpack.c.b16 %v395, %v391
    %v548 = vpack.c.b16 %v396, %v392
    %v549 = vpack.c.b16 %v401, %v397
    %v550 = vpack.c.b16 %v402, %v398
    %v551 = vpack.c.b16 %v403, %v399
    %v552 = vpack.c.b16 %v404, %v400
    %v553 = vpack.c.b16 %v409, %v405
    %v554 = vpack.c.b16 %v410, %v406
    %v555 = vpack.c.b16 %v411, %v407
    %v556 = vpack.c.b16 %v412, %v408
    %v557 = vpack.c.b16 %v417, %v413
    %v558 = vpack.c.b16 %v418, %v414
    %v559 = vpack.c.b16 %v419, %v415
    %v560 = vpack.c.b16 %v420, %v416
    %v561 = vpack.c.b16 %v425, %v421
    %v562 = vpack.c.b16 %v426, %v422
    %v563 = vpack.c.b16 %v427, %v423
    %v564 = vpack.c.b16 %v428, %v424
    %v565 = vpack.c.b16 %v433, %v429
    %v566 = vpack.c.b16 %v434, %v430
    %v567 = vpack.c.b16 %v435, %v431
    %v568 = vpack.c.b16 %v436, %v432
    %v569 = vpack.c.b16 %v441, %v437
    %v570 = vpack.c.b16 %v442, %v438
    %v571 = vpack.c.b16 %v443, %v439
    %v572 = vpack.c.b16 %v444, %v440
    %v573 = vpack.c.b16 %v449, %v445
    %v574 = vpack.c.b16 %v450, %v446
    %v575 = vpack.c.b16 %v451, %v447
    %v576 = vpack.c.b16 %v452, %v448
    %v577 = vpack.c.b16 %v457, %v453
    %v578 = vpack.c.b16 %v458, %v454
    %v579 = vpack.c.b16 %v459, %v455
    %v580 = vpack.c.b16 %v460, %v456
    %v581 = vpack.c.b16 %v465, %v461
    %v582 = vpack.c.b16 %v466, %v462
    %v583 = vpack.c.b16 %v467, %v463
    %v584 = vpack.c.b16 %v468, %v464
    %v585 = vpack.c.b16 %v473, %v469
    %v586 = vpack.c.b16 %v474, %v470
    %v587 = vpack.c.b16 %v475, %v471
    %v588 = vpack.c.b16 %v476, %v472
    %v589 = vpack.c.b16 %v481, %v477
    %v590 = vpack.c.b16 %v482, %v478
    %v591 = vpack.c.b16 %v483, %v479
    %v592 = vpack.c.b16 %v484, %v480
    %v593 = vpack.c.b16 %v489, %v485
    %v594 = vpack.c.b16 %v490, %v486
    %v595 = vpack.c.b16 %v491, %v487
    %v596 = vpack.c.b16 %v492, %v488
    %v597 = vpack.c.b16 %v497, %v493
    %v598 = vpack.c.b16 %v498, %v494
    %v599 = vpack.c.b16 %v499, %v495
    %v600 = vpack.c.b16 %v500, %v496
    %v601 = vpack.c.b16 %v505, %v501
    %v602 = vpack.c.b16 %v506, %v502
    %v603 = vpack.c.b16 %v507, %v503
    %v604 = vpack.c.b16 %v508, %v504
    %701 = vmatprep.subr.bf16.mxu0 %v510
    %702 = vmatpush1.bf16.msra.mxu0 %v509
    %703 = vmatprep.subr.bf16.mxu0 %v514
    %704 = vmatpush1.bf16.msra.mxu0 %v513
    %705 = vmatprep.subr.bf16.mxu0 %v518
    %706 = vmatpush1.bf16.msra.mxu0 %v517
    %707 = vmatprep.subr.bf16.mxu0 %v522
    %708 = vmatpush1.bf16.msra.mxu0 %v521
    %709 = vmatprep.subr.bf16.mxu0 %v526
    %710 = vmatpush1.bf16.msra.mxu0 %v525
    %711 = vmatprep.subr.bf16.mxu0 %v530
    %712 = vmatpush1.bf16.msra.mxu0 %v529
    %713 = vmatprep.subr.bf16.mxu0 %v534
    %714 = vmatpush1.bf16.msra.mxu0 %v533
    %715 = vmatprep.subr.bf16.mxu0 %v538
    %716 = vmatpush1.bf16.msra.mxu0 %v537
    %717 = vmatprep.subr.bf16.mxu0 %v542
    %718 = vmatpush1.bf16.msra.mxu0 %v541
    %719 = vmatprep.subr.bf16.mxu0 %v546
    %720 = vmatpush1.bf16.msra.mxu0 %v545
    %721 = vmatprep.subr.bf16.mxu0 %v550
    %722 = vmatpush1.bf16.msra.mxu0 %v549
    %723 = vmatprep.subr.bf16.mxu0 %v554
    %724 = vmatpush1.bf16.msra.mxu0 %v553
    %725 = vmatprep.subr.bf16.mxu0 %v558
    %726 = vmatpush1.bf16.msra.mxu0 %v557
    %727 = vmatprep.subr.bf16.mxu0 %v562
    %728 = vmatpush1.bf16.msra.mxu0 %v561
    %729 = vmatprep.subr.bf16.mxu0 %v566
    %730 = vmatpush1.bf16.msra.mxu0 %v565
    %731 = vmatprep.subr.bf16.mxu0 %v570
    %732 = vmatpush1.bf16.msra.mxu0 %v569
    %733 = vmatprep.mubr.bf16.mxu0 %v101
    %734 = vmatmul.mubr.bf16.gmra.mrb[0].mxu0 %v100
    %v735 = vpop.f32.mrb[0].mxu0
    %v736 = vadd.f32 %v204, %v735
    %v737 = vpop.f32.mrb[0].mxu0
    %v738 = vadd.f32 %v208, %v737
    %v739 = vpop.f32.mrb[0].mxu0
    %v740 = vadd.f32 %v204, %v739
    %v741 = vpop.f32.mrb[0].mxu0
    %v742 = vadd.f32 %v208, %v741
    %743 = vdwg.mxu0
    %744 = vmatprep.subr.bf16.mxu0 %v574
    %745 = vmatpush1.bf16.msra.mxu0 %v573
    %746 = vmatprep.subr.bf16.mxu0 %v578
    %747 = vmatpush1.bf16.msra.mxu0 %v577
    %748 = vmatprep.subr.bf16.mxu0 %v582
    %749 = vmatpush1.bf16.msra.mxu0 %v581
    %750 = vmatprep.subr.bf16.mxu0 %v586
    %751 = vmatpush1.bf16.msra.mxu0 %v585
    %752 = vmatprep.subr.bf16.mxu0 %v590
    %753 = vmatpush1.bf16.msra.mxu0 %v589
    %754 = vmatprep.subr.bf16.mxu0 %v594
    %755 = vmatpush1.bf16.msra.mxu0 %v593
    %756 = vmatprep.subr.bf16.mxu0 %v598
    %757 = vmatpush1.bf16.msra.mxu0 %v597
    %758 = vmatprep.subr.bf16.mxu0 %v602
    %759 = vmatpush1.bf16.msra.mxu0 %v601
    %760 = vmatprep.subr.bf16.mxu0 0
    %761 = vmatpush1.bf16.msra.mxu0 0
    %762 = vmatprep.subr.bf16.mxu0 0
    %763 = vmatpush1.bf16.msra.mxu0 0
    %764 = vmatprep.subr.bf16.mxu0 0
    %765 = vmatpush1.bf16.msra.mxu0 0
    %766 = vmatprep.subr.bf16.mxu0 0
    %767 = vmatpush1.bf16.msra.mxu0 0
    %768 = vmatprep.subr.bf16.mxu0 0
    %769 = vmatpush1.bf16.msra.mxu0 0
    %770 = vmatprep.subr.bf16.mxu0 0
    %771 = vmatpush1.bf16.msra.mxu0 0
    %772 = vmatprep.subr.bf16.mxu0 0
    %773 = vmatpush1.bf16.msra.mxu0 0
    %774 = vmatprep.subr.bf16.mxu0 0
    %775 = vmatpush1.bf16.msra.mxu0 0
    %776 = vmatprep.mubr.bf16.mxu0 0
    %777 = vmatmul.mubr.bf16.gmra.mrb[0].mxu0 %v102
    %v778 = vpop.f32.mrb[0].mxu0
    %v779 = vadd.f32 %v736, %v778
    %v780 = vpop.f32.mrb[0].mxu0
    %v781 = vadd.f32 %v738, %v780
    %v782 = vpop.f32.mrb[0].mxu0
    %v783 = vadd.f32 %v740, %v782
    %v784 = vpop.f32.mrb[0].mxu0
    %v785 = vadd.f32 %v742, %v784
    %786 = vdwg.mxu0
    %787 = vmatprep.subr.bf16.mxu0 %v512
    %788 = vmatpush1.bf16.msra.mxu0 %v511
    %789 = vmatprep.subr.bf16.mxu0 %v516
    %790 = vmatpush1.bf16.msra.mxu0 %v515
    %791 = vmatprep.subr.bf16.mxu0 %v520
    %792 = vmatpush1.bf16.msra.mxu0 %v519
    %793 = vmatprep.subr.bf16.mxu0 %v524
    %794 = vmatpush1.bf16.msra.mxu0 %v523
    %795 = vmatprep.subr.bf16.mxu0 %v528
    %796 = vmatpush1.bf16.msra.mxu0 %v527
    %797 = vmatprep.subr.bf16.mxu0 %v532
    %798 = vmatpush1.bf16.msra.mxu0 %v531
    %799 = vmatprep.subr.bf16.mxu0 %v536
    %800 = vmatpush1.bf16.msra.mxu0 %v535
    %801 = vmatprep.subr.bf16.mxu0 %v540
    %802 = vmatpush1.bf16.msra.mxu0 %v539
    %803 = vmatprep.subr.bf16.mxu0 %v544
    %804 = vmatpush1.bf16.msra.mxu0 %v543
    %805 = vmatprep.subr.bf16.mxu0 %v548
    %806 = vmatpush1.bf16.msra.mxu0 %v547
    %807 = vmatprep.subr.bf16.mxu0 %v552
    %808 = vmatpush1.bf16.msra.mxu0 %v551
    %809 = vmatprep.subr.bf16.mxu0 %v556
    %810 = vmatpush1.bf16.msra.mxu0 %v555
    %811 = vmatprep.subr.bf16.mxu0 %v560
    %812 = vmatpush1.bf16.msra.mxu0 %v559
    %813 = vmatprep.subr.bf16.mxu0 %v564
    %814 = vmatpush1.bf16.msra.mxu0 %v563
    %815 = vmatprep.subr.bf16.mxu0 %v568
    %816 = vmatpush1.bf16.msra.mxu0 %v567
    %817 = vmatprep.subr.bf16.mxu0 %v572
    %818 = vmatpush1.bf16.msra.mxu0 %v571
    %819 = vmatprep.mubr.bf16.mxu0 %v101
    %820 = vmatmul.mubr.bf16.gmra.mrb[0].mxu0 %v100
    %v821 = vpop.f32.mrb[0].mxu0
    %v822 = vadd.f32 %v212, %v821
    %v823 = vpop.f32.mrb[0].mxu0
    %v824 = vadd.f32 %v216, %v823
    %v825 = vpop.f32.mrb[0].mxu0
    %v826 = vadd.f32 %v212, %v825
    %v827 = vpop.f32.mrb[0].mxu0
    %v828 = vadd.f32 %v216, %v827
    %829 = vdwg.mxu0
    %830 = vmatprep.subr.bf16.mxu0 %v576
    %831 = vmatpush1.bf16.msra.mxu0 %v575
    %832 = vmatprep.subr.bf16.mxu0 %v580
    %833 = vmatpush1.bf16.msra.mxu0 %v579
    %834 = vmatprep.subr.bf16.mxu0 %v584
    %835 = vmatpush1.bf16.msra.mxu0 %v583
    %836 = vmatprep.subr.bf16.mxu0 %v588
    %837 = vmatpush1.bf16.msra.mxu0 %v587
    %838 = vmatprep.subr.bf16.mxu0 %v592
    %839 = vmatpush1.bf16.msra.mxu0 %v591
    %840 = vmatprep.subr.bf16.mxu0 %v596
    %841 = vmatpush1.bf16.msra.mxu0 %v595
    %842 = vmatprep.subr.bf16.mxu0 %v600
    %843 = vmatpush1.bf16.msra.mxu0 %v599
    %844 = vmatprep.subr.bf16.mxu0 %v604
    %845 = vmatpush1.bf16.msra.mxu0 %v603
    %846 = vmatprep.subr.bf16.mxu0 0
    %847 = vmatpush1.bf16.msra.mxu0 0
    %848 = vmatprep.subr.bf16.mxu0 0
    %849 = vmatpush1.bf16.msra.mxu0 0
    %850 = vmatprep.subr.bf16.mxu0 0
    %851 = vmatpush1.bf16.msra.mxu0 0
    %852 = vmatprep.subr.bf16.mxu0 0
    %853 = vmatpush1.bf16.msra.mxu0 0
    %854 = vmatprep.subr.bf16.mxu0 0
    %855 = vmatpush1.bf16.msra.mxu0 0
    %856 = vmatprep.subr.bf16.mxu0 0
    %857 = vmatpush1.bf16.msra.mxu0 0
    %858 = vmatprep.subr.bf16.mxu0 0
    %859 = vmatpush1.bf16.msra.mxu0 0
    %860 = vmatprep.subr.bf16.mxu0 0
    %861 = vmatpush1.bf16.msra.mxu0 0
    %862 = vmatprep.mubr.bf16.mxu0 0
    %863 = vmatmul.mubr.bf16.gmra.mrb[0].mxu0 %v102
    %v864 = vpop.f32.mrb[0].mxu0
    %v865 = vadd.f32 %v822, %v864
    %v866 = vpop.f32.mrb[0].mxu0
    %v867 = vadd.f32 %v824, %v866
    %v868 = vpop.f32.mrb[0].mxu0
    %v869 = vadd.f32 %v826, %v868
    %v870 = vpop.f32.mrb[0].mxu0
    %v871 = vadd.f32 %v828, %v870
    %872 = vdwg.mxu0
    %v873 = vmul.f32 %v779, 0.044715
    %v874 = vmul.f32 %v781, 0.044715
    %v875 = vmul.f32 %v865, 0.044715
    %v876 = vmul.f32 %v867, 0.044715
    %v877 = vmul.f32 %v783, 0.044715
    %v878 = vmul.f32 %v785, 0.044715
    %v879 = vmul.f32 %v869, 0.044715
    %v880 = vmul.f32 %v871, 0.044715
    %v881 = vmul.f32 %v873, %v779
    %v882 = vmul.f32 %v874, %v781
    %v883 = vmul.f32 %v875, %v865
    %v884 = vmul.f32 %v876, %v867
    %v885 = vmul.f32 %v877, %v783
    %v886 = vmul.f32 %v878, %v785
    %v887 = vmul.f32 %v879, %v869
    %v888 = vmul.f32 %v880, %v871
    %v889 = vmul.f32 %v881, %v779
    %v890 = vmul.f32 %v882, %v781
    %v891 = vmul.f32 %v883, %v865
    %v892 = vmul.f32 %v884, %v867
    %v893 = vmul.f32 %v885, %v783
    %v894 = vmul.f32 %v886, %v785
    %v895 = vmul.f32 %v887, %v869
    %v896 = vmul.f32 %v888, %v871
    %v897 = vadd.f32 %v779, %v889
    %v898 = vadd.f32 %v781, %v890
    %v899 = vadd.f32 %v865, %v891
    %v900 = vadd.f32 %v867, %v892
    %v901 = vadd.f32 %v783, %v893
    %v902 = vadd.f32 %v785, %v894
    %v903 = vadd.f32 %v869, %v895
    %v904 = vadd.f32 %v871, %v896
    %v905 = vmul.f32 %v897, 0.7978846
    %v906 = vmul.f32 %v898, 0.7978846
    %v907 = vmul.f32 %v899, 0.7978846
    %v908 = vmul.f32 %v900, 0.7978846
    %v909 = vmul.f32 %v901, 0.7978846
    %v910 = vmul.f32 %v902, 0.7978846
    %v911 = vmul.f32 %v903, 0.7978846
    %v912 = vmul.f32 %v904, 0.7978846
    %v913 = vtanh.pop %v905
    %v914 = vtanh.pop %v906
    %v915 = vtanh.pop %v907
    %v916 = vtanh.pop %v908
    %v917 = vtanh.pop %v909
    %v918 = vtanh.pop %v910
    %v919 = vtanh.pop %v911
    %v920 = vtanh.pop %v912
    %v921 = vadd.f32 %v913, 1.0
    %v922 = vadd.f32 %v914, 1.0
    %v923 = vadd.f32 %v915, 1.0
    %v924 = vadd.f32 %v916, 1.0
    %v925 = vadd.f32 %v917, 1.0
    %v926 = vadd.f32 %v918, 1.0
    %v927 = vadd.f32 %v919, 1.0
    %v928 = vadd.f32 %v920, 1.0
    %v929 = vmul.f32 %v921, 0.5
    %v930 = vmul.f32 %v922, 0.5
    %v931 = vmul.f32 %v923, 0.5
    %v932 = vmul.f32 %v924, 0.5
    %v933 = vmul.f32 %v925, 0.5
    %v934 = vmul.f32 %v926, 0.5
    %v935 = vmul.f32 %v927, 0.5
    %v936 = vmul.f32 %v928, 0.5
    %v937 = vmul.f32 %v779, %v929
    %v938 = vmul.f32 %v781, %v930
    %v939 = vmul.f32 %v865, %v931
    %v940 = vmul.f32 %v867, %v932
    %v941 = vmul.f32 %v783, %v933
    %v942 = vmul.f32 %v785, %v934
    %v943 = vmul.f32 %v869, %v935
    %v944 = vmul.f32 %v871, %v936
    %v945 = vpack.c.bf16 %v941, %v937
    %v946 = vpack.c.bf16 %v942, %v938
    %v947 = vpack.c.bf16 %v943, %v939
    %v948 = vpack.c.bf16 %v944, %v940
    %v949 = vld [vmem:[#allocation10] sm:$0xff]
    %v950 = vld [vmem:[#allocation10 + $0x8] sm:$0xf]
    %v951 = vld [vmem:[#allocation10 + $0xc] sm:$0xff]
    %v952 = vld [vmem:[#allocation10 + $0x14] sm:$0xf]
    %v953 = vld [vmem:[#allocation10 + $0x18] sm:$0xff]
    %v954 = vld [vmem:[#allocation10 + $0x20] sm:$0xf]
    %v955 = vld [vmem:[#allocation10 + $0x24] sm:$0xff]
    %v956 = vld [vmem:[#allocation10 + $0x2c] sm:$0xf]
    %v957 = vld [vmem:[#allocation10 + $0x30] sm:$0xff]
    %v958 = vld [vmem:[#allocation10 + $0x38] sm:$0xf]
    %v959 = vld [vmem:[#allocation10 + $0x3c] sm:$0xff]
    %v960 = vld [vmem:[#allocation10 + $0x44] sm:$0xf]
    %v961 = vld [vmem:[#allocation10 + $0x48] sm:$0xff]
    %v962 = vld [vmem:[#allocation10 + $0x50] sm:$0xf]
    %v963 = vld [vmem:[#allocation10 + $0x54] sm:$0xff]
    %v964 = vld [vmem:[#allocation10 + $0x5c] sm:$0xf]
    %v965 = vld [vmem:[#allocation10 + $0x60] sm:$0xff]
    %v966 = vld [vmem:[#allocation10 + $0x68] sm:$0xf]
    %v967 = vld [vmem:[#allocation10 + $0x6c] sm:$0xff]
    %v968 = vld [vmem:[#allocation10 + $0x74] sm:$0xf]
    %v969 = vld [vmem:[#allocation10 + $0x78] sm:$0xff]
    %v970 = vld [vmem:[#allocation10 + $0x80] sm:$0xf]
    %v971 = vld [vmem:[#allocation10 + $0x84] sm:$0xff]
    %v972 = vld [vmem:[#allocation10 + $0x8c] sm:$0xf]
    %v973 = vld [vmem:[#allocation10 + $0x90] sm:$0xff]
    %v974 = vld [vmem:[#allocation10 + $0x98] sm:$0xf]
    %v975 = vld [vmem:[#allocation10 + $0x9c] sm:$0xff]
    %v976 = vld [vmem:[#allocation10 + $0xa4] sm:$0xf]
    %v977 = vld [vmem:[#allocation10 + $0xa8] sm:$0xff]
    %v978 = vld [vmem:[#allocation10 + $0xb0] sm:$0xf]
    %v979 = vld [vmem:[#allocation10 + $0xb4] sm:$0xff]
    %v980 = vld [vmem:[#allocation10 + $0xbc] sm:$0xf]
    %v981 = vld [vmem:[#allocation10 + $0xc0] sm:$0xff]
    %v982 = vld [vmem:[#allocation10 + $0xc8] sm:$0xf]
    %v983 = vld [vmem:[#allocation10 + $0xcc] sm:$0xff]
    %v984 = vld [vmem:[#allocation10 + $0xd4] sm:$0xf]
    %v985 = vld [vmem:[#allocation10 + $0xd8] sm:$0xff]
    %v986 = vld [vmem:[#allocation10 + $0xe0] sm:$0xf]
    %v987 = vld [vmem:[#allocation10 + $0xe4] sm:$0xff]
    %v988 = vld [vmem:[#allocation10 + $0xec] sm:$0xf]
    %v989 = vld [vmem:[#allocation10 + $0xf0] sm:$0xff]
    %v990 = vld [vmem:[#allocation10 + $0xf8] sm:$0xf]
    %v991 = vld [vmem:[#allocation10 + $0xfc] sm:$0xff]
    %v992 = vld [vmem:[#allocation10 + $0x104] sm:$0xf]
    %v993 = vld [vmem:[#allocation10 + $0x108] sm:$0xff]
    %v994 = vld [vmem:[#allocation10 + $0x110] sm:$0xf]
    %v995 = vld [vmem:[#allocation10 + $0x114] sm:$0xff]
    %v996 = vld [vmem:[#allocation10 + $0x11c] sm:$0xf]
    %v997 = vld [vmem:[#allocation10 + $0x120] sm:$0xff]
    %v998 = vld [vmem:[#allocation10 + $0x128] sm:$0xf]
    %v999 = vld [vmem:[#allocation10 + $0x12c] sm:$0xff]
    %v1000 = vld [vmem:[#allocation10 + $0x134] sm:$0xf]
    %v1001 = vld [vmem:[#allocation10 + $0x138] sm:$0xff]
    %v1002 = vld [vmem:[#allocation10 + $0x140] sm:$0xf]
    %v1003 = vld [vmem:[#allocation10 + $0x144] sm:$0xff]
    %v1004 = vld [vmem:[#allocation10 + $0x14c] sm:$0xf]
    %v1005 = vld [vmem:[#allocation10 + $0x150] sm:$0xff]
    %v1006 = vld [vmem:[#allocation10 + $0x158] sm:$0xf]
    %v1007 = vld [vmem:[#allocation10 + $0x15c] sm:$0xff]
    %v1008 = vld [vmem:[#allocation10 + $0x164] sm:$0xf]
    %v1009 = vld [vmem:[#allocation10 + $0x168] sm:$0xff]
    %v1010 = vld [vmem:[#allocation10 + $0x170] sm:$0xf]
    %v1011 = vld [vmem:[#allocation10 + $0x174] sm:$0xff]
    %v1012 = vld [vmem:[#allocation10 + $0x17c] sm:$0xf]
    %v1013 = vld [vmem:[#allocation10 + $0x180] sm:$0xff]
    %v1014 = vld [vmem:[#allocation10 + $0x188] sm:$0xf]
    %v1015 = vld [vmem:[#allocation10 + $0x18c] sm:$0xff]
    %v1016 = vld [vmem:[#allocation10 + $0x194] sm:$0xf]
    %v1017 = vld [vmem:[#allocation10 + $0x198] sm:$0xff]
    %v1018 = vld [vmem:[#allocation10 + $0x1a0] sm:$0xf]
    %v1019 = vld [vmem:[#allocation10 + $0x1a4] sm:$0xff]
    %v1020 = vld [vmem:[#allocation10 + $0x1ac] sm:$0xf]
    %v1021 = vld [vmem:[#allocation10 + $0x1b0] sm:$0xff]
    %v1022 = vld [vmem:[#allocation10 + $0x1b8] sm:$0xf]
    %v1023 = vld [vmem:[#allocation10 + $0x1bc] sm:$0xff]
    %v1024 = vld [vmem:[#allocation10 + $0x1c4] sm:$0xf]
    %v1025 = vld [vmem:[#allocation10 + $0x1c8] sm:$0xff]
    %v1026 = vld [vmem:[#allocation10 + $0x1d0] sm:$0xf]
    %v1027 = vld [vmem:[#allocation10 + $0x1d4] sm:$0xff]
    %v1028 = vld [vmem:[#allocation10 + $0x1dc] sm:$0xf]
    %v1029 = vld [vmem:[#allocation10 + $0x1e0] sm:$0xff]
    %v1030 = vld [vmem:[#allocation10 + $0x1e8] sm:$0xf]
    %v1031 = vld [vmem:[#allocation10 + $0x1ec] sm:$0xff]
    %v1032 = vld [vmem:[#allocation10 + $0x1f4] sm:$0xf]
    %v1033 = vld [vmem:[#allocation10 + $0x1f8] sm:$0xff]
    %v1034 = vld [vmem:[#allocation10 + $0x200] sm:$0xf]
    %v1035 = vld [vmem:[#allocation10 + $0x204] sm:$0xff]
    %v1036 = vld [vmem:[#allocation10 + $0x20c] sm:$0xf]
    %v1037 = vld [vmem:[#allocation10 + $0x210] sm:$0xff]
    %v1038 = vld [vmem:[#allocation10 + $0x218] sm:$0xf]
    %v1039 = vld [vmem:[#allocation10 + $0x21c] sm:$0xff]
    %v1040 = vld [vmem:[#allocation10 + $0x224] sm:$0xf]
    %v1041 = vld [vmem:[#allocation10 + $0x228] sm:$0xff]
    %v1042 = vld [vmem:[#allocation10 + $0x230] sm:$0xf]
    %v1043 = vld [vmem:[#allocation10 + $0x234] sm:$0xff]
    %v1044 = vld [vmem:[#allocation10 + $0x23c] sm:$0xf]
    %v1045 = vld [vmem:[#allocation10 + $0x240] sm:$0xff]
    %v1046 = vld [vmem:[#allocation10 + $0x248] sm:$0xf]
    %v1047 = vld [vmem:[#allocation10 + $0x24c] sm:$0xff]
    %v1048 = vld [vmem:[#allocation10 + $0x254] sm:$0xf]
    %v1049 = vld [vmem:[#allocation10 + $0x258] sm:$0xff]
    %v1050 = vld [vmem:[#allocation10 + $0x260] sm:$0xf]
    %v1051 = vld [vmem:[#allocation10 + $0x264] sm:$0xff]
    %v1052 = vld [vmem:[#allocation10 + $0x26c] sm:$0xf]
    %v1053 = vld [vmem:[#allocation10 + $0x270] sm:$0xff]
    %v1054 = vld [vmem:[#allocation10 + $0x278] sm:$0xf]
    %v1055 = vld [vmem:[#allocation10 + $0x27c] sm:$0xff]
    %v1056 = vld [vmem:[#allocation10 + $0x284] sm:$0xf]
    %v1057 = vld [vmem:[#allocation10 + $0x288] sm:$0xff]
    %v1058 = vld [vmem:[#allocation10 + $0x290] sm:$0xf]
    %v1059 = vld [vmem:[#allocation10 + $0x294] sm:$0xff]
    %v1060 = vld [vmem:[#allocation10 + $0x29c] sm:$0xf]
    %v1061 = vld [vmem:[#allocation10 + $0x2a0] sm:$0xff]
    %v1062 = vld [vmem:[#allocation10 + $0x2a8] sm:$0xf]
    %v1063 = vld [vmem:[#allocation10 + $0x2ac] sm:$0xff]
    %v1064 = vld [vmem:[#allocation10 + $0x2b4] sm:$0xf]
    %v1065 = vld [vmem:[#allocation10 + $0x2b8] sm:$0xff]
    %v1066 = vld [vmem:[#allocation10 + $0x2c0] sm:$0xf]
    %v1067 = vld [vmem:[#allocation10 + $0x2c4] sm:$0xff]
    %v1068 = vld [vmem:[#allocation10 + $0x2cc] sm:$0xf]
    %v1069 = vld [vmem:[#allocation10 + $0x2d0] sm:$0xff]
    %v1070 = vld [vmem:[#allocation10 + $0x2d8] sm:$0xf]
    %v1071 = vld [vmem:[#allocation10 + $0x2dc] sm:$0xff]
    %v1072 = vld [vmem:[#allocation10 + $0x2e4] sm:$0xf]
    %v1073 = vld [vmem:[#allocation10 + $0x2e8] sm:$0xff]
    %v1074 = vld [vmem:[#allocation10 + $0x2f0] sm:$0xf]
    %v1075 = vld [vmem:[#allocation10 + $0x2f4] sm:$0xff]
    %v1076 = vld [vmem:[#allocation10 + $0x2fc] sm:$0xf]
    %v1077 = vld [vmem:[#allocation7 + $0x10] sm:$0xff]
    %v1078 = vld [vmem:[#allocation7 + $0x18] sm:$0xff]
    %v1079 = vld [vmem:[#allocation7 + $0x40] sm:$0xff]
    %v1080 = vld [vmem:[#allocation7 + $0x48] sm:$0xff]
    %v1081 = vld [vmem:[#allocation7 + $0x70] sm:$0xff]
    %v1082 = vld [vmem:[#allocation7 + $0x78] sm:$0xff]
    %v1083 = vld [vmem:[#allocation7 + $0xa0] sm:$0xff]
    %v1084 = vld [vmem:[#allocation7 + $0xa8] sm:$0xff]
    %v1085 = vld [vmem:[#allocation7 + $0xd0] sm:$0xff]
    %v1086 = vld [vmem:[#allocation7 + $0xd8] sm:$0xff]
    %v1087 = vld [vmem:[#allocation7 + $0x100] sm:$0xff]
    %v1088 = vld [vmem:[#allocation7 + $0x108] sm:$0xff]
    %v1089 = vld [vmem:[#allocation7 + $0x130] sm:$0xff]
    %v1090 = vld [vmem:[#allocation7 + $0x138] sm:$0xff]
    %v1091 = vld [vmem:[#allocation7 + $0x160] sm:$0xff]
    %v1092 = vld [vmem:[#allocation7 + $0x168] sm:$0xff]
    %v1093 = vld [vmem:[#allocation7 + $0x190] sm:$0xff]
    %v1094 = vld [vmem:[#allocation7 + $0x198] sm:$0xff]
    %v1095 = vld [vmem:[#allocation7 + $0x1c0] sm:$0xff]
    %v1096 = vld [vmem:[#allocation7 + $0x1c8] sm:$0xff]
    %v1097 = vld [vmem:[#allocation7 + $0x1f0] sm:$0xff]
    %v1098 = vld [vmem:[#allocation7 + $0x1f8] sm:$0xff]
    %v1099 = vld [vmem:[#allocation7 + $0x220] sm:$0xff]
    %v1100 = vld [vmem:[#allocation7 + $0x228] sm:$0xff]
    %v1101 = vld [vmem:[#allocation7 + $0x250] sm:$0xff]
    %v1102 = vld [vmem:[#allocation7 + $0x258] sm:$0xff]
    %v1103 = vld [vmem:[#allocation7 + $0x280] sm:$0xff]
    %v1104 = vld [vmem:[#allocation7 + $0x288] sm:$0xff]
    %v1105 = vld [vmem:[#allocation7 + $0x2b0] sm:$0xff]
    %v1106 = vld [vmem:[#allocation7 + $0x2b8] sm:$0xff]
    %v1107 = vld [vmem:[#allocation7 + $0x2e0] sm:$0xff]
    %v1108 = vld [vmem:[#allocation7 + $0x2e8] sm:$0xff]
    %v1109 = vld [vmem:[#allocation7 + $0x310] sm:$0xff]
    %v1110 = vld [vmem:[#allocation7 + $0x318] sm:$0xff]
    %v1111 = vld [vmem:[#allocation7 + $0x340] sm:$0xff]
    %v1112 = vld [vmem:[#allocation7 + $0x348] sm:$0xff]
    %v1113 = vld [vmem:[#allocation7 + $0x370] sm:$0xff]
    %v1114 = vld [vmem:[#allocation7 + $0x378] sm:$0xff]
    %v1115 = vld [vmem:[#allocation7 + $0x3a0] sm:$0xff]
    %v1116 = vld [vmem:[#allocation7 + $0x3a8] sm:$0xff]
    %v1117 = vld [vmem:[#allocation7 + $0x3d0] sm:$0xff]
    %v1118 = vld [vmem:[#allocation7 + $0x3d8] sm:$0xff]
    %v1119 = vld [vmem:[#allocation7 + $0x400] sm:$0xff]
    %v1120 = vld [vmem:[#allocation7 + $0x408] sm:$0xff]
    %v1121 = vld [vmem:[#allocation7 + $0x430] sm:$0xff]
    %v1122 = vld [vmem:[#allocation7 + $0x438] sm:$0xff]
    %v1123 = vld [vmem:[#allocation7 + $0x460] sm:$0xff]
    %v1124 = vld [vmem:[#allocation7 + $0x468] sm:$0xff]
    %v1125 = vld [vmem:[#allocation7 + $0x490] sm:$0xff]
    %v1126 = vld [vmem:[#allocation7 + $0x498] sm:$0xff]
    %v1127 = vld [vmem:[#allocation7 + $0x4c0] sm:$0xff]
    %v1128 = vld [vmem:[#allocation7 + $0x4c8] sm:$0xff]
    %v1129 = vld [vmem:[#allocation7 + $0x4f0] sm:$0xff]
    %v1130 = vld [vmem:[#allocation7 + $0x4f8] sm:$0xff]
    %v1131 = vld [vmem:[#allocation7 + $0x520] sm:$0xff]
    %v1132 = vld [vmem:[#allocation7 + $0x528] sm:$0xff]
    %v1133 = vld [vmem:[#allocation7 + $0x550] sm:$0xff]
    %v1134 = vld [vmem:[#allocation7 + $0x558] sm:$0xff]
    %v1135 = vld [vmem:[#allocation7 + $0x580] sm:$0xff]
    %v1136 = vld [vmem:[#allocation7 + $0x588] sm:$0xff]
    %v1137 = vld [vmem:[#allocation7 + $0x5b0] sm:$0xff]
    %v1138 = vld [vmem:[#allocation7 + $0x5b8] sm:$0xff]
    %v1139 = vld [vmem:[#allocation7 + $0x5e0] sm:$0xff]
    %v1140 = vld [vmem:[#allocation7 + $0x5e8] sm:$0xff]
    %v1141 = vld [vmem:[#allocation7 + $0x610] sm:$0xff]
    %v1142 = vld [vmem:[#allocation7 + $0x618] sm:$0xff]
    %v1143 = vld [vmem:[#allocation7 + $0x640] sm:$0xff]
    %v1144 = vld [vmem:[#allocation7 + $0x648] sm:$0xff]
    %v1145 = vld [vmem:[#allocation7 + $0x670] sm:$0xff]
    %v1146 = vld [vmem:[#allocation7 + $0x678] sm:$0xff]
    %v1147 = vld [vmem:[#allocation7 + $0x6a0] sm:$0xff]
    %v1148 = vld [vmem:[#allocation7 + $0x6a8] sm:$0xff]
    %v1149 = vld [vmem:[#allocation7 + $0x6d0] sm:$0xff]
    %v1150 = vld [vmem:[#allocation7 + $0x6d8] sm:$0xff]
    %v1151 = vld [vmem:[#allocation7 + $0x700] sm:$0xff]
    %v1152 = vld [vmem:[#allocation7 + $0x708] sm:$0xff]
    %v1153 = vld [vmem:[#allocation7 + $0x730] sm:$0xff]
    %v1154 = vld [vmem:[#allocation7 + $0x738] sm:$0xff]
    %v1155 = vld [vmem:[#allocation7 + $0x760] sm:$0xff]
    %v1156 = vld [vmem:[#allocation7 + $0x768] sm:$0xff]
    %v1157 = vld [vmem:[#allocation7 + $0x790] sm:$0xff]
    %v1158 = vld [vmem:[#allocation7 + $0x798] sm:$0xff]
    %v1159 = vld [vmem:[#allocation7 + $0x7c0] sm:$0xff]
    %v1160 = vld [vmem:[#allocation7 + $0x7c8] sm:$0xff]
    %v1161 = vld [vmem:[#allocation7 + $0x7f0] sm:$0xff]
    %v1162 = vld [vmem:[#allocation7 + $0x7f8] sm:$0xff]
    %v1163 = vld [vmem:[#allocation7 + $0x820] sm:$0xff]
    %v1164 = vld [vmem:[#allocation7 + $0x828] sm:$0xff]
    %v1165 = vld [vmem:[#allocation7 + $0x850] sm:$0xff]
    %v1166 = vld [vmem:[#allocation7 + $0x858] sm:$0xff]
    %v1167 = vld [vmem:[#allocation7 + $0x880] sm:$0xff]
    %v1168 = vld [vmem:[#allocation7 + $0x888] sm:$0xff]
    %v1169 = vld [vmem:[#allocation7 + $0x8b0] sm:$0xff]
    %v1170 = vld [vmem:[#allocation7 + $0x8b8] sm:$0xff]
    %v1171 = vld [vmem:[#allocation7 + $0x8e0] sm:$0xff]
    %v1172 = vld [vmem:[#allocation7 + $0x8e8] sm:$0xff]
    %v1173 = vld [vmem:[#allocation9 + $0x4] sm:$0xf]
    %v1175 = vlaneseq
    %v1176 = vshrl.u32 %v1175, 7
    %v1177 = vsub.s32 0, %v1176
    %v1178 = vrot.slane %v1173, %v1177
    %v1179 = vlaneseq
    %v1180 = vshrl.u32 %v1179, 7
    %v1181 = vsub.s32 1, %v1180
    %v1182 = vrot.slane %v1173, %v1181
    %v1183 = vlaneseq
    %v1184 = vshrl.u32 %v1183, 7
    %v1185 = vsub.s32 2, %v1184
    %v1186 = vrot.slane %v1173, %v1185
    %v1187 = vlaneseq
    %v1188 = vshrl.u32 %v1187, 7
    %v1189 = vsub.s32 3, %v1188
    %v1190 = vrot.slane %v1173, %v1189
    %v1291 = vunpack.c.l.b16 %v1077
    %v1292 = vunpack.c.h.b16 %v1077
    %v1293 = vunpack.c.l.b16 %v1078
    %v1294 = vunpack.c.h.b16 %v1078
    %v1295 = vunpack.c.l.b16 %v1079
    %v1296 = vunpack.c.h.b16 %v1079
    %v1297 = vunpack.c.l.b16 %v1080
    %v1298 = vunpack.c.h.b16 %v1080
    %v1299 = vunpack.c.l.b16 %v1081
    %v1300 = vunpack.c.h.b16 %v1081
    %v1301 = vunpack.c.l.b16 %v1082
    %v1302 = vunpack.c.h.b16 %v1082
    %v1303 = vunpack.c.l.b16 %v1083
    %v1304 = vunpack.c.h.b16 %v1083
    %v1305 = vunpack.c.l.b16 %v1084
    %v1306 = vunpack.c.h.b16 %v1084
    %v1307 = vunpack.c.l.b16 %v1085
    %v1308 = vunpack.c.h.b16 %v1085
    %v1309 = vunpack.c.l.b16 %v1086
    %v1310 = vunpack.c.h.b16 %v1086
    %v1311 = vunpack.c.l.b16 %v1087
    %v1312 = vunpack.c.h.b16 %v1087
    %v1313 = vunpack.c.l.b16 %v1088
    %v1314 = vunpack.c.h.b16 %v1088
    %v1315 = vunpack.c.l.b16 %v1089
    %v1316 = vunpack.c.h.b16 %v1089
    %v1317 = vunpack.c.l.b16 %v1090
    %v1318 = vunpack.c.h.b16 %v1090
    %v1319 = vunpack.c.l.b16 %v1091
    %v1320 = vunpack.c.h.b16 %v1091
    %v1321 = vunpack.c.l.b16 %v1092
    %v1322 = vunpack.c.h.b16 %v1092
    %v1323 = vunpack.c.l.b16 %v1093
    %v1324 = vunpack.c.h.b16 %v1093
    %v1325 = vunpack.c.l.b16 %v1094
    %v1326 = vunpack.c.h.b16 %v1094
    %v1327 = vunpack.c.l.b16 %v1095
    %v1328 = vunpack.c.h.b16 %v1095
    %v1329 = vunpack.c.l.b16 %v1096
    %v1330 = vunpack.c.h.b16 %v1096
    %v1331 = vunpack.c.l.b16 %v1097
    %v1332 = vunpack.c.h.b16 %v1097
    %v1333 = vunpack.c.l.b16 %v1098
    %v1334 = vunpack.c.h.b16 %v1098
    %v1335 = vunpack.c.l.b16 %v1099
    %v1336 = vunpack.c.h.b16 %v1099
    %v1337 = vunpack.c.l.b16 %v1100
    %v1338 = vunpack.c.h.b16 %v1100
    %v1339 = vunpack.c.l.b16 %v1101
    %v1340 = vunpack.c.h.b16 %v1101
    %v1341 = vunpack.c.l.b16 %v1102
    %v1342 = vunpack.c.h.b16 %v1102
    %v1343 = vunpack.c.l.b16 %v1103
    %v1344 = vunpack.c.h.b16 %v1103
    %v1345 = vunpack.c.l.b16 %v1104
    %v1346 = vunpack.c.h.b16 %v1104
    %v1347 = vunpack.c.l.b16 %v1105
    %v1348 = vunpack.c.h.b16 %v1105
    %v1349 = vunpack.c.l.b16 %v1106
    %v1350 = vunpack.c.h.b16 %v1106
    %v1351 = vunpack.c.l.b16 %v1107
    %v1352 = vunpack.c.h.b16 %v1107
    %v1353 = vunpack.c.l.b16 %v1108
    %v1354 = vunpack.c.h.b16 %v1108
    %v1355 = vunpack.c.l.b16 %v1109
    %v1356 = vunpack.c.h.b16 %v1109
    %v1357 = vunpack.c.l.b16 %v1110
    %v1358 = vunpack.c.h.b16 %v1110
    %v1359 = vunpack.c.l.b16 %v1111
    %v1360 = vunpack.c.h.b16 %v1111
    %v1361 = vunpack.c.l.b16 %v1112
    %v1362 = vunpack.c.h.b16 %v1112
    %v1363 = vunpack.c.l.b16 %v1113
    %v1364 = vunpack.c.h.b16 %v1113
    %v1365 = vunpack.c.l.b16 %v1114
    %v1366 = vunpack.c.h.b16 %v1114
    %v1367 = vunpack.c.l.b16 %v1115
    %v1368 = vunpack.c.h.b16 %v1115
    %v1369 = vunpack.c.l.b16 %v1116
    %v1370 = vunpack.c.h.b16 %v1116
    %v1371 = vunpack.c.l.b16 %v1117
    %v1372 = vunpack.c.h.b16 %v1117
    %v1373 = vunpack.c.l.b16 %v1118
    %v1374 = vunpack.c.h.b16 %v1118
    %v1375 = vunpack.c.l.b16 %v1119
    %v1376 = vunpack.c.h.b16 %v1119
    %v1377 = vunpack.c.l.b16 %v1120
    %v1378 = vunpack.c.h.b16 %v1120
    %v1379 = vunpack.c.l.b16 %v1121
    %v1380 = vunpack.c.h.b16 %v1121
    %v1381 = vunpack.c.l.b16 %v1122
    %v1382 = vunpack.c.h.b16 %v1122
    %v1383 = vunpack.c.l.b16 %v1123
    %v1384 = vunpack.c.h.b16 %v1123
    %v1385 = vunpack.c.l.b16 %v1124
    %v1386 = vunpack.c.h.b16 %v1124
    %v1387 = vunpack.c.l.b16 %v1125
    %v1388 = vunpack.c.h.b16 %v1125
    %v1389 = vunpack.c.l.b16 %v1126
    %v1390 = vunpack.c.h.b16 %v1126
    %v1391 = vunpack.c.l.b16 %v1127
    %v1392 = vunpack.c.h.b16 %v1127
    %v1393 = vunpack.c.l.b16 %v1128
    %v1394 = vunpack.c.h.b16 %v1128
    %v1395 = vunpack.c.l.b16 %v1129
    %v1396 = vunpack.c.h.b16 %v1129
    %v1397 = vunpack.c.l.b16 %v1130
    %v1398 = vunpack.c.h.b16 %v1130
    %v1399 = vunpack.c.l.b16 %v1131
    %v1400 = vunpack.c.h.b16 %v1131
    %v1401 = vunpack.c.l.b16 %v1132
    %v1402 = vunpack.c.h.b16 %v1132
    %v1403 = vunpack.c.l.b16 %v1133
    %v1404 = vunpack.c.h.b16 %v1133
    %v1405 = vunpack.c.l.b16 %v1134
    %v1406 = vunpack.c.h.b16 %v1134
    %v1407 = vunpack.c.l.b16 %v1135
    %v1408 = vunpack.c.h.b16 %v1135
    %v1409 = vunpack.c.l.b16 %v1136
    %v1410 = vunpack.c.h.b16 %v1136
    %v1411 = vunpack.c.l.b16 %v1137
    %v1412 = vunpack.c.h.b16 %v1137
    %v1413 = vunpack.c.l.b16 %v1138
    %v1414 = vunpack.c.h.b16 %v1138
    %v1415 = vunpack.c.l.b16 %v1139
    %v1416 = vunpack.c.h.b16 %v1139
    %v1417 = vunpack.c.l.b16 %v1140
    %v1418 = vunpack.c.h.b16 %v1140
    %v1419 = vunpack.c.l.b16 %v1141
    %v1420 = vunpack.c.h.b16 %v1141
    %v1421 = vunpack.c.l.b16 %v1142
    %v1422 = vunpack.c.h.b16 %v1142
    %v1423 = vunpack.c.l.b16 %v1143
    %v1424 = vunpack.c.h.b16 %v1143
    %v1425 = vunpack.c.l.b16 %v1144
    %v1426 = vunpack.c.h.b16 %v1144
    %v1427 = vunpack.c.l.b16 %v1145
    %v1428 = vunpack.c.h.b16 %v1145
    %v1429 = vunpack.c.l.b16 %v1146
    %v1430 = vunpack.c.h.b16 %v1146
    %v1431 = vunpack.c.l.b16 %v1147
    %v1432 = vunpack.c.h.b16 %v1147
    %v1433 = vunpack.c.l.b16 %v1148
    %v1434 = vunpack.c.h.b16 %v1148
    %v1435 = vunpack.c.l.b16 %v1149
    %v1436 = vunpack.c.h.b16 %v1149
    %v1437 = vunpack.c.l.b16 %v1150
    %v1438 = vunpack.c.h.b16 %v1150
    %v1439 = vunpack.c.l.b16 %v1151
    %v1440 = vunpack.c.h.b16 %v1151
    %v1441 = vunpack.c.l.b16 %v1152
    %v1442 = vunpack.c.h.b16 %v1152
    %v1443 = vunpack.c.l.b16 %v1153
    %v1444 = vunpack.c.h.b16 %v1153
    %v1445 = vunpack.c.l.b16 %v1154
    %v1446 = vunpack.c.h.b16 %v1154
    %v1447 = vunpack.c.l.b16 %v1155
    %v1448 = vunpack.c.h.b16 %v1155
    %v1449 = vunpack.c.l.b16 %v1156
    %v1450 = vunpack.c.h.b16 %v1156
    %v1451 = vunpack.c.l.b16 %v1157
    %v1452 = vunpack.c.h.b16 %v1157
    %v1453 = vunpack.c.l.b16 %v1158
    %v1454 = vunpack.c.h.b16 %v1158
    %v1455 = vunpack.c.l.b16 %v1159
    %v1456 = vunpack.c.h.b16 %v1159
    %v1457 = vunpack.c.l.b16 %v1160
    %v1458 = vunpack.c.h.b16 %v1160
    %v1459 = vunpack.c.l.b16 %v1161
    %v1460 = vunpack.c.h.b16 %v1161
    %v1461 = vunpack.c.l.b16 %v1162
    %v1462 = vunpack.c.h.b16 %v1162
    %v1463 = vunpack.c.l.b16 %v1163
    %v1464 = vunpack.c.h.b16 %v1163
    %v1465 = vunpack.c.l.b16 %v1164
    %v1466 = vunpack.c.h.b16 %v1164
    %v1467 = vunpack.c.l.b16 %v1165
    %v1468 = vunpack.c.h.b16 %v1165
    %v1469 = vunpack.c.l.b16 %v1166
    %v1470 = vunpack.c.h.b16 %v1166
    %v1471 = vunpack.c.l.b16 %v1167
    %v1472 = vunpack.c.h.b16 %v1167
    %v1473 = vunpack.c.l.b16 %v1168
    %v1474 = vunpack.c.h.b16 %v1168
    %v1475 = vunpack.c.l.b16 %v1169
    %v1476 = vunpack.c.h.b16 %v1169
    %v1477 = vunpack.c.l.b16 %v1170
    %v1478 = vunpack.c.h.b16 %v1170
    %v1479 = vunpack.c.l.b16 %v1171
    %v1480 = vunpack.c.h.b16 %v1171
    %v1481 = vunpack.c.l.b16 %v1172
    %v1482 = vunpack.c.h.b16 %v1172
    %v1483 = vpack.c.b16 %v1295, %v1291
    %v1484 = vpack.c.b16 %v1296, %v1292
    %v1485 = vpack.c.b16 %v1297, %v1293
    %v1486 = vpack.c.b16 %v1298, %v1294
    %v1487 = vpack.c.b16 %v1303, %v1299
    %v1488 = vpack.c.b16 %v1304, %v1300
    %v1489 = vpack.c.b16 %v1305, %v1301
    %v1490 = vpack.c.b16 %v1306, %v1302
    %v1491 = vpack.c.b16 %v1311, %v1307
    %v1492 = vpack.c.b16 %v1312, %v1308
    %v1493 = vpack.c.b16 %v1313, %v1309
    %v1494 = vpack.c.b16 %v1314, %v1310
    %v1495 = vpack.c.b16 %v1319, %v1315
    %v1496 = vpack.c.b16 %v1320, %v1316
    %v1497 = vpack.c.b16 %v1321, %v1317
    %v1498 = vpack.c.b16 %v1322, %v1318
    %v1499 = vpack.c.b16 %v1327, %v1323
    %v1500 = vpack.c.b16 %v1328, %v1324
    %v1501 = vpack.c.b16 %v1329, %v1325
    %v1502 = vpack.c.b16 %v1330, %v1326
    %v1503 = vpack.c.b16 %v1335, %v1331
    %v1504 = vpack.c.b16 %v1336, %v1332
    %v1505 = vpack.c.b16 %v1337, %v1333
    %v1506 = vpack.c.b16 %v1338, %v1334
    %v1507 = vpack.c.b16 %v1343, %v1339
    %v1508 = vpack.c.b16 %v1344, %v1340
    %v1509 = vpack.c.b16 %v1345, %v1341
    %v1510 = vpack.c.b16 %v1346, %v1342
    %v1511 = vpack.c.b16 %v1351, %v1347
    %v1512 = vpack.c.b16 %v1352, %v1348
    %v1513 = vpack.c.b16 %v1353, %v1349
    %v1514 = vpack.c.b16 %v1354, %v1350
    %v1515 = vpack.c.b16 %v1359, %v1355
    %v1516 = vpack.c.b16 %v1360, %v1356
    %v1517 = vpack.c.b16 %v1361, %v1357
    %v1518 = vpack.c.b16 %v1362, %v1358
    %v1519 = vpack.c.b16 %v1367, %v1363
    %v1520 = vpack.c.b16 %v1368, %v1364
    %v1521 = vpack.c.b16 %v1369, %v1365
    %v1522 = vpack.c.b16 %v1370, %v1366
    %v1523 = vpack.c.b16 %v1375, %v1371
    %v1524 = vpack.c.b16 %v1376, %v1372
    %v1525 = vpack.c.b16 %v1377, %v1373
    %v1526 = vpack.c.b16 %v1378, %v1374
    %v1527 = vpack.c.b16 %v1383, %v1379
    %v1528 = vpack.c.b16 %v1384, %v1380
    %v1529 = vpack.c.b16 %v1385, %v1381
    %v1530 = vpack.c.b16 %v1386, %v1382
    %v1531 = vpack.c.b16 %v1391, %v1387
    %v1532 = vpack.c.b16 %v1392, %v1388
    %v1533 = vpack.c.b16 %v1393, %v1389
    %v1534 = vpack.c.b16 %v1394, %v1390
    %v1535 = vpack.c.b16 %v1399, %v1395
    %v1536 = vpack.c.b16 %v1400, %v1396
    %v1537 = vpack.c.b16 %v1401, %v1397
    %v1538 = vpack.c.b16 %v1402, %v1398
    %v1539 = vpack.c.b16 %v1407, %v1403
    %v1540 = vpack.c.b16 %v1408, %v1404
    %v1541 = vpack.c.b16 %v1409, %v1405
    %v1542 = vpack.c.b16 %v1410, %v1406
    %v1543 = vpack.c.b16 %v1415, %v1411
    %v1544 = vpack.c.b16 %v1416, %v1412
    %v1545 = vpack.c.b16 %v1417, %v1413
    %v1546 = vpack.c.b16 %v1418, %v1414
    %v1547 = vpack.c.b16 %v1423, %v1419
    %v1548 = vpack.c.b16 %v1424, %v1420
    %v1549 = vpack.c.b16 %v1425, %v1421
    %v1550 = vpack.c.b16 %v1426, %v1422
    %v1551 = vpack.c.b16 %v1431, %v1427
    %v1552 = vpack.c.b16 %v1432, %v1428
    %v1553 = vpack.c.b16 %v1433, %v1429
    %v1554 = vpack.c.b16 %v1434, %v1430
    %v1555 = vpack.c.b16 %v1439, %v1435
    %v1556 = vpack.c.b16 %v1440, %v1436
    %v1557 = vpack.c.b16 %v1441, %v1437
    %v1558 = vpack.c.b16 %v1442, %v1438
    %v1559 = vpack.c.b16 %v1447, %v1443
    %v1560 = vpack.c.b16 %v1448, %v1444
    %v1561 = vpack.c.b16 %v1449, %v1445
    %v1562 = vpack.c.b16 %v1450, %v1446
    %v1563 = vpack.c.b16 %v1455, %v1451
    %v1564 = vpack.c.b16 %v1456, %v1452
    %v1565 = vpack.c.b16 %v1457, %v1453
    %v1566 = vpack.c.b16 %v1458, %v1454
    %v1567 = vpack.c.b16 %v1463, %v1459
    %v1568 = vpack.c.b16 %v1464, %v1460
    %v1569 = vpack.c.b16 %v1465, %v1461
    %v1570 = vpack.c.b16 %v1466, %v1462
    %v1571 = vpack.c.b16 %v1471, %v1467
    %v1572 = vpack.c.b16 %v1472, %v1468
    %v1573 = vpack.c.b16 %v1473, %v1469
    %v1574 = vpack.c.b16 %v1474, %v1470
    %v1575 = vpack.c.b16 %v1479, %v1475
    %v1576 = vpack.c.b16 %v1480, %v1476
    %v1577 = vpack.c.b16 %v1481, %v1477
    %v1578 = vpack.c.b16 %v1482, %v1478
    %1675 = vmatprep.subr.bf16.mxu0 %v1484
    %1676 = vmatpush1.bf16.msra.mxu0 %v1483
    %1677 = vmatprep.subr.bf16.mxu0 %v1488
    %1678 = vmatpush1.bf16.msra.mxu0 %v1487
    %1679 = vmatprep.subr.bf16.mxu0 %v1492
    %1680 = vmatpush1.bf16.msra.mxu0 %v1491
    %1681 = vmatprep.subr.bf16.mxu0 %v1496
    %1682 = vmatpush1.bf16.msra.mxu0 %v1495
    %1683 = vmatprep.subr.bf16.mxu0 %v1500
    %1684 = vmatpush1.bf16.msra.mxu0 %v1499
    %1685 = vmatprep.subr.bf16.mxu0 %v1504
    %1686 = vmatpush1.bf16.msra.mxu0 %v1503
    %1687 = vmatprep.subr.bf16.mxu0 %v1508
    %1688 = vmatpush1.bf16.msra.mxu0 %v1507
    %1689 = vmatprep.subr.bf16.mxu0 %v1512
    %1690 = vmatpush1.bf16.msra.mxu0 %v1511
    %1691 = vmatprep.subr.bf16.mxu0 %v1516
    %1692 = vmatpush1.bf16.msra.mxu0 %v1515
    %1693 = vmatprep.subr.bf16.mxu0 %v1520
    %1694 = vmatpush1.bf16.msra.mxu0 %v1519
    %1695 = vmatprep.subr.bf16.mxu0 %v1524
    %1696 = vmatpush1.bf16.msra.mxu0 %v1523
    %1697 = vmatprep.subr.bf16.mxu0 %v1528
    %1698 = vmatpush1.bf16.msra.mxu0 %v1527
    %1699 = vmatprep.subr.bf16.mxu0 %v1532
    %1700 = vmatpush1.bf16.msra.mxu0 %v1531
    %1701 = vmatprep.subr.bf16.mxu0 %v1536
    %1702 = vmatpush1.bf16.msra.mxu0 %v1535
    %1703 = vmatprep.subr.bf16.mxu0 %v1540
    %1704 = vmatpush1.bf16.msra.mxu0 %v1539
    %1705 = vmatprep.subr.bf16.mxu0 %v1544
    %1706 = vmatpush1.bf16.msra.mxu0 %v1543
    %1707 = vmatprep.mubr.bf16.mxu0 %v101
    %1708 = vmatmul.mubr.bf16.gmra.mrb[0].mxu0 %v100
    %v1709 = vpop.f32.mrb[0].mxu0
    %v1710 = vadd.f32 %v1178, %v1709
    %v1711 = vpop.f32.mrb[0].mxu0
    %v1712 = vadd.f32 %v1182, %v1711
    %v1713 = vpop.f32.mrb[0].mxu0
    %v1714 = vadd.f32 %v1178, %v1713
    %v1715 = vpop.f32.mrb[0].mxu0
    %v1716 = vadd.f32 %v1182, %v1715
    %1717 = vdwg.mxu0
    %1718 = vmatprep.subr.bf16.mxu0 %v1548
    %1719 = vmatpush1.bf16.msra.mxu0 %v1547
    %1720 = vmatprep.subr.bf16.mxu0 %v1552
    %1721 = vmatpush1.bf16.msra.mxu0 %v1551
    %1722 = vmatprep.subr.bf16.mxu0 %v1556
    %1723 = vmatpush1.bf16.msra.mxu0 %v1555
    %1724 = vmatprep.subr.bf16.mxu0 %v1560
    %1725 = vmatpush1.bf16.msra.mxu0 %v1559
    %1726 = vmatprep.subr.bf16.mxu0 %v1564
    %1727 = vmatpush1.bf16.msra.mxu0 %v1563
    %1728 = vmatprep.subr.bf16.mxu0 %v1568
    %1729 = vmatpush1.bf16.msra.mxu0 %v1567
    %1730 = vmatprep.subr.bf16.mxu0 %v1572
    %1731 = vmatpush1.bf16.msra.mxu0 %v1571
    %1732 = vmatprep.subr.bf16.mxu0 %v1576
    %1733 = vmatpush1.bf16.msra.mxu0 %v1575
    %1734 = vmatprep.subr.bf16.mxu0 0
    %1735 = vmatpush1.bf16.msra.mxu0 0
    %1736 = vmatprep.subr.bf16.mxu0 0
    %1737 = vmatpush1.bf16.msra.mxu0 0
    %1738 = vmatprep.subr.bf16.mxu0 0
    %1739 = vmatpush1.bf16.msra.mxu0 0
    %1740 = vmatprep.subr.bf16.mxu0 0
    %1741 = vmatpush1.bf16.msra.mxu0 0
    %1742 = vmatprep.subr.bf16.mxu0 0
    %1743 = vmatpush1.bf16.msra.mxu0 0
    %1744 = vmatprep.subr.bf16.mxu0 0
    %1745 = vmatpush1.bf16.msra.mxu0 0
    %1746 = vmatprep.subr.bf16.mxu0 0
    %1747 = vmatpush1.bf16.msra.mxu0 0
    %1748 = vmatprep.subr.bf16.mxu0 0
    %1749 = vmatpush1.bf16.msra.mxu0 0
    %1750 = vmatprep.mubr.bf16.mxu0 0
    %1751 = vmatmul.mubr.bf16.gmra.mrb[0].mxu0 %v102
    %v1752 = vpop.f32.mrb[0].mxu0
    %v1753 = vadd.f32 %v1710, %v1752
    %v1754 = vpop.f32.mrb[0].mxu0
    %v1755 = vadd.f32 %v1712, %v1754
    %v1756 = vpop.f32.mrb[0].mxu0
    %v1757 = vadd.f32 %v1714, %v1756
    %v1758 = vpop.f32.mrb[0].mxu0
    %v1759 = vadd.f32 %v1716, %v1758
    %1760 = vdwg.mxu0
    %1761 = vmatprep.subr.bf16.mxu0 %v1486
    %1762 = vmatpush1.bf16.msra.mxu0 %v1485
    %1763 = vmatprep.subr.bf16.mxu0 %v1490
    %1764 = vmatpush1.bf16.msra.mxu0 %v1489
    %1765 = vmatprep.subr.bf16.mxu0 %v1494
    %1766 = vmatpush1.bf16.msra.mxu0 %v1493
    %1767 = vmatprep.subr.bf16.mxu0 %v1498
    %1768 = vmatpush1.bf16.msra.mxu0 %v1497
    %1769 = vmatprep.subr.bf16.mxu0 %v1502
    %1770 = vmatpush1.bf16.msra.mxu0 %v1501
    %1771 = vmatprep.subr.bf16.mxu0 %v1506
    %1772 = vmatpush1.bf16.msra.mxu0 %v1505
    %1773 = vmatprep.subr.bf16.mxu0 %v1510
    %1774 = vmatpush1.bf16.msra.mxu0 %v1509
    %1775 = vmatprep.subr.bf16.mxu0 %v1514
    %1776 = vmatpush1.bf16.msra.mxu0 %v1513
    %1777 = vmatprep.subr.bf16.mxu0 %v1518
    %1778 = vmatpush1.bf16.msra.mxu0 %v1517
    %1779 = vmatprep.subr.bf16.mxu0 %v1522
    %1780 = vmatpush1.bf16.msra.mxu0 %v1521
    %1781 = vmatprep.subr.bf16.mxu0 %v1526
    %1782 = vmatpush1.bf16.msra.mxu0 %v1525
    %1783 = vmatprep.subr.bf16.mxu0 %v1530
    %1784 = vmatpush1.bf16.msra.mxu0 %v1529
    %1785 = vmatprep.subr.bf16.mxu0 %v1534
    %1786 = vmatpush1.bf16.msra.mxu0 %v1533
    %1787 = vmatprep.subr.bf16.mxu0 %v1538
    %1788 = vmatpush1.bf16.msra.mxu0 %v1537
    %1789 = vmatprep.subr.bf16.mxu0 %v1542
    %1790 = vmatpush1.bf16.msra.mxu0 %v1541
    %1791 = vmatprep.subr.bf16.mxu0 %v1546
    %1792 = vmatpush1.bf16.msra.mxu0 %v1545
    %1793 = vmatprep.mubr.bf16.mxu0 %v101
    %1794 = vmatmul.mubr.bf16.gmra.mrb[0].mxu0 %v100
    %v1795 = vpop.f32.mrb[0].mxu0
    %v1796 = vadd.f32 %v1186, %v1795
    %v1797 = vpop.f32.mrb[0].mxu0
    %v1798 = vadd.f32 %v1190, %v1797
    %v1799 = vpop.f32.mrb[0].mxu0
    %v1800 = vadd.f32 %v1186, %v1799
    %v1801 = vpop.f32.mrb[0].mxu0
    %v1802 = vadd.f32 %v1190, %v1801
    %1803 = vdwg.mxu0
    %1804 = vmatprep.subr.bf16.mxu0 %v1550
    %1805 = vmatpush1.bf16.msra.mxu0 %v1549
    %1806 = vmatprep.subr.bf16.mxu0 %v1554
    %1807 = vmatpush1.bf16.msra.mxu0 %v1553
    %1808 = vmatprep.subr.bf16.mxu0 %v1558
    %1809 = vmatpush1.bf16.msra.mxu0 %v1557
    %1810 = vmatprep.subr.bf16.mxu0 %v1562
    %1811 = vmatpush1.bf16.msra.mxu0 %v1561
    %1812 = vmatprep.subr.bf16.mxu0 %v1566
    %1813 = vmatpush1.bf16.msra.mxu0 %v1565
    %1814 = vmatprep.subr.bf16.mxu0 %v1570
    %1815 = vmatpush1.bf16.msra.mxu0 %v1569
    %1816 = vmatprep.subr.bf16.mxu0 %v1574
    %1817 = vmatpush1.bf16.msra.mxu0 %v1573
    %1818 = vmatprep.subr.bf16.mxu0 %v1578
    %1819 = vmatpush1.bf16.msra.mxu0 %v1577
    %1820 = vmatprep.subr.bf16.mxu0 0
    %1821 = vmatpush1.bf16.msra.mxu0 0
    %1822 = vmatprep.subr.bf16.mxu0 0
    %1823 = vmatpush1.bf16.msra.mxu0 0
    %1824 = vmatprep.subr.bf16.mxu0 0
    %1825 = vmatpush1.bf16.msra.mxu0 0
    %1826 = vmatprep.subr.bf16.mxu0 0
    %1827 = vmatpush1.bf16.msra.mxu0 0
    %1828 = vmatprep.subr.bf16.mxu0 0
    %1829 = vmatpush1.bf16.msra.mxu0 0
    %1830 = vmatprep.subr.bf16.mxu0 0
    %1831 = vmatpush1.bf16.msra.mxu0 0
    %1832 = vmatprep.subr.bf16.mxu0 0
    %1833 = vmatpush1.bf16.msra.mxu0 0
    %1834 = vmatprep.subr.bf16.mxu0 0
    %1835 = vmatpush1.bf16.msra.mxu0 0
    %1836 = vmatprep.mubr.bf16.mxu0 0
    %1837 = vmatmul.mubr.bf16.gmra.mrb[0].mxu0 %v102
    %v1838 = vpop.f32.mrb[0].mxu0
    %v1839 = vadd.f32 %v1796, %v1838
    %v1840 = vpop.f32.mrb[0].mxu0
    %v1841 = vadd.f32 %v1798, %v1840
    %v1842 = vpop.f32.mrb[0].mxu0
    %v1843 = vadd.f32 %v1800, %v1842
    %v1844 = vpop.f32.mrb[0].mxu0
    %v1845 = vadd.f32 %v1802, %v1844
    %1846 = vdwg.mxu0
    %v1847 = vmul.f32 %v1753, 0.044715
    %v1848 = vmul.f32 %v1755, 0.044715
    %v1849 = vmul.f32 %v1839, 0.044715
    %v1850 = vmul.f32 %v1841, 0.044715
    %v1851 = vmul.f32 %v1757, 0.044715
    %v1852 = vmul.f32 %v1759, 0.044715
    %v1853 = vmul.f32 %v1843, 0.044715
    %v1854 = vmul.f32 %v1845, 0.044715
    %v1855 = vmul.f32 %v1847, %v1753
    %v1856 = vmul.f32 %v1848, %v1755
    %v1857 = vmul.f32 %v1849, %v1839
    %v1858 = vmul.f32 %v1850, %v1841
    %v1859 = vmul.f32 %v1851, %v1757
    %v1860 = vmul.f32 %v1852, %v1759
    %v1861 = vmul.f32 %v1853, %v1843
    %v1862 = vmul.f32 %v1854, %v1845
    %v1863 = vmul.f32 %v1855, %v1753
    %v1864 = vmul.f32 %v1856, %v1755
    %v1865 = vmul.f32 %v1857, %v1839
    %v1866 = vmul.f32 %v1858, %v1841
    %v1867 = vmul.f32 %v1859, %v1757
    %v1868 = vmul.f32 %v1860, %v1759
    %v1869 = vmul.f32 %v1861, %v1843
    %v1870 = vmul.f32 %v1862, %v1845
    %v1871 = vadd.f32 %v1753, %v1863
    %v1872 = vadd.f32 %v1755, %v1864
    %v1873 = vadd.f32 %v1839, %v1865
    %v1874 = vadd.f32 %v1841, %v1866
    %v1875 = vadd.f32 %v1757, %v1867
    %v1876 = vadd.f32 %v1759, %v1868
    %v1877 = vadd.f32 %v1843, %v1869
    %v1878 = vadd.f32 %v1845, %v1870
    %v1879 = vmul.f32 %v1871, 0.7978846
    %v1880 = vmul.f32 %v1872, 0.7978846
    %v1881 = vmul.f32 %v1873, 0.7978846
    %v1882 = vmul.f32 %v1874, 0.7978846
    %v1883 = vmul.f32 %v1875, 0.7978846
    %v1884 = vmul.f32 %v1876, 0.7978846
    %v1885 = vmul.f32 %v1877, 0.7978846
    %v1886 = vmul.f32 %v1878, 0.7978846
    %v1887 = vtanh.pop %v1879
    %v1888 = vtanh.pop %v1880
    %v1889 = vtanh.pop %v1881
    %v1890 = vtanh.pop %v1882
    %v1891 = vtanh.pop %v1883
    %v1892 = vtanh.pop %v1884
    %v1893 = vtanh.pop %v1885
    %v1894 = vtanh.pop %v1886
    %v1895 = vadd.f32 %v1887, 1.0
    %v1896 = vadd.f32 %v1888, 1.0
    %v1897 = vadd.f32 %v1889, 1.0
    %v1898 = vadd.f32 %v1890, 1.0
    %v1899 = vadd.f32 %v1891, 1.0
    %v1900 = vadd.f32 %v1892, 1.0
    %v1901 = vadd.f32 %v1893, 1.0
    %v1902 = vadd.f32 %v1894, 1.0
    %v1903 = vmul.f32 %v1895, 0.5
    %v1904 = vmul.f32 %v1896, 0.5
    %v1905 = vmul.f32 %v1897, 0.5
    %v1906 = vmul.f32 %v1898, 0.5
    %v1907 = vmul.f32 %v1899, 0.5
    %v1908 = vmul.f32 %v1900, 0.5
    %v1909 = vmul.f32 %v1901, 0.5
    %v1910 = vmul.f32 %v1902, 0.5
    %v1911 = vmul.f32 %v1753, %v1903
    %v1912 = vmul.f32 %v1755, %v1904
    %v1913 = vmul.f32 %v1839, %v1905
    %v1914 = vmul.f32 %v1841, %v1906
    %v1915 = vmul.f32 %v1757, %v1907
    %v1916 = vmul.f32 %v1759, %v1908
    %v1917 = vmul.f32 %v1843, %v1909
    %v1918 = vmul.f32 %v1845, %v1910
    %v1919 = vpack.c.bf16 %v1915, %v1911
    %v1920 = vpack.c.bf16 %v1916, %v1912
    %v1921 = vpack.c.bf16 %v1917, %v1913
    %v1922 = vpack.c.bf16 %v1918, %v1914
    %v1923 = vld [vmem:[#allocation10 + $0x300] sm:$0xff]
    %v1924 = vld [vmem:[#allocation10 + $0x308] sm:$0xf]
    %v1925 = vld [vmem:[#allocation10 + $0x30c] sm:$0xff]
    %v1926 = vld [vmem:[#allocation10 + $0x314] sm:$0xf]
    %v1927 = vld [vmem:[#allocation10 + $0x318] sm:$0xff]
    %v1928 = vld [vmem:[#allocation10 + $0x320] sm:$0xf]
    %v1929 = vld [vmem:[#allocation10 + $0x324] sm:$0xff]
    %v1930 = vld [vmem:[#allocation10 + $0x32c] sm:$0xf]
    %v1931 = vld [vmem:[#allocation10 + $0x330] sm:$0xff]
    %v1932 = vld [vmem:[#allocation10 + $0x338] sm:$0xf]
    %v1933 = vld [vmem:[#allocation10 + $0x33c] sm:$0xff]
    %v1934 = vld [vmem:[#allocation10 + $0x344] sm:$0xf]
    %v1935 = vld [vmem:[#allocation10 + $0x348] sm:$0xff]
    %v1936 = vld [vmem:[#allocation10 + $0x350] sm:$0xf]
    %v1937 = vld [vmem:[#allocation10 + $0x354] sm:$0xff]
    %v1938 = vld [vmem:[#allocation10 + $0x35c] sm:$0xf]
    %v1939 = vld [vmem:[#allocation10 + $0x360] sm:$0xff]
    %v1940 = vld [vmem:[#allocation10 + $0x368] sm:$0xf]
    %v1941 = vld [vmem:[#allocation10 + $0x36c] sm:$0xff]
    %v1942 = vld [vmem:[#allocation10 + $0x374] sm:$0xf]
    %v1943 = vld [vmem:[#allocation10 + $0x378] sm:$0xff]
    %v1944 = vld [vmem:[#allocation10 + $0x380] sm:$0xf]
    %v1945 = vld [vmem:[#allocation10 + $0x384] sm:$0xff]
    %v1946 = vld [vmem:[#allocation10 + $0x38c] sm:$0xf]
    %v1947 = vld [vmem:[#allocation10 + $0x390] sm:$0xff]
    %v1948 = vld [vmem:[#allocation10 + $0x398] sm:$0xf]
    %v1949 = vld [vmem:[#allocation10 + $0x39c] sm:$0xff]
    %v1950 = vld [vmem:[#allocation10 + $0x3a4] sm:$0xf]
    %v1951 = vld [vmem:[#allocation10 + $0x3a8] sm:$0xff]
    %v1952 = vld [vmem:[#allocation10 + $0x3b0] sm:$0xf]
    %v1953 = vld [vmem:[#allocation10 + $0x3b4] sm:$0xff]
    %v1954 = vld [vmem:[#allocation10 + $0x3bc] sm:$0xf]
    %v1955 = vld [vmem:[#allocation10 + $0x3c0] sm:$0xff]
    %v1956 = vld [vmem:[#allocation10 + $0x3c8] sm:$0xf]
    %v1957 = vld [vmem:[#allocation10 + $0x3cc] sm:$0xff]
    %v1958 = vld [vmem:[#allocation10 + $0x3d4] sm:$0xf]
    %v1959 = vld [vmem:[#allocation10 + $0x3d8] sm:$0xff]
    %v1960 = vld [vmem:[#allocation10 + $0x3e0] sm:$0xf]
    %v1961 = vld [vmem:[#allocation10 + $0x3e4] sm:$0xff]
    %v1962 = vld [vmem:[#allocation10 + $0x3ec] sm:$0xf]
    %v1963 = vld [vmem:[#allocation10 + $0x3f0] sm:$0xff]
    %v1964 = vld [vmem:[#allocation10 + $0x3f8] sm:$0xf]
    %v1965 = vld [vmem:[#allocation10 + $0x3fc] sm:$0xff]
    %v1966 = vld [vmem:[#allocation10 + $0x404] sm:$0xf]
    %v1967 = vld [vmem:[#allocation10 + $0x408] sm:$0xff]
    %v1968 = vld [vmem:[#allocation10 + $0x410] sm:$0xf]
    %v1969 = vld [vmem:[#allocation10 + $0x414] sm:$0xff]
    %v1970 = vld [vmem:[#allocation10 + $0x41c] sm:$0xf]
    %v1971 = vld [vmem:[#allocation10 + $0x420] sm:$0xff]
    %v1972 = vld [vmem:[#allocation10 + $0x428] sm:$0xf]
    %v1973 = vld [vmem:[#allocation10 + $0x42c] sm:$0xff]
    %v1974 = vld [vmem:[#allocation10 + $0x434] sm:$0xf]
    %v1975 = vld [vmem:[#allocation10 + $0x438] sm:$0xff]
    %v1976 = vld [vmem:[#allocation10 + $0x440] sm:$0xf]
    %v1977 = vld [vmem:[#allocation10 + $0x444] sm:$0xff]
    %v1978 = vld [vmem:[#allocation10 + $0x44c] sm:$0xf]
    %v1979 = vld [vmem:[#allocation10 + $0x450] sm:$0xff]
    %v1980 = vld [vmem:[#allocation10 + $0x458] sm:$0xf]
    %v1981 = vld [vmem:[#allocation10 + $0x45c] sm:$0xff]
    %v1982 = vld [vmem:[#allocation10 + $0x464] sm:$0xf]
    %v1983 = vld [vmem:[#allocation10 + $0x468] sm:$0xff]
    %v1984 = vld [vmem:[#allocation10 + $0x470] sm:$0xf]
    %v1985 = vld [vmem:[#allocation10 + $0x474] sm:$0xff]
    %v1986 = vld [vmem:[#allocation10 + $0x47c] sm:$0xf]
    %v1987 = vld [vmem:[#allocation10 + $0x480] sm:$0xff]
    %v1988 = vld [vmem:[#allocation10 + $0x488] sm:$0xf]
    %v1989 = vld [vmem:[#allocation10 + $0x48c] sm:$0xff]
    %v1990 = vld [vmem:[#allocation10 + $0x494] sm:$0xf]
    %v1991 = vld [vmem:[#allocation10 + $0x498] sm:$0xff]
    %v1992 = vld [vmem:[#allocation10 + $0x4a0] sm:$0xf]
    %v1993 = vld [vmem:[#allocation10 + $0x4a4] sm:$0xff]
    %v1994 = vld [vmem:[#allocation10 + $0x4ac] sm:$0xf]
    %v1995 = vld [vmem:[#allocation10 + $0x4b0] sm:$0xff]
    %v1996 = vld [vmem:[#allocation10 + $0x4b8] sm:$0xf]
    %v1997 = vld [vmem:[#allocation10 + $0x4bc] sm:$0xff]
    %v1998 = vld [vmem:[#allocation10 + $0x4c4] sm:$0xf]
    %v1999 = vld [vmem:[#allocation10 + $0x4c8] sm:$0xff]
    %v2000 = vld [vmem:[#allocation10 + $0x4d0] sm:$0xf]
    %v2001 = vld [vmem:[#allocation10 + $0x4d4] sm:$0xff]
    %v2002 = vld [vmem:[#allocation10 + $0x4dc] sm:$0xf]
    %v2003 = vld [vmem:[#allocation10 + $0x4e0] sm:$0xff]
    %v2004 = vld [vmem:[#allocation10 + $0x4e8] sm:$0xf]
    %v2005 = vld [vmem:[#allocation10 + $0x4ec] sm:$0xff]
    %v2006 = vld [vmem:[#allocation10 + $0x4f4] sm:$0xf]
    %v2007 = vld [vmem:[#allocation10 + $0x4f8] sm:$0xff]
    %v2008 = vld [vmem:[#allocation10 + $0x500] sm:$0xf]
    %v2009 = vld [vmem:[#allocation10 + $0x504] sm:$0xff]
    %v2010 = vld [vmem:[#allocation10 + $0x50c] sm:$0xf]
    %v2011 = vld [vmem:[#allocation10 + $0x510] sm:$0xff]
    %v2012 = vld [vmem:[#allocation10 + $0x518] sm:$0xf]
    %v2013 = vld [vmem:[#allocation10 + $0x51c] sm:$0xff]
    %v2014 = vld [vmem:[#allocation10 + $0x524] sm:$0xf]
    %v2015 = vld [vmem:[#allocation10 + $0x528] sm:$0xff]
    %v2016 = vld [vmem:[#allocation10 + $0x530] sm:$0xf]
    %v2017 = vld [vmem:[#allocation10 + $0x534] sm:$0xff]
    %v2018 = vld [vmem:[#allocation10 + $0x53c] sm:$0xf]
    %v2019 = vld [vmem:[#allocation10 + $0x540] sm:$0xff]
    %v2020 = vld [vmem:[#allocation10 + $0x548] sm:$0xf]
    %v2021 = vld [vmem:[#allocation10 + $0x54c] sm:$0xff]
    %v2022 = vld [vmem:[#allocation10 + $0x554] sm:$0xf]
    %v2023 = vld [vmem:[#allocation10 + $0x558] sm:$0xff]
    %v2024 = vld [vmem:[#allocation10 + $0x560] sm:$0xf]
    %v2025 = vld [vmem:[#allocation10 + $0x564] sm:$0xff]
    %v2026 = vld [vmem:[#allocation10 + $0x56c] sm:$0xf]
    %v2027 = vld [vmem:[#allocation10 + $0x570] sm:$0xff]
    %v2028 = vld [vmem:[#allocation10 + $0x578] sm:$0xf]
    %v2029 = vld [vmem:[#allocation10 + $0x57c] sm:$0xff]
    %v2030 = vld [vmem:[#allocation10 + $0x584] sm:$0xf]
    %v2031 = vld [vmem:[#allocation10 + $0x588] sm:$0xff]
    %v2032 = vld [vmem:[#allocation10 + $0x590] sm:$0xf]
    %v2033 = vld [vmem:[#allocation10 + $0x594] sm:$0xff]
    %v2034 = vld [vmem:[#allocation10 + $0x59c] sm:$0xf]
    %v2035 = vld [vmem:[#allocation10 + $0x5a0] sm:$0xff]
    %v2036 = vld [vmem:[#allocation10 + $0x5a8] sm:$0xf]
    %v2037 = vld [vmem:[#allocation10 + $0x5ac] sm:$0xff]
    %v2038 = vld [vmem:[#allocation10 + $0x5b4] sm:$0xf]
    %v2039 = vld [vmem:[#allocation10 + $0x5b8] sm:$0xff]
    %v2040 = vld [vmem:[#allocation10 + $0x5c0] sm:$0xf]
    %v2041 = vld [vmem:[#allocation10 + $0x5c4] sm:$0xff]
    %v2042 = vld [vmem:[#allocation10 + $0x5cc] sm:$0xf]
    %v2043 = vld [vmem:[#allocation10 + $0x5d0] sm:$0xff]
    %v2044 = vld [vmem:[#allocation10 + $0x5d8] sm:$0xf]
    %v2045 = vld [vmem:[#allocation10 + $0x5dc] sm:$0xff]
    %v2046 = vld [vmem:[#allocation10 + $0x5e4] sm:$0xf]
    %v2047 = vld [vmem:[#allocation10 + $0x5e8] sm:$0xff]
    %v2048 = vld [vmem:[#allocation10 + $0x5f0] sm:$0xf]
    %v2049 = vld [vmem:[#allocation10 + $0x5f4] sm:$0xff]
    %v2050 = vld [vmem:[#allocation10 + $0x5fc] sm:$0xf]
    %v2179 = vunpack.c.l.b16 %v1923
    %v2180 = vunpack.c.h.b16 %v1923
    %v2181 = vunpack.c.l.b16 %v1924
    %v2182 = vunpack.c.l.b16 %v1925
    %v2183 = vunpack.c.h.b16 %v1925
    %v2184 = vunpack.c.l.b16 %v1926
    %v2185 = vunpack.c.l.b16 %v1927
    %v2186 = vunpack.c.h.b16 %v1927
    %v2187 = vunpack.c.l.b16 %v1928
    %v2188 = vunpack.c.l.b16 %v1929
    %v2189 = vunpack.c.h.b16 %v1929
    %v2190 = vunpack.c.l.b16 %v1930
    %v2191 = vunpack.c.l.b16 %v1931
    %v2192 = vunpack.c.h.b16 %v1931
    %v2193 = vunpack.c.l.b16 %v1932
    %v2194 = vunpack.c.l.b16 %v1933
    %v2195 = vunpack.c.h.b16 %v1933
    %v2196 = vunpack.c.l.b16 %v1934
    %v2197 = vunpack.c.l.b16 %v1935
    %v2198 = vunpack.c.h.b16 %v1935
    %v2199 = vunpack.c.l.b16 %v1936
    %v2200 = vunpack.c.l.b16 %v1937
    %v2201 = vunpack.c.h.b16 %v1937
    %v2202 = vunpack.c.l.b16 %v1938
    %v2203 = vunpack.c.l.b16 %v1939
    %v2204 = vunpack.c.h.b16 %v1939
    %v2205 = vunpack.c.l.b16 %v1940
    %v2206 = vunpack.c.l.b16 %v1941
    %v2207 = vunpack.c.h.b16 %v1941
    %v2208 = vunpack.c.l.b16 %v1942
    %v2209 = vunpack.c.l.b16 %v1943
    %v2210 = vunpack.c.h.b16 %v1943
    %v2211 = vunpack.c.l.b16 %v1944
    %v2212 = vunpack.c.l.b16 %v1945
    %v2213 = vunpack.c.h.b16 %v1945
    %v2214 = vunpack.c.l.b16 %v1946
    %v2215 = vunpack.c.l.b16 %v1947
    %v2216 = vunpack.c.h.b16 %v1947
    %v2217 = vunpack.c.l.b16 %v1948
    %v2218 = vunpack.c.l.b16 %v1949
    %v2219 = vunpack.c.h.b16 %v1949
    %v2220 = vunpack.c.l.b16 %v1950
    %v2221 = vunpack.c.l.b16 %v1951
    %v2222 = vunpack.c.h.b16 %v1951
    %v2223 = vunpack.c.l.b16 %v1952
    %v2224 = vunpack.c.l.b16 %v1953
    %v2225 = vunpack.c.h.b16 %v1953
    %v2226 = vunpack.c.l.b16 %v1954
    %v2227 = vunpack.c.l.b16 %v1955
    %v2228 = vunpack.c.h.b16 %v1955
    %v2229 = vunpack.c.l.b16 %v1956
    %v2230 = vunpack.c.l.b16 %v1957
    %v2231 = vunpack.c.h.b16 %v1957
    %v2232 = vunpack.c.l.b16 %v1958
    %v2233 = vunpack.c.l.b16 %v1959
    %v2234 = vunpack.c.h.b16 %v1959
    %v2235 = vunpack.c.l.b16 %v1960
    %v2236 = vunpack.c.l.b16 %v1961
    %v2237 = vunpack.c.h.b16 %v1961
    %v2238 = vunpack.c.l.b16 %v1962
    %v2239 = vunpack.c.l.b16 %v1963
    %v2240 = vunpack.c.h.b16 %v1963
    %v2241 = vunpack.c.l.b16 %v1964
    %v2242 = vunpack.c.l.b16 %v1965
    %v2243 = vunpack.c.h.b16 %v1965
    %v2244 = vunpack.c.l.b16 %v1966
    %v2245 = vunpack.c.l.b16 %v1967
    %v2246 = vunpack.c.h.b16 %v1967
    %v2247 = vunpack.c.l.b16 %v1968
    %v2248 = vunpack.c.l.b16 %v1969
    %v2249 = vunpack.c.h.b16 %v1969
    %v2250 = vunpack.c.l.b16 %v1970
    %v2251 = vunpack.c.l.b16 %v1971
    %v2252 = vunpack.c.h.b16 %v1971
    %v2253 = vunpack.c.l.b16 %v1972
    %v2254 = vunpack.c.l.b16 %v1973
    %v2255 = vunpack.c.h.b16 %v1973
    %v2256 = vunpack.c.l.b16 %v1974
    %v2257 = vunpack.c.l.b16 %v1975
    %v2258 = vunpack.c.h.b16 %v1975
    %v2259 = vunpack.c.l.b16 %v1976
    %v2260 = vunpack.c.l.b16 %v1977
    %v2261 = vunpack.c.h.b16 %v1977
    %v2262 = vunpack.c.l.b16 %v1978
    %v2263 = vunpack.c.l.b16 %v1979
    %v2264 = vunpack.c.h.b16 %v1979
    %v2265 = vunpack.c.l.b16 %v1980
    %v2266 = vunpack.c.l.b16 %v1981
    %v2267 = vunpack.c.h.b16 %v1981
    %v2268 = vunpack.c.l.b16 %v1982
    %v2269 = vunpack.c.l.b16 %v1983
    %v2270 = vunpack.c.h.b16 %v1983
    %v2271 = vunpack.c.l.b16 %v1984
    %v2272 = vunpack.c.l.b16 %v1985
    %v2273 = vunpack.c.h.b16 %v1985
    %v2274 = vunpack.c.l.b16 %v1986
    %v2275 = vunpack.c.l.b16 %v1987
    %v2276 = vunpack.c.h.b16 %v1987
    %v2277 = vunpack.c.l.b16 %v1988
    %v2278 = vunpack.c.l.b16 %v1989
    %v2279 = vunpack.c.h.b16 %v1989
    %v2280 = vunpack.c.l.b16 %v1990
    %v2281 = vunpack.c.l.b16 %v1991
    %v2282 = vunpack.c.h.b16 %v1991
    %v2283 = vunpack.c.l.b16 %v1992
    %v2284 = vunpack.c.l.b16 %v1993
    %v2285 = vunpack.c.h.b16 %v1993
    %v2286 = vunpack.c.l.b16 %v1994
    %v2287 = vunpack.c.l.b16 %v1995
    %v2288 = vunpack.c.h.b16 %v1995
    %v2289 = vunpack.c.l.b16 %v1996
    %v2290 = vunpack.c.l.b16 %v1997
    %v2291 = vunpack.c.h.b16 %v1997
    %v2292 = vunpack.c.l.b16 %v1998
    %v2293 = vunpack.c.l.b16 %v1999
    %v2294 = vunpack.c.h.b16 %v1999
    %v2295 = vunpack.c.l.b16 %v2000
    %v2296 = vunpack.c.l.b16 %v2001
    %v2297 = vunpack.c.h.b16 %v2001
    %v2298 = vunpack.c.l.b16 %v2002
    %v2299 = vunpack.c.l.b16 %v2003
    %v2300 = vunpack.c.h.b16 %v2003
    %v2301 = vunpack.c.l.b16 %v2004
    %v2302 = vunpack.c.l.b16 %v2005
    %v2303 = vunpack.c.h.b16 %v2005
    %v2304 = vunpack.c.l.b16 %v2006
    %v2305 = vunpack.c.l.b16 %v2007
    %v2306 = vunpack.c.h.b16 %v2007
    %v2307 = vunpack.c.l.b16 %v2008
    %v2308 = vunpack.c.l.b16 %v2009
    %v2309 = vunpack.c.h.b16 %v2009
    %v2310 = vunpack.c.l.b16 %v2010
    %v2311 = vunpack.c.l.b16 %v2011
    %v2312 = vunpack.c.h.b16 %v2011
    %v2313 = vunpack.c.l.b16 %v2012
    %v2314 = vunpack.c.l.b16 %v2013
    %v2315 = vunpack.c.h.b16 %v2013
    %v2316 = vunpack.c.l.b16 %v2014
    %v2317 = vunpack.c.l.b16 %v2015
    %v2318 = vunpack.c.h.b16 %v2015
    %v2319 = vunpack.c.l.b16 %v2016
    %v2320 = vunpack.c.l.b16 %v2017
    %v2321 = vunpack.c.h.b16 %v2017
    %v2322 = vunpack.c.l.b16 %v2018
    %v2323 = vunpack.c.l.b16 %v2019
    %v2324 = vunpack.c.h.b16 %v2019
    %v2325 = vunpack.c.l.b16 %v2020
    %v2326 = vunpack.c.l.b16 %v2021
    %v2327 = vunpack.c.h.b16 %v2021
    %v2328 = vunpack.c.l.b16 %v2022
    %v2329 = vunpack.c.l.b16 %v2023
    %v2330 = vunpack.c.h.b16 %v2023
    %v2331 = vunpack.c.l.b16 %v2024
    %v2332 = vunpack.c.l.b16 %v2025
    %v2333 = vunpack.c.h.b16 %v2025
    %v2334 = vunpack.c.l.b16 %v2026
    %v2335 = vunpack.c.l.b16 %v2027
    %v2336 = vunpack.c.h.b16 %v2027
    %v2337 = vunpack.c.l.b16 %v2028
    %v2338 = vunpack.c.l.b16 %v2029
    %v2339 = vunpack.c.h.b16 %v2029
    %v2340 = vunpack.c.l.b16 %v2030
    %v2341 = vunpack.c.l.b16 %v2031
    %v2342 = vunpack.c.h.b16 %v2031
    %v2343 = vunpack.c.l.b16 %v2032
    %v2344 = vunpack.c.l.b16 %v2033
    %v2345 = vunpack.c.h.b16 %v2033
    %v2346 = vunpack.c.l.b16 %v2034
    %v2347 = vunpack.c.l.b16 %v2035
    %v2348 = vunpack.c.h.b16 %v2035
    %v2349 = vunpack.c.l.b16 %v2036
    %v2350 = vunpack.c.l.b16 %v2037
    %v2351 = vunpack.c.h.b16 %v2037
    %v2352 = vunpack.c.l.b16 %v2038
    %v2353 = vunpack.c.l.b16 %v2039
    %v2354 = vunpack.c.h.b16 %v2039
    %v2355 = vunpack.c.l.b16 %v2040
    %v2356 = vunpack.c.l.b16 %v2041
    %v2357 = vunpack.c.h.b16 %v2041
    %v2358 = vunpack.c.l.b16 %v2042
    %v2359 = vunpack.c.l.b16 %v2043
    %v2360 = vunpack.c.h.b16 %v2043
    %v2361 = vunpack.c.l.b16 %v2044
    %v2362 = vunpack.c.l.b16 %v2045
    %v2363 = vunpack.c.h.b16 %v2045
    %v2364 = vunpack.c.l.b16 %v2046
    %v2365 = vunpack.c.l.b16 %v2047
    %v2366 = vunpack.c.h.b16 %v2047
    %v2367 = vunpack.c.l.b16 %v2048
    %v2368 = vunpack.c.l.b16 %v2049
    %v2369 = vunpack.c.h.b16 %v2049
    %v2370 = vunpack.c.l.b16 %v2050
    %v2371 = vpack.c.b16 %v2182, %v2179
    %v2372 = vpack.c.b16 %v2183, %v2180
    %v2373 = vpack.c.b16 %v2184, %v2181
    %v2374 = vpack.c.b16 %v2188, %v2185
    %v2375 = vpack.c.b16 %v2189, %v2186
    %v2376 = vpack.c.b16 %v2190, %v2187
    %v2377 = vpack.c.b16 %v2194, %v2191
    %v2378 = vpack.c.b16 %v2195, %v2192
    %v2379 = vpack.c.b16 %v2196, %v2193
    %v2380 = vpack.c.b16 %v2200, %v2197
    %v2381 = vpack.c.b16 %v2201, %v2198
    %v2382 = vpack.c.b16 %v2202, %v2199
    %v2383 = vpack.c.b16 %v2206, %v2203
    %v2384 = vpack.c.b16 %v2207, %v2204
    %v2385 = vpack.c.b16 %v2208, %v2205
    %v2386 = vpack.c.b16 %v2212, %v2209
    %v2387 = vpack.c.b16 %v2213, %v2210
    %v2388 = vpack.c.b16 %v2214, %v2211
    %v2389 = vpack.c.b16 %v2218, %v2215
    %v2390 = vpack.c.b16 %v2219, %v2216
    %v2391 = vpack.c.b16 %v2220, %v2217
    %v2392 = vpack.c.b16 %v2224, %v2221
    %v2393 = vpack.c.b16 %v2225, %v2222
    %v2394 = vpack.c.b16 %v2226, %v2223
    %v2395 = vpack.c.b16 %v2230, %v2227
    %v2396 = vpack.c.b16 %v2231, %v2228
    %v2397 = vpack.c.b16 %v2232, %v2229
    %v2398 = vpack.c.b16 %v2236, %v2233
    %v2399 = vpack.c.b16 %v2237, %v2234
    %v2400 = vpack.c.b16 %v2238, %v2235
    %v2401 = vpack.c.b16 %v2242, %v2239
    %v2402 = vpack.c.b16 %v2243, %v2240
    %v2403 = vpack.c.b16 %v2244, %v2241
    %v2404 = vpack.c.b16 %v2248, %v2245
    %v2405 = vpack.c.b16 %v2249, %v2246
    %v2406 = vpack.c.b16 %v2250, %v2247
    %v2407 = vpack.c.b16 %v2254, %v2251
    %v2408 = vpack.c.b16 %v2255, %v2252
    %v2409 = vpack.c.b16 %v2256, %v2253
    %v2410 = vpack.c.b16 %v2260, %v2257
    %v2411 = vpack.c.b16 %v2261, %v2258
    %v2412 = vpack.c.b16 %v2262, %v2259
    %v2413 = vpack.c.b16 %v2266, %v2263
    %v2414 = vpack.c.b16 %v2267, %v2264
    %v2415 = vpack.c.b16 %v2268, %v2265
    %v2416 = vpack.c.b16 %v2272, %v2269
    %v2417 = vpack.c.b16 %v2273, %v2270
    %v2418 = vpack.c.b16 %v2274, %v2271
    %v2419 = vpack.c.b16 %v2278, %v2275
    %v2420 = vpack.c.b16 %v2279, %v2276
    %v2421 = vpack.c.b16 %v2280, %v2277
    %v2422 = vpack.c.b16 %v2284, %v2281
    %v2423 = vpack.c.b16 %v2285, %v2282
    %v2424 = vpack.c.b16 %v2286, %v2283
    %v2425 = vpack.c.b16 %v2290, %v2287
    %v2426 = vpack.c.b16 %v2291, %v2288
    %v2427 = vpack.c.b16 %v2292, %v2289
    %v2428 = vpack.c.b16 %v2296, %v2293
    %v2429 = vpack.c.b16 %v2297, %v2294
    %v2430 = vpack.c.b16 %v2298, %v2295
    %v2431 = vpack.c.b16 %v2302, %v2299
    %v2432 = vpack.c.b16 %v2303, %v2300
    %v2433 = vpack.c.b16 %v2304, %v2301
    %v2434 = vpack.c.b16 %v2308, %v2305
    %v2435 = vpack.c.b16 %v2309, %v2306
    %v2436 = vpack.c.b16 %v2310, %v2307
    %v2437 = vpack.c.b16 %v2314, %v2311
    %v2438 = vpack.c.b16 %v2315, %v2312
    %v2439 = vpack.c.b16 %v2316, %v2313
    %v2440 = vpack.c.b16 %v2320, %v2317
    %v2441 = vpack.c.b16 %v2321, %v2318
    %v2442 = vpack.c.b16 %v2322, %v2319
    %v2443 = vpack.c.b16 %v2326, %v2323
    %v2444 = vpack.c.b16 %v2327, %v2324
    %v2445 = vpack.c.b16 %v2328, %v2325
    %v2446 = vpack.c.b16 %v2332, %v2329
    %v2447 = vpack.c.b16 %v2333, %v2330
    %v2448 = vpack.c.b16 %v2334, %v2331
    %v2449 = vpack.c.b16 %v2338, %v2335
    %v2450 = vpack.c.b16 %v2339, %v2336
    %v2451 = vpack.c.b16 %v2340, %v2337
    %v2452 = vpack.c.b16 %v2344, %v2341
    %v2453 = vpack.c.b16 %v2345, %v2342
    %v2454 = vpack.c.b16 %v2346, %v2343
    %v2455 = vpack.c.b16 %v2350, %v2347
    %v2456 = vpack.c.b16 %v2351, %v2348
    %v2457 = vpack.c.b16 %v2352, %v2349
    %v2458 = vpack.c.b16 %v2356, %v2353
    %v2459 = vpack.c.b16 %v2357, %v2354
    %v2460 = vpack.c.b16 %v2358, %v2355
    %v2461 = vpack.c.b16 %v2362, %v2359
    %v2462 = vpack.c.b16 %v2363, %v2360
    %v2463 = vpack.c.b16 %v2364, %v2361
    %v2464 = vpack.c.b16 %v2368, %v2365
    %v2465 = vpack.c.b16 %v2369, %v2366
    %v2466 = vpack.c.b16 %v2370, %v2367
    %2563 = vmatprep.subr.bf16.mxu0 %v2372
    %2564 = vmatpush1.bf16.msra.mxu0 %v2371
    %2565 = vmatprep.subr.bf16.mxu0 %v2375
    %2566 = vmatpush1.bf16.msra.mxu0 %v2374
    %2567 = vmatprep.subr.bf16.mxu0 %v2378
    %2568 = vmatpush1.bf16.msra.mxu0 %v2377
    %2569 = vmatprep.subr.bf16.mxu0 %v2381
    %2570 = vmatpush1.bf16.msra.mxu0 %v2380
    %2571 = vmatprep.subr.bf16.mxu0 %v2384
    %2572 = vmatpush1.bf16.msra.mxu0 %v2383
    %2573 = vmatprep.subr.bf16.mxu0 %v2387
    %2574 = vmatpush1.bf16.msra.mxu0 %v2386
    %2575 = vmatprep.subr.bf16.mxu0 %v2390
    %2576 = vmatpush1.bf16.msra.mxu0 %v2389
    %2577 = vmatprep.subr.bf16.mxu0 %v2393
    %2578 = vmatpush1.bf16.msra.mxu0 %v2392
    %2579 = vmatprep.subr.bf16.mxu0 %v2396
    %2580 = vmatpush1.bf16.msra.mxu0 %v2395
    %2581 = vmatprep.subr.bf16.mxu0 %v2399
    %2582 = vmatpush1.bf16.msra.mxu0 %v2398
    %2583 = vmatprep.subr.bf16.mxu0 %v2402
    %2584 = vmatpush1.bf16.msra.mxu0 %v2401
    %2585 = vmatprep.subr.bf16.mxu0 %v2405
    %2586 = vmatpush1.bf16.msra.mxu0 %v2404
    %2587 = vmatprep.subr.bf16.mxu0 %v2408
    %2588 = vmatpush1.bf16.msra.mxu0 %v2407
    %2589 = vmatprep.subr.bf16.mxu0 %v2411
    %2590 = vmatpush1.bf16.msra.mxu0 %v2410
    %2591 = vmatprep.subr.bf16.mxu0 %v2414
    %2592 = vmatpush1.bf16.msra.mxu0 %v2413
    %2593 = vmatprep.subr.bf16.mxu0 %v2417
    %2594 = vmatpush1.bf16.msra.mxu0 %v2416
    %2595 = vmatprep.mubr.bf16.mxu0 %v1920
    %2596 = vmatmul.mubr.bf16.gmra.mrb[0].mxu0 %v1919
    %v2597 = vpop.f32.mrb[0].mxu0
    %v2598 = vadd.f32 0.0, %v2597
    %v2599 = vpop.f32.mrb[0].mxu0
    %v2600 = vadd.f32 0.0, %v2599
    %v2601 = vpop.f32.mrb[0].mxu0
    %v2602 = vadd.f32 0.0, %v2601
    %v2603 = vpop.f32.mrb[0].mxu0
    %v2604 = vadd.f32 0.0, %v2603
    %2605 = vdwg.mxu0
    %2606 = vmatprep.subr.bf16.mxu0 %v2420
    %2607 = vmatpush1.bf16.msra.mxu0 %v2419
    %2608 = vmatprep.subr.bf16.mxu0 %v2423
    %2609 = vmatpush1.bf16.msra.mxu0 %v2422
    %2610 = vmatprep.subr.bf16.mxu0 %v2426
    %2611 = vmatpush1.bf16.msra.mxu0 %v2425
    %2612 = vmatprep.subr.bf16.mxu0 %v2429
    %2613 = vmatpush1.bf16.msra.mxu0 %v2428
    %2614 = vmatprep.subr.bf16.mxu0 %v2432
    %2615 = vmatpush1.bf16.msra.mxu0 %v2431
    %2616 = vmatprep.subr.bf16.mxu0 %v2435
    %2617 = vmatpush1.bf16.msra.mxu0 %v2434
    %2618 = vmatprep.subr.bf16.mxu0 %v2438
    %2619 = vmatpush1.bf16.msra.mxu0 %v2437
    %2620 = vmatprep.subr.bf16.mxu0 %v2441
    %2621 = vmatpush1.bf16.msra.mxu0 %v2440
    %2622 = vmatprep.subr.bf16.mxu0 %v2444
    %2623 = vmatpush1.bf16.msra.mxu0 %v2443
    %2624 = vmatprep.subr.bf16.mxu0 %v2447
    %2625 = vmatpush1.bf16.msra.mxu0 %v2446
    %2626 = vmatprep.subr.bf16.mxu0 %v2450
    %2627 = vmatpush1.bf16.msra.mxu0 %v2449
    %2628 = vmatprep.subr.bf16.mxu0 %v2453
    %2629 = vmatpush1.bf16.msra.mxu0 %v2452
    %2630 = vmatprep.subr.bf16.mxu0 %v2456
    %2631 = vmatpush1.bf16.msra.mxu0 %v2455
    %2632 = vmatprep.subr.bf16.mxu0 %v2459
    %2633 = vmatpush1.bf16.msra.mxu0 %v2458
    %2634 = vmatprep.subr.bf16.mxu0 %v2462
    %2635 = vmatpush1.bf16.msra.mxu0 %v2461
    %2636 = vmatprep.subr.bf16.mxu0 %v2465
    %2637 = vmatpush1.bf16.msra.mxu0 %v2464
    %2638 = vmatprep.mubr.bf16.mxu0 %v1922
    %2639 = vmatmul.mubr.bf16.gmra.mrb[0].mxu0 %v1921
    %v2640 = vpop.f32.mrb[0].mxu0
    %v2641 = vadd.f32 %v2598, %v2640
    %v2642 = vpop.f32.mrb[0].mxu0
    %v2643 = vadd.f32 %v2600, %v2642
    %v2644 = vpop.f32.mrb[0].mxu0
    %v2645 = vadd.f32 %v2602, %v2644
    %v2646 = vpop.f32.mrb[0].mxu0
    %v2647 = vadd.f32 %v2604, %v2646
    %2648 = vdwg.mxu0
    %2649 = vmatprep.subr.bf16.mxu0 0
    %2650 = vmatpush1.bf16.msra.mxu0 %v2373
    %2651 = vmatprep.subr.bf16.mxu0 0
    %2652 = vmatpush1.bf16.msra.mxu0 %v2376
    %2653 = vmatprep.subr.bf16.mxu0 0
    %2654 = vmatpush1.bf16.msra.mxu0 %v2379
    %2655 = vmatprep.subr.bf16.mxu0 0
    %2656 = vmatpush1.bf16.msra.mxu0 %v2382
    %2657 = vmatprep.subr.bf16.mxu0 0
    %2658 = vmatpush1.bf16.msra.mxu0 %v2385
    %2659 = vmatprep.subr.bf16.mxu0 0
    %2660 = vmatpush1.bf16.msra.mxu0 %v2388
    %2661 = vmatprep.subr.bf16.mxu0 0
    %2662 = vmatpush1.bf16.msra.mxu0 %v2391
    %2663 = vmatprep.subr.bf16.mxu0 0
    %2664 = vmatpush1.bf16.msra.mxu0 %v2394
    %2665 = vmatprep.subr.bf16.mxu0 0
    %2666 = vmatpush1.bf16.msra.mxu0 %v2397
    %2667 = vmatprep.subr.bf16.mxu0 0
    %2668 = vmatpush1.bf16.msra.mxu0 %v2400
    %2669 = vmatprep.subr.bf16.mxu0 0
    %2670 = vmatpush1.bf16.msra.mxu0 %v2403
    %2671 = vmatprep.subr.bf16.mxu0 0
    %2672 = vmatpush1.bf16.msra.mxu0 %v2406
    %2673 = vmatprep.subr.bf16.mxu0 0
    %2674 = vmatpush1.bf16.msra.mxu0 %v2409
    %2675 = vmatprep.subr.bf16.mxu0 0
    %2676 = vmatpush1.bf16.msra.mxu0 %v2412
    %2677 = vmatprep.subr.bf16.mxu0 0
    %2678 = vmatpush1.bf16.msra.mxu0 %v2415
    %2679 = vmatprep.subr.bf16.mxu0 0
    %2680 = vmatpush1.bf16.msra.mxu0 %v2418
    %2681 = vmatprep.mubr.bf16.mxu0 %v1920
    %2682 = vmatmul.mubr.bf16.gmra.mrb[0].mxu0 %v1919
    %v2683 = vpop.f32.mrb[0].mxu0
    %v2684 = vadd.f32 0.0, %v2683
    %v2685 = vpop.f32.mrb[0].mxu0
    %v2686 = vpop.f32.mrb[0].mxu0
    %v2687 = vadd.f32 0.0, %v2686
    %v2688 = vpop.f32.mrb[0].mxu0
    %2689 = vdwg.mxu0
    %2690 = vmatprep.subr.bf16.mxu0 0
    %2691 = vmatpush1.bf16.msra.mxu0 %v2421
    %2692 = vmatprep.subr.bf16.mxu0 0
    %2693 = vmatpush1.bf16.msra.mxu0 %v2424
    %2694 = vmatprep.subr.bf16.mxu0 0
    %2695 = vmatpush1.bf16.msra.mxu0 %v2427
    %2696 = vmatprep.subr.bf16.mxu0 0
    %2697 = vmatpush1.bf16.msra.mxu0 %v2430
    %2698 = vmatprep.subr.bf16.mxu0 0
    %2699 = vmatpush1.bf16.msra.mxu0 %v2433
    %2700 = vmatprep.subr.bf16.mxu0 0
    %2701 = vmatpush1.bf16.msra.mxu0 %v2436
    %2702 = vmatprep.subr.bf16.mxu0 0
    %2703 = vmatpush1.bf16.msra.mxu0 %v2439
    %2704 = vmatprep.subr.bf16.mxu0 0
    %2705 = vmatpush1.bf16.msra.mxu0 %v2442
    %2706 = vmatprep.subr.bf16.mxu0 0
    %2707 = vmatpush1.bf16.msra.mxu0 %v2445
    %2708 = vmatprep.subr.bf16.mxu0 0
    %2709 = vmatpush1.bf16.msra.mxu0 %v2448
    %2710 = vmatprep.subr.bf16.mxu0 0
    %2711 = vmatpush1.bf16.msra.mxu0 %v2451
    %2712 = vmatprep.subr.bf16.mxu0 0
    %2713 = vmatpush1.bf16.msra.mxu0 %v2454
    %2714 = vmatprep.subr.bf16.mxu0 0
    %2715 = vmatpush1.bf16.msra.mxu0 %v2457
    %2716 = vmatprep.subr.bf16.mxu0 0
    %2717 = vmatpush1.bf16.msra.mxu0 %v2460
    %2718 = vmatprep.subr.bf16.mxu0 0
    %2719 = vmatpush1.bf16.msra.mxu0 %v2463
    %2720 = vmatprep.subr.bf16.mxu0 0
    %2721 = vmatpush1.bf16.msra.mxu0 %v2466
    %2722 = vmatprep.mubr.bf16.mxu0 %v1922
    %2723 = vmatmul.mubr.bf16.gmra.mrb[0].mxu0 %v1921
    %v2724 = vpop.f32.mrb[0].mxu0
    %v2725 = vadd.f32 %v2684, %v2724
    %v2726 = vpop.f32.mrb[0].mxu0
    %v2727 = vpop.f32.mrb[0].mxu0
    %v2728 = vadd.f32 %v2687, %v2727
    %v2729 = vpop.f32.mrb[0].mxu0
    %2730 = vdwg.mxu0
    %v2859 = vunpack.c.l.b16 %v949
    %v2860 = vunpack.c.h.b16 %v949
    %v2861 = vunpack.c.l.b16 %v950
    %v2862 = vunpack.c.l.b16 %v951
    %v2863 = vunpack.c.h.b16 %v951
    %v2864 = vunpack.c.l.b16 %v952
    %v2865 = vunpack.c.l.b16 %v953
    %v2866 = vunpack.c.h.b16 %v953
    %v2867 = vunpack.c.l.b16 %v954
    %v2868 = vunpack.c.l.b16 %v955
    %v2869 = vunpack.c.h.b16 %v955
    %v2870 = vunpack.c.l.b16 %v956
    %v2871 = vunpack.c.l.b16 %v957
    %v2872 = vunpack.c.h.b16 %v957
    %v2873 = vunpack.c.l.b16 %v958
    %v2874 = vunpack.c.l.b16 %v959
    %v2875 = vunpack.c.h.b16 %v959
    %v2876 = vunpack.c.l.b16 %v960
    %v2877 = vunpack.c.l.b16 %v961
    %v2878 = vunpack.c.h.b16 %v961
    %v2879 = vunpack.c.l.b16 %v962
    %v2880 = vunpack.c.l.b16 %v963
    %v2881 = vunpack.c.h.b16 %v963
    %v2882 = vunpack.c.l.b16 %v964
    %v2883 = vunpack.c.l.b16 %v965
    %v2884 = vunpack.c.h.b16 %v965
    %v2885 = vunpack.c.l.b16 %v966
    %v2886 = vunpack.c.l.b16 %v967
    %v2887 = vunpack.c.h.b16 %v967
    %v2888 = vunpack.c.l.b16 %v968
    %v2889 = vunpack.c.l.b16 %v969
    %v2890 = vunpack.c.h.b16 %v969
    %v2891 = vunpack.c.l.b16 %v970
    %v2892 = vunpack.c.l.b16 %v971
    %v2893 = vunpack.c.h.b16 %v971
    %v2894 = vunpack.c.l.b16 %v972
    %v2895 = vunpack.c.l.b16 %v973
    %v2896 = vunpack.c.h.b16 %v973
    %v2897 = vunpack.c.l.b16 %v974
    %v2898 = vunpack.c.l.b16 %v975
    %v2899 = vunpack.c.h.b16 %v975
    %v2900 = vunpack.c.l.b16 %v976
    %v2901 = vunpack.c.l.b16 %v977
    %v2902 = vunpack.c.h.b16 %v977
    %v2903 = vunpack.c.l.b16 %v978
    %v2904 = vunpack.c.l.b16 %v979
    %v2905 = vunpack.c.h.b16 %v979
    %v2906 = vunpack.c.l.b16 %v980
    %v2907 = vunpack.c.l.b16 %v981
    %v2908 = vunpack.c.h.b16 %v981
    %v2909 = vunpack.c.l.b16 %v982
    %v2910 = vunpack.c.l.b16 %v983
    %v2911 = vunpack.c.h.b16 %v983
    %v2912 = vunpack.c.l.b16 %v984
    %v2913 = vunpack.c.l.b16 %v985
    %v2914 = vunpack.c.h.b16 %v985
    %v2915 = vunpack.c.l.b16 %v986
    %v2916 = vunpack.c.l.b16 %v987
    %v2917 = vunpack.c.h.b16 %v987
    %v2918 = vunpack.c.l.b16 %v988
    %v2919 = vunpack.c.l.b16 %v989
    %v2920 = vunpack.c.h.b16 %v989
    %v2921 = vunpack.c.l.b16 %v990
    %v2922 = vunpack.c.l.b16 %v991
    %v2923 = vunpack.c.h.b16 %v991
    %v2924 = vunpack.c.l.b16 %v992
    %v2925 = vunpack.c.l.b16 %v993
    %v2926 = vunpack.c.h.b16 %v993
    %v2927 = vunpack.c.l.b16 %v994
    %v2928 = vunpack.c.l.b16 %v995
    %v2929 = vunpack.c.h.b16 %v995
    %v2930 = vunpack.c.l.b16 %v996
    %v2931 = vunpack.c.l.b16 %v997
    %v2932 = vunpack.c.h.b16 %v997
    %v2933 = vunpack.c.l.b16 %v998
    %v2934 = vunpack.c.l.b16 %v999
    %v2935 = vunpack.c.h.b16 %v999
    %v2936 = vunpack.c.l.b16 %v1000
    %v2937 = vunpack.c.l.b16 %v1001
    %v2938 = vunpack.c.h.b16 %v1001
    %v2939 = vunpack.c.l.b16 %v1002
    %v2940 = vunpack.c.l.b16 %v1003
    %v2941 = vunpack.c.h.b16 %v1003
    %v2942 = vunpack.c.l.b16 %v1004
    %v2943 = vunpack.c.l.b16 %v1005
    %v2944 = vunpack.c.h.b16 %v1005
    %v2945 = vunpack.c.l.b16 %v1006
    %v2946 = vunpack.c.l.b16 %v1007
    %v2947 = vunpack.c.h.b16 %v1007
    %v2948 = vunpack.c.l.b16 %v1008
    %v2949 = vunpack.c.l.b16 %v1009
    %v2950 = vunpack.c.h.b16 %v1009
    %v2951 = vunpack.c.l.b16 %v1010
    %v2952 = vunpack.c.l.b16 %v1011
    %v2953 = vunpack.c.h.b16 %v1011
    %v2954 = vunpack.c.l.b16 %v1012
    %v2955 = vunpack.c.l.b16 %v1013
    %v2956 = vunpack.c.h.b16 %v1013
    %v2957 = vunpack.c.l.b16 %v1014
    %v2958 = vunpack.c.l.b16 %v1015
    %v2959 = vunpack.c.h.b16 %v1015
    %v2960 = vunpack.c.l.b16 %v1016
    %v2961 = vunpack.c.l.b16 %v1017
    %v2962 = vunpack.c.h.b16 %v1017
    %v2963 = vunpack.c.l.b16 %v1018
    %v2964 = vunpack.c.l.b16 %v1019
    %v2965 = vunpack.c.h.b16 %v1019
    %v2966 = vunpack.c.l.b16 %v1020
    %v2967 = vunpack.c.l.b16 %v1021
    %v2968 = vunpack.c.h.b16 %v1021
    %v2969 = vunpack.c.l.b16 %v1022
    %v2970 = vunpack.c.l.b16 %v1023
    %v2971 = vunpack.c.h.b16 %v1023
    %v2972 = vunpack.c.l.b16 %v1024
    %v2973 = vunpack.c.l.b16 %v1025
    %v2974 = vunpack.c.h.b16 %v1025
    %v2975 = vunpack.c.l.b16 %v1026
    %v2976 = vunpack.c.l.b16 %v1027
    %v2977 = vunpack.c.h.b16 %v1027
    %v2978 = vunpack.c.l.b16 %v1028
    %v2979 = vunpack.c.l.b16 %v1029
    %v2980 = vunpack.c.h.b16 %v1029
    %v2981 = vunpack.c.l.b16 %v1030
    %v2982 = vunpack.c.l.b16 %v1031
    %v2983 = vunpack.c.h.b16 %v1031
    %v2984 = vunpack.c.l.b16 %v1032
    %v2985 = vunpack.c.l.b16 %v1033
    %v2986 = vunpack.c.h.b16 %v1033
    %v2987 = vunpack.c.l.b16 %v1034
    %v2988 = vunpack.c.l.b16 %v1035
    %v2989 = vunpack.c.h.b16 %v1035
    %v2990 = vunpack.c.l.b16 %v1036
    %v2991 = vunpack.c.l.b16 %v1037
    %v2992 = vunpack.c.h.b16 %v1037
    %v2993 = vunpack.c.l.b16 %v1038
    %v2994 = vunpack.c.l.b16 %v1039
    %v2995 = vunpack.c.h.b16 %v1039
    %v2996 = vunpack.c.l.b16 %v1040
    %v2997 = vunpack.c.l.b16 %v1041
    %v2998 = vunpack.c.h.b16 %v1041
    %v2999 = vunpack.c.l.b16 %v1042
    %v3000 = vunpack.c.l.b16 %v1043
    %v3001 = vunpack.c.h.b16 %v1043
    %v3002 = vunpack.c.l.b16 %v1044
    %v3003 = vunpack.c.l.b16 %v1045
    %v3004 = vunpack.c.h.b16 %v1045
    %v3005 = vunpack.c.l.b16 %v1046
    %v3006 = vunpack.c.l.b16 %v1047
    %v3007 = vunpack.c.h.b16 %v1047
    %v3008 = vunpack.c.l.b16 %v1048
    %v3009 = vunpack.c.l.b16 %v1049
    %v3010 = vunpack.c.h.b16 %v1049
    %v3011 = vunpack.c.l.b16 %v1050
    %v3012 = vunpack.c.l.b16 %v1051
    %v3013 = vunpack.c.h.b16 %v1051
    %v3014 = vunpack.c.l.b16 %v1052
    %v3015 = vunpack.c.l.b16 %v1053
    %v3016 = vunpack.c.h.b16 %v1053
    %v3017 = vunpack.c.l.b16 %v1054
    %v3018 = vunpack.c.l.b16 %v1055
    %v3019 = vunpack.c.h.b16 %v1055
    %v3020 = vunpack.c.l.b16 %v1056
    %v3021 = vunpack.c.l.b16 %v1057
    %v3022 = vunpack.c.h.b16 %v1057
    %v3023 = vunpack.c.l.b16 %v1058
    %v3024 = vunpack.c.l.b16 %v1059
    %v3025 = vunpack.c.h.b16 %v1059
    %v3026 = vunpack.c.l.b16 %v1060
    %v3027 = vunpack.c.l.b16 %v1061
    %v3028 = vunpack.c.h.b16 %v1061
    %v3029 = vunpack.c.l.b16 %v1062
    %v3030 = vunpack.c.l.b16 %v1063
    %v3031 = vunpack.c.h.b16 %v1063
    %v3032 = vunpack.c.l.b16 %v1064
    %v3033 = vunpack.c.l.b16 %v1065
    %v3034 = vunpack.c.h.b16 %v1065
    %v3035 = vunpack.c.l.b16 %v1066
    %v3036 = vunpack.c.l.b16 %v1067
    %v3037 = vunpack.c.h.b16 %v1067
    %v3038 = vunpack.c.l.b16 %v1068
    %v3039 = vunpack.c.l.b16 %v1069
    %v3040 = vunpack.c.h.b16 %v1069
    %v3041 = vunpack.c.l.b16 %v1070
    %v3042 = vunpack.c.l.b16 %v1071
    %v3043 = vunpack.c.h.b16 %v1071
    %v3044 = vunpack.c.l.b16 %v1072
    %v3045 = vunpack.c.l.b16 %v1073
    %v3046 = vunpack.c.h.b16 %v1073
    %v3047 = vunpack.c.l.b16 %v1074
    %v3048 = vunpack.c.l.b16 %v1075
    %v3049 = vunpack.c.h.b16 %v1075
    %v3050 = vunpack.c.l.b16 %v1076
    %v3051 = vpack.c.b16 %v2862, %v2859
    %v3052 = vpack.c.b16 %v2863, %v2860
    %v3053 = vpack.c.b16 %v2864, %v2861
    %v3054 = vpack.c.b16 %v2868, %v2865
    %v3055 = vpack.c.b16 %v2869, %v2866
    %v3056 = vpack.c.b16 %v2870, %v2867
    %v3057 = vpack.c.b16 %v2874, %v2871
    %v3058 = vpack.c.b16 %v2875, %v2872
    %v3059 = vpack.c.b16 %v2876, %v2873
    %v3060 = vpack.c.b16 %v2880, %v2877
    %v3061 = vpack.c.b16 %v2881, %v2878
    %v3062 = vpack.c.b16 %v2882, %v2879
    %v3063 = vpack.c.b16 %v2886, %v2883
    %v3064 = vpack.c.b16 %v2887, %v2884
    %v3065 = vpack.c.b16 %v2888, %v2885
    %v3066 = vpack.c.b16 %v2892, %v2889
    %v3067 = vpack.c.b16 %v2893, %v2890
    %v3068 = vpack.c.b16 %v2894, %v2891
    %v3069 = vpack.c.b16 %v2898, %v2895
    %v3070 = vpack.c.b16 %v2899, %v2896
    %v3071 = vpack.c.b16 %v2900, %v2897
    %v3072 = vpack.c.b16 %v2904, %v2901
    %v3073 = vpack.c.b16 %v2905, %v2902
    %v3074 = vpack.c.b16 %v2906, %v2903
    %v3075 = vpack.c.b16 %v2910, %v2907
    %v3076 = vpack.c.b16 %v2911, %v2908
    %v3077 = vpack.c.b16 %v2912, %v2909
    %v3078 = vpack.c.b16 %v2916, %v2913
    %v3079 = vpack.c.b16 %v2917, %v2914
    %v3080 = vpack.c.b16 %v2918, %v2915
    %v3081 = vpack.c.b16 %v2922, %v2919
    %v3082 = vpack.c.b16 %v2923, %v2920
    %v3083 = vpack.c.b16 %v2924, %v2921
    %v3084 = vpack.c.b16 %v2928, %v2925
    %v3085 = vpack.c.b16 %v2929, %v2926
    %v3086 = vpack.c.b16 %v2930, %v2927
    %v3087 = vpack.c.b16 %v2934, %v2931
    %v3088 = vpack.c.b16 %v2935, %v2932
    %v3089 = vpack.c.b16 %v2936, %v2933
    %v3090 = vpack.c.b16 %v2940, %v2937
    %v3091 = vpack.c.b16 %v2941, %v2938
    %v3092 = vpack.c.b16 %v2942, %v2939
    %v3093 = vpack.c.b16 %v2946, %v2943
    %v3094 = vpack.c.b16 %v2947, %v2944
    %v3095 = vpack.c.b16 %v2948, %v2945
    %v3096 = vpack.c.b16 %v2952, %v2949
    %v3097 = vpack.c.b16 %v2953, %v2950
    %v3098 = vpack.c.b16 %v2954, %v2951
    %v3099 = vpack.c.b16 %v2958, %v2955
    %v3100 = vpack.c.b16 %v2959, %v2956
    %v3101 = vpack.c.b16 %v2960, %v2957
    %v3102 = vpack.c.b16 %v2964, %v2961
    %v3103 = vpack.c.b16 %v2965, %v2962
    %v3104 = vpack.c.b16 %v2966, %v2963
    %v3105 = vpack.c.b16 %v2970, %v2967
    %v3106 = vpack.c.b16 %v2971, %v2968
    %v3107 = vpack.c.b16 %v2972, %v2969
    %v3108 = vpack.c.b16 %v2976, %v2973
    %v3109 = vpack.c.b16 %v2977, %v2974
    %v3110 = vpack.c.b16 %v2978, %v2975
    %v3111 = vpack.c.b16 %v2982, %v2979
    %v3112 = vpack.c.b16 %v2983, %v2980
    %v3113 = vpack.c.b16 %v2984, %v2981
    %v3114 = vpack.c.b16 %v2988, %v2985
    %v3115 = vpack.c.b16 %v2989, %v2986
    %v3116 = vpack.c.b16 %v2990, %v2987
    %v3117 = vpack.c.b16 %v2994, %v2991
    %v3118 = vpack.c.b16 %v2995, %v2992
    %v3119 = vpack.c.b16 %v2996, %v2993
    %v3120 = vpack.c.b16 %v3000, %v2997
    %v3121 = vpack.c.b16 %v3001, %v2998
    %v3122 = vpack.c.b16 %v3002, %v2999
    %v3123 = vpack.c.b16 %v3006, %v3003
    %v3124 = vpack.c.b16 %v3007, %v3004
    %v3125 = vpack.c.b16 %v3008, %v3005
    %v3126 = vpack.c.b16 %v3012, %v3009
    %v3127 = vpack.c.b16 %v3013, %v3010
    %v3128 = vpack.c.b16 %v3014, %v3011
    %v3129 = vpack.c.b16 %v3018, %v3015
    %v3130 = vpack.c.b16 %v3019, %v3016
    %v3131 = vpack.c.b16 %v3020, %v3017
    %v3132 = vpack.c.b16 %v3024, %v3021
    %v3133 = vpack.c.b16 %v3025, %v3022
    %v3134 = vpack.c.b16 %v3026, %v3023
    %v3135 = vpack.c.b16 %v3030, %v3027
    %v3136 = vpack.c.b16 %v3031, %v3028
    %v3137 = vpack.c.b16 %v3032, %v3029
    %v3138 = vpack.c.b16 %v3036, %v3033
    %v3139 = vpack.c.b16 %v3037, %v3034
    %v3140 = vpack.c.b16 %v3038, %v3035
    %v3141 = vpack.c.b16 %v3042, %v3039
    %v3142 = vpack.c.b16 %v3043, %v3040
    %v3143 = vpack.c.b16 %v3044, %v3041
    %v3144 = vpack.c.b16 %v3048, %v3045
    %v3145 = vpack.c.b16 %v3049, %v3046
    %v3146 = vpack.c.b16 %v3050, %v3047
    %3243 = vmatprep.subr.bf16.mxu0 %v3052
    %3244 = vmatpush1.bf16.msra.mxu0 %v3051
    %3245 = vmatprep.subr.bf16.mxu0 %v3055
    %3246 = vmatpush1.bf16.msra.mxu0 %v3054
    %3247 = vmatprep.subr.bf16.mxu0 %v3058
    %3248 = vmatpush1.bf16.msra.mxu0 %v3057
    %3249 = vmatprep.subr.bf16.mxu0 %v3061
    %3250 = vmatpush1.bf16.msra.mxu0 %v3060
    %3251 = vmatprep.subr.bf16.mxu0 %v3064
    %3252 = vmatpush1.bf16.msra.mxu0 %v3063
    %3253 = vmatprep.subr.bf16.mxu0 %v3067
    %3254 = vmatpush1.bf16.msra.mxu0 %v3066
    %3255 = vmatprep.subr.bf16.mxu0 %v3070
    %3256 = vmatpush1.bf16.msra.mxu0 %v3069
    %3257 = vmatprep.subr.bf16.mxu0 %v3073
    %3258 = vmatpush1.bf16.msra.mxu0 %v3072
    %3259 = vmatprep.subr.bf16.mxu0 %v3076
    %3260 = vmatpush1.bf16.msra.mxu0 %v3075
    %3261 = vmatprep.subr.bf16.mxu0 %v3079
    %3262 = vmatpush1.bf16.msra.mxu0 %v3078
    %3263 = vmatprep.subr.bf16.mxu0 %v3082
    %3264 = vmatpush1.bf16.msra.mxu0 %v3081
    %3265 = vmatprep.subr.bf16.mxu0 %v3085
    %3266 = vmatpush1.bf16.msra.mxu0 %v3084
    %3267 = vmatprep.subr.bf16.mxu0 %v3088
    %3268 = vmatpush1.bf16.msra.mxu0 %v3087
    %3269 = vmatprep.subr.bf16.mxu0 %v3091
    %3270 = vmatpush1.bf16.msra.mxu0 %v3090
    %3271 = vmatprep.subr.bf16.mxu0 %v3094
    %3272 = vmatpush1.bf16.msra.mxu0 %v3093
    %3273 = vmatprep.subr.bf16.mxu0 %v3097
    %3274 = vmatpush1.bf16.msra.mxu0 %v3096
    %3275 = vmatprep.mubr.bf16.mxu0 %v946
    %3276 = vmatmul.mubr.bf16.gmra.mrb[0].mxu0 %v945
    %v3277 = vpop.f32.mrb[0].mxu0
    %v3278 = vadd.f32 %v2641, %v3277
    %v3279 = vpop.f32.mrb[0].mxu0
    %v3280 = vadd.f32 %v2643, %v3279
    %v3281 = vpop.f32.mrb[0].mxu0
    %v3282 = vadd.f32 %v2645, %v3281
    %v3283 = vpop.f32.mrb[0].mxu0
    %v3284 = vadd.f32 %v2647, %v3283
    %3285 = vdwg.mxu0
    %3286 = vmatprep.subr.bf16.mxu0 %v3100
    %3287 = vmatpush1.bf16.msra.mxu0 %v3099
    %3288 = vmatprep.subr.bf16.mxu0 %v3103
    %3289 = vmatpush1.bf16.msra.mxu0 %v3102
    %3290 = vmatprep.subr.bf16.mxu0 %v3106
    %3291 = vmatpush1.bf16.msra.mxu0 %v3105
    %3292 = vmatprep.subr.bf16.mxu0 %v3109
    %3293 = vmatpush1.bf16.msra.mxu0 %v3108
    %3294 = vmatprep.subr.bf16.mxu0 %v3112
    %3295 = vmatpush1.bf16.msra.mxu0 %v3111
    %3296 = vmatprep.subr.bf16.mxu0 %v3115
    %3297 = vmatpush1.bf16.msra.mxu0 %v3114
    %3298 = vmatprep.subr.bf16.mxu0 %v3118
    %3299 = vmatpush1.bf16.msra.mxu0 %v3117
    %3300 = vmatprep.subr.bf16.mxu0 %v3121
    %3301 = vmatpush1.bf16.msra.mxu0 %v3120
    %3302 = vmatprep.subr.bf16.mxu0 %v3124
    %3303 = vmatpush1.bf16.msra.mxu0 %v3123
    %3304 = vmatprep.subr.bf16.mxu0 %v3127
    %3305 = vmatpush1.bf16.msra.mxu0 %v3126
    %3306 = vmatprep.subr.bf16.mxu0 %v3130
    %3307 = vmatpush1.bf16.msra.mxu0 %v3129
    %3308 = vmatprep.subr.bf16.mxu0 %v3133
    %3309 = vmatpush1.bf16.msra.mxu0 %v3132
    %3310 = vmatprep.subr.bf16.mxu0 %v3136
    %3311 = vmatpush1.bf16.msra.mxu0 %v3135
    %3312 = vmatprep.subr.bf16.mxu0 %v3139
    %3313 = vmatpush1.bf16.msra.mxu0 %v3138
    %3314 = vmatprep.subr.bf16.mxu0 %v3142
    %3315 = vmatpush1.bf16.msra.mxu0 %v3141
    %3316 = vmatprep.subr.bf16.mxu0 %v3145
    %3317 = vmatpush1.bf16.msra.mxu0 %v3144
    %3318 = vmatprep.mubr.bf16.mxu0 %v948
    %3319 = vmatmul.mubr.bf16.gmra.mrb[0].mxu0 %v947
    %v3320 = vpop.f32.mrb[0].mxu0
    %v3321 = vadd.f32 %v3278, %v3320
    %v3322 = vpop.f32.mrb[0].mxu0
    %v3323 = vadd.f32 %v3280, %v3322
    %v3324 = vpop.f32.mrb[0].mxu0
    %v3325 = vadd.f32 %v3282, %v3324
    %v3326 = vpop.f32.mrb[0].mxu0
    %v3327 = vadd.f32 %v3284, %v3326
    %3328 = vdwg.mxu0
    %3329 = vmatprep.subr.bf16.mxu0 0
    %3330 = vmatpush1.bf16.msra.mxu0 %v3053
    %3331 = vmatprep.subr.bf16.mxu0 0
    %3332 = vmatpush1.bf16.msra.mxu0 %v3056
    %3333 = vmatprep.subr.bf16.mxu0 0
    %3334 = vmatpush1.bf16.msra.mxu0 %v3059
    %3335 = vmatprep.subr.bf16.mxu0 0
    %3336 = vmatpush1.bf16.msra.mxu0 %v3062
    %3337 = vmatprep.subr.bf16.mxu0 0
    %3338 = vmatpush1.bf16.msra.mxu0 %v3065
    %3339 = vmatprep.subr.bf16.mxu0 0
    %3340 = vmatpush1.bf16.msra.mxu0 %v3068
    %3341 = vmatprep.subr.bf16.mxu0 0
    %3342 = vmatpush1.bf16.msra.mxu0 %v3071
    %3343 = vmatprep.subr.bf16.mxu0 0
    %3344 = vmatpush1.bf16.msra.mxu0 %v3074
    %3345 = vmatprep.subr.bf16.mxu0 0
    %3346 = vmatpush1.bf16.msra.mxu0 %v3077
    %3347 = vmatprep.subr.bf16.mxu0 0
    %3348 = vmatpush1.bf16.msra.mxu0 %v3080
    %3349 = vmatprep.subr.bf16.mxu0 0
    %3350 = vmatpush1.bf16.msra.mxu0 %v3083
    %3351 = vmatprep.subr.bf16.mxu0 0
    %3352 = vmatpush1.bf16.msra.mxu0 %v3086
    %3353 = vmatprep.subr.bf16.mxu0 0
    %3354 = vmatpush1.bf16.msra.mxu0 %v3089
    %3355 = vmatprep.subr.bf16.mxu0 0
    %3356 = vmatpush1.bf16.msra.mxu0 %v3092
    %3357 = vmatprep.subr.bf16.mxu0 0
    %3358 = vmatpush1.bf16.msra.mxu0 %v3095
    %3359 = vmatprep.subr.bf16.mxu0 0
    %3360 = vmatpush1.bf16.msra.mxu0 %v3098
    %3361 = vmatprep.mubr.bf16.mxu0 %v946
    %3362 = vmatmul.mubr.bf16.gmra.mrb[0].mxu0 %v945
    %v3363 = vpop.f32.mrb[0].mxu0
    %v3364 = vadd.f32 %v2725, %v3363
    %v3365 = vpop.f32.mrb[0].mxu0
    %v3366 = vpop.f32.mrb[0].mxu0
    %v3367 = vadd.f32 %v2728, %v3366
    %v3368 = vpop.f32.mrb[0].mxu0
    %3369 = vdwg.mxu0
    %3370 = vmatprep.subr.bf16.mxu0 0
    %3371 = vmatpush1.bf16.msra.mxu0 %v3101
    %3372 = vmatprep.subr.bf16.mxu0 0
    %3373 = vmatpush1.bf16.msra.mxu0 %v3104
    %3374 = vmatprep.subr.bf16.mxu0 0
    %3375 = vmatpush1.bf16.msra.mxu0 %v3107
    %3376 = vmatprep.subr.bf16.mxu0 0
    %3377 = vmatpush1.bf16.msra.mxu0 %v3110
    %3378 = vmatprep.subr.bf16.mxu0 0
    %3379 = vmatpush1.bf16.msra.mxu0 %v3113
    %3380 = vmatprep.subr.bf16.mxu0 0
    %3381 = vmatpush1.bf16.msra.mxu0 %v3116
    %3382 = vmatprep.subr.bf16.mxu0 0
    %3383 = vmatpush1.bf16.msra.mxu0 %v3119
    %3384 = vmatprep.subr.bf16.mxu0 0
    %3385 = vmatpush1.bf16.msra.mxu0 %v3122
    %3386 = vmatprep.subr.bf16.mxu0 0
    %3387 = vmatpush1.bf16.msra.mxu0 %v3125
    %3388 = vmatprep.subr.bf16.mxu0 0
    %3389 = vmatpush1.bf16.msra.mxu0 %v3128
    %3390 = vmatprep.subr.bf16.mxu0 0
    %3391 = vmatpush1.bf16.msra.mxu0 %v3131
    %3392 = vmatprep.subr.bf16.mxu0 0
    %3393 = vmatpush1.bf16.msra.mxu0 %v3134
    %3394 = vmatprep.subr.bf16.mxu0 0
    %3395 = vmatpush1.bf16.msra.mxu0 %v3137
    %3396 = vmatprep.subr.bf16.mxu0 0
    %3397 = vmatpush1.bf16.msra.mxu0 %v3140
    %3398 = vmatprep.subr.bf16.mxu0 0
    %3399 = vmatpush1.bf16.msra.mxu0 %v3143
    %3400 = vmatprep.subr.bf16.mxu0 0
    %3401 = vmatpush1.bf16.msra.mxu0 %v3146
    %3402 = vmatprep.mubr.bf16.mxu0 %v948
    %3403 = vmatmul.mubr.bf16.gmra.mrb[0].mxu0 %v947
    %v3404 = vpop.f32.mrb[0].mxu0
    %v3405 = vadd.f32 %v3364, %v3404
    %v3406 = vpop.f32.mrb[0].mxu0
    %v3407 = vpop.f32.mrb[0].mxu0
    %v3408 = vadd.f32 %v3367, %v3407
    %v3409 = vpop.f32.mrb[0].mxu0
    %3410 = vdwg.mxu0
    %v3411 = vld [vmem:[#allocation7 + $0x20] sm:$0xff]
    %v3412 = vld [vmem:[#allocation7 + $0x28] sm:$0xff]
    %v3413 = vld [vmem:[#allocation7 + $0x50] sm:$0xff]
    %v3414 = vld [vmem:[#allocation7 + $0x58] sm:$0xff]
    %v3415 = vld [vmem:[#allocation7 + $0x80] sm:$0xff]
    %v3416 = vld [vmem:[#allocation7 + $0x88] sm:$0xff]
    %v3417 = vld [vmem:[#allocation7 + $0xb0] sm:$0xff]
    %v3418 = vld [vmem:[#allocation7 + $0xb8] sm:$0xff]
    %v3419 = vld [vmem:[#allocation7 + $0xe0] sm:$0xff]
    %v3420 = vld [vmem:[#allocation7 + $0xe8] sm:$0xff]
    %v3421 = vld [vmem:[#allocation7 + $0x110] sm:$0xff]
    %v3422 = vld [vmem:[#allocation7 + $0x118] sm:$0xff]
    %v3423 = vld [vmem:[#allocation7 + $0x140] sm:$0xff]
    %v3424 = vld [vmem:[#allocation7 + $0x148] sm:$0xff]
    %v3425 = vld [vmem:[#allocation7 + $0x170] sm:$0xff]
    %v3426 = vld [vmem:[#allocation7 + $0x178] sm:$0xff]
    %v3427 = vld [vmem:[#allocation7 + $0x1a0] sm:$0xff]
    %v3428 = vld [vmem:[#allocation7 + $0x1a8] sm:$0xff]
    %v3429 = vld [vmem:[#allocation7 + $0x1d0] sm:$0xff]
    %v3430 = vld [vmem:[#allocation7 + $0x1d8] sm:$0xff]
    %v3431 = vld [vmem:[#allocation7 + $0x200] sm:$0xff]
    %v3432 = vld [vmem:[#allocation7 + $0x208] sm:$0xff]
    %v3433 = vld [vmem:[#allocation7 + $0x230] sm:$0xff]
    %v3434 = vld [vmem:[#allocation7 + $0x238] sm:$0xff]
    %v3435 = vld [vmem:[#allocation7 + $0x260] sm:$0xff]
    %v3436 = vld [vmem:[#allocation7 + $0x268] sm:$0xff]
    %v3437 = vld [vmem:[#allocation7 + $0x290] sm:$0xff]
    %v3438 = vld [vmem:[#allocation7 + $0x298] sm:$0xff]
    %v3439 = vld [vmem:[#allocation7 + $0x2c0] sm:$0xff]
    %v3440 = vld [vmem:[#allocation7 + $0x2c8] sm:$0xff]
    %v3441 = vld [vmem:[#allocation7 + $0x2f0] sm:$0xff]
    %v3442 = vld [vmem:[#allocation7 + $0x2f8] sm:$0xff]
    %v3443 = vld [vmem:[#allocation7 + $0x320] sm:$0xff]
    %v3444 = vld [vmem:[#allocation7 + $0x328] sm:$0xff]
    %v3445 = vld [vmem:[#allocation7 + $0x350] sm:$0xff]
    %v3446 = vld [vmem:[#allocation7 + $0x358] sm:$0xff]
    %v3447 = vld [vmem:[#allocation7 + $0x380] sm:$0xff]
    %v3448 = vld [vmem:[#allocation7 + $0x388] sm:$0xff]
    %v3449 = vld [vmem:[#allocation7 + $0x3b0] sm:$0xff]
    %v3450 = vld [vmem:[#allocation7 + $0x3b8] sm:$0xff]
    %v3451 = vld [vmem:[#allocation7 + $0x3e0] sm:$0xff]
    %v3452 = vld [vmem:[#allocation7 + $0x3e8] sm:$0xff]
    %v3453 = vld [vmem:[#allocation7 + $0x410] sm:$0xff]
    %v3454 = vld [vmem:[#allocation7 + $0x418] sm:$0xff]
    %v3455 = vld [vmem:[#allocation7 + $0x440] sm:$0xff]
    %v3456 = vld [vmem:[#allocation7 + $0x448] sm:$0xff]
    %v3457 = vld [vmem:[#allocation7 + $0x470] sm:$0xff]
    %v3458 = vld [vmem:[#allocation7 + $0x478] sm:$0xff]
    %v3459 = vld [vmem:[#allocation7 + $0x4a0] sm:$0xff]
    %v3460 = vld [vmem:[#allocation7 + $0x4a8] sm:$0xff]
    %v3461 = vld [vmem:[#allocation7 + $0x4d0] sm:$0xff]
    %v3462 = vld [vmem:[#allocation7 + $0x4d8] sm:$0xff]
    %v3463 = vld [vmem:[#allocation7 + $0x500] sm:$0xff]
    %v3464 = vld [vmem:[#allocation7 + $0x508] sm:$0xff]
    %v3465 = vld [vmem:[#allocation7 + $0x530] sm:$0xff]
    %v3466 = vld [vmem:[#allocation7 + $0x538] sm:$0xff]
    %v3467 = vld [vmem:[#allocation7 + $0x560] sm:$0xff]
    %v3468 = vld [vmem:[#allocation7 + $0x568] sm:$0xff]
    %v3469 = vld [vmem:[#allocation7 + $0x590] sm:$0xff]
    %v3470 = vld [vmem:[#allocation7 + $0x598] sm:$0xff]
    %v3471 = vld [vmem:[#allocation7 + $0x5c0] sm:$0xff]
    %v3472 = vld [vmem:[#allocation7 + $0x5c8] sm:$0xff]
    %v3473 = vld [vmem:[#allocation7 + $0x5f0] sm:$0xff]
    %v3474 = vld [vmem:[#allocation7 + $0x5f8] sm:$0xff]
    %v3475 = vld [vmem:[#allocation7 + $0x620] sm:$0xff]
    %v3476 = vld [vmem:[#allocation7 + $0x628] sm:$0xff]
    %v3477 = vld [vmem:[#allocation7 + $0x650] sm:$0xff]
    %v3478 = vld [vmem:[#allocation7 + $0x658] sm:$0xff]
    %v3479 = vld [vmem:[#allocation7 + $0x680] sm:$0xff]
    %v3480 = vld [vmem:[#allocation7 + $0x688] sm:$0xff]
    %v3481 = vld [vmem:[#allocation7 + $0x6b0] sm:$0xff]
    %v3482 = vld [vmem:[#allocation7 + $0x6b8] sm:$0xff]
    %v3483 = vld [vmem:[#allocation7 + $0x6e0] sm:$0xff]
    %v3484 = vld [vmem:[#allocation7 + $0x6e8] sm:$0xff]
    %v3485 = vld [vmem:[#allocation7 + $0x710] sm:$0xff]
    %v3486 = vld [vmem:[#allocation7 + $0x718] sm:$0xff]
    %v3487 = vld [vmem:[#allocation7 + $0x740] sm:$0xff]
    %v3488 = vld [vmem:[#allocation7 + $0x748] sm:$0xff]
    %v3489 = vld [vmem:[#allocation7 + $0x770] sm:$0xff]
    %v3490 = vld [vmem:[#allocation7 + $0x778] sm:$0xff]
    %v3491 = vld [vmem:[#allocation7 + $0x7a0] sm:$0xff]
    %v3492 = vld [vmem:[#allocation7 + $0x7a8] sm:$0xff]
    %v3493 = vld [vmem:[#allocation7 + $0x7d0] sm:$0xff]
    %v3494 = vld [vmem:[#allocation7 + $0x7d8] sm:$0xff]
    %v3495 = vld [vmem:[#allocation7 + $0x800] sm:$0xff]
    %v3496 = vld [vmem:[#allocation7 + $0x808] sm:$0xff]
    %v3497 = vld [vmem:[#allocation7 + $0x830] sm:$0xff]
    %v3498 = vld [vmem:[#allocation7 + $0x838] sm:$0xff]
    %v3499 = vld [vmem:[#allocation7 + $0x860] sm:$0xff]
    %v3500 = vld [vmem:[#allocation7 + $0x868] sm:$0xff]
    %v3501 = vld [vmem:[#allocation7 + $0x890] sm:$0xff]
    %v3502 = vld [vmem:[#allocation7 + $0x898] sm:$0xff]
    %v3503 = vld [vmem:[#allocation7 + $0x8c0] sm:$0xff]
    %v3504 = vld [vmem:[#allocation7 + $0x8c8] sm:$0xff]
    %v3505 = vld [vmem:[#allocation7 + $0x8f0] sm:$0xff]
    %v3506 = vld [vmem:[#allocation7 + $0x8f8] sm:$0xff]
    %v3507 = vld [vmem:[#allocation9 + $0x8] sm:$0xf]
    %v3509 = vlaneseq
    %v3510 = vshrl.u32 %v3509, 7
    %v3511 = vsub.s32 0, %v3510
    %v3512 = vrot.slane %v3507, %v3511
    %v3513 = vlaneseq
    %v3514 = vshrl.u32 %v3513, 7
    %v3515 = vsub.s32 1, %v3514
    %v3516 = vrot.slane %v3507, %v3515
    %v3517 = vlaneseq
    %v3518 = vshrl.u32 %v3517, 7
    %v3519 = vsub.s32 2, %v3518
    %v3520 = vrot.slane %v3507, %v3519
    %v3521 = vlaneseq
    %v3522 = vshrl.u32 %v3521, 7
    %v3523 = vsub.s32 3, %v3522
    %v3524 = vrot.slane %v3507, %v3523
    %v3625 = vunpack.c.l.b16 %v3411
    %v3626 = vunpack.c.h.b16 %v3411
    %v3627 = vunpack.c.l.b16 %v3412
    %v3628 = vunpack.c.h.b16 %v3412
    %v3629 = vunpack.c.l.b16 %v3413
    %v3630 = vunpack.c.h.b16 %v3413
    %v3631 = vunpack.c.l.b16 %v3414
    %v3632 = vunpack.c.h.b16 %v3414
    %v3633 = vunpack.c.l.b16 %v3415
    %v3634 = vunpack.c.h.b16 %v3415
    %v3635 = vunpack.c.l.b16 %v3416
    %v3636 = vunpack.c.h.b16 %v3416
    %v3637 = vunpack.c.l.b16 %v3417
    %v3638 = vunpack.c.h.b16 %v3417
    %v3639 = vunpack.c.l.b16 %v3418
    %v3640 = vunpack.c.h.b16 %v3418
    %v3641 = vunpack.c.l.b16 %v3419
    %v3642 = vunpack.c.h.b16 %v3419
    %v3643 = vunpack.c.l.b16 %v3420
    %v3644 = vunpack.c.h.b16 %v3420
    %v3645 = vunpack.c.l.b16 %v3421
    %v3646 = vunpack.c.h.b16 %v3421
    %v3647 = vunpack.c.l.b16 %v3422
    %v3648 = vunpack.c.h.b16 %v3422
    %v3649 = vunpack.c.l.b16 %v3423
    %v3650 = vunpack.c.h.b16 %v3423
    %v3651 = vunpack.c.l.b16 %v3424
    %v3652 = vunpack.c.h.b16 %v3424
    %v3653 = vunpack.c.l.b16 %v3425
    %v3654 = vunpack.c.h.b16 %v3425
    %v3655 = vunpack.c.l.b16 %v3426
    %v3656 = vunpack.c.h.b16 %v3426
    %v3657 = vunpack.c.l.b16 %v3427
    %v3658 = vunpack.c.h.b16 %v3427
    %v3659 = vunpack.c.l.b16 %v3428
    %v3660 = vunpack.c.h.b16 %v3428
    %v3661 = vunpack.c.l.b16 %v3429
    %v3662 = vunpack.c.h.b16 %v3429
    %v3663 = vunpack.c.l.b16 %v3430
    %v3664 = vunpack.c.h.b16 %v3430
    %v3665 = vunpack.c.l.b16 %v3431
    %v3666 = vunpack.c.h.b16 %v3431
    %v3667 = vunpack.c.l.b16 %v3432
    %v3668 = vunpack.c.h.b16 %v3432
    %v3669 = vunpack.c.l.b16 %v3433
    %v3670 = vunpack.c.h.b16 %v3433
    %v3671 = vunpack.c.l.b16 %v3434
    %v3672 = vunpack.c.h.b16 %v3434
    %v3673 = vunpack.c.l.b16 %v3435
    %v3674 = vunpack.c.h.b16 %v3435
    %v3675 = vunpack.c.l.b16 %v3436
    %v3676 = vunpack.c.h.b16 %v3436
    %v3677 = vunpack.c.l.b16 %v3437
    %v3678 = vunpack.c.h.b16 %v3437
    %v3679 = vunpack.c.l.b16 %v3438
    %v3680 = vunpack.c.h.b16 %v3438
    %v3681 = vunpack.c.l.b16 %v3439
    %v3682 = vunpack.c.h.b16 %v3439
    %v3683 = vunpack.c.l.b16 %v3440
    %v3684 = vunpack.c.h.b16 %v3440
    %v3685 = vunpack.c.l.b16 %v3441
    %v3686 = vunpack.c.h.b16 %v3441
    %v3687 = vunpack.c.l.b16 %v3442
    %v3688 = vunpack.c.h.b16 %v3442
    %v3689 = vunpack.c.l.b16 %v3443
    %v3690 = vunpack.c.h.b16 %v3443
    %v3691 = vunpack.c.l.b16 %v3444
    %v3692 = vunpack.c.h.b16 %v3444
    %v3693 = vunpack.c.l.b16 %v3445
    %v3694 = vunpack.c.h.b16 %v3445
    %v3695 = vunpack.c.l.b16 %v3446
    %v3696 = vunpack.c.h.b16 %v3446
    %v3697 = vunpack.c.l.b16 %v3447
    %v3698 = vunpack.c.h.b16 %v3447
    %v3699 = vunpack.c.l.b16 %v3448
    %v3700 = vunpack.c.h.b16 %v3448
    %v3701 = vunpack.c.l.b16 %v3449
    %v3702 = vunpack.c.h.b16 %v3449
    %v3703 = vunpack.c.l.b16 %v3450
    %v3704 = vunpack.c.h.b16 %v3450
    %v3705 = vunpack.c.l.b16 %v3451
    %v3706 = vunpack.c.h.b16 %v3451
    %v3707 = vunpack.c.l.b16 %v3452
    %v3708 = vunpack.c.h.b16 %v3452
    %v3709 = vunpack.c.l.b16 %v3453
    %v3710 = vunpack.c.h.b16 %v3453
    %v3711 = vunpack.c.l.b16 %v3454
    %v3712 = vunpack.c.h.b16 %v3454
    %v3713 = vunpack.c.l.b16 %v3455
    %v3714 = vunpack.c.h.b16 %v3455
    %v3715 = vunpack.c.l.b16 %v3456
    %v3716 = vunpack.c.h.b16 %v3456
    %v3717 = vunpack.c.l.b16 %v3457
    %v3718 = vunpack.c.h.b16 %v3457
    %v3719 = vunpack.c.l.b16 %v3458
    %v3720 = vunpack.c.h.b16 %v3458
    %v3721 = vunpack.c.l.b16 %v3459
    %v3722 = vunpack.c.h.b16 %v3459
    %v3723 = vunpack.c.l.b16 %v3460
    %v3724 = vunpack.c.h.b16 %v3460
    %v3725 = vunpack.c.l.b16 %v3461
    %v3726 = vunpack.c.h.b16 %v3461
    %v3727 = vunpack.c.l.b16 %v3462
    %v3728 = vunpack.c.h.b16 %v3462
    %v3729 = vunpack.c.l.b16 %v3463
    %v3730 = vunpack.c.h.b16 %v3463
    %v3731 = vunpack.c.l.b16 %v3464
    %v3732 = vunpack.c.h.b16 %v3464
    %v3733 = vunpack.c.l.b16 %v3465
    %v3734 = vunpack.c.h.b16 %v3465
    %v3735 = vunpack.c.l.b16 %v3466
    %v3736 = vunpack.c.h.b16 %v3466
    %v3737 = vunpack.c.l.b16 %v3467
    %v3738 = vunpack.c.h.b16 %v3467
    %v3739 = vunpack.c.l.b16 %v3468
    %v3740 = vunpack.c.h.b16 %v3468
    %v3741 = vunpack.c.l.b16 %v3469
    %v3742 = vunpack.c.h.b16 %v3469
    %v3743 = vunpack.c.l.b16 %v3470
    %v3744 = vunpack.c.h.b16 %v3470
    %v3745 = vunpack.c.l.b16 %v3471
    %v3746 = vunpack.c.h.b16 %v3471
    %v3747 = vunpack.c.l.b16 %v3472
    %v3748 = vunpack.c.h.b16 %v3472
    %v3749 = vunpack.c.l.b16 %v3473
    %v3750 = vunpack.c.h.b16 %v3473
    %v3751 = vunpack.c.l.b16 %v3474
    %v3752 = vunpack.c.h.b16 %v3474
    %v3753 = vunpack.c.l.b16 %v3475
    %v3754 = vunpack.c.h.b16 %v3475
    %v3755 = vunpack.c.l.b16 %v3476
    %v3756 = vunpack.c.h.b16 %v3476
    %v3757 = vunpack.c.l.b16 %v3477
    %v3758 = vunpack.c.h.b16 %v3477
    %v3759 = vunpack.c.l.b16 %v3478
    %v3760 = vunpack.c.h.b16 %v3478
    %v3761 = vunpack.c.l.b16 %v3479
    %v3762 = vunpack.c.h.b16 %v3479
    %v3763 = vunpack.c.l.b16 %v3480
    %v3764 = vunpack.c.h.b16 %v3480
    %v3765 = vunpack.c.l.b16 %v3481
    %v3766 = vunpack.c.h.b16 %v3481
    %v3767 = vunpack.c.l.b16 %v3482
    %v3768 = vunpack.c.h.b16 %v3482
    %v3769 = vunpack.c.l.b16 %v3483
    %v3770 = vunpack.c.h.b16 %v3483
    %v3771 = vunpack.c.l.b16 %v3484
    %v3772 = vunpack.c.h.b16 %v3484
    %v3773 = vunpack.c.l.b16 %v3485
    %v3774 = vunpack.c.h.b16 %v3485
    %v3775 = vunpack.c.l.b16 %v3486
    %v3776 = vunpack.c.h.b16 %v3486
    %v3777 = vunpack.c.l.b16 %v3487
    %v3778 = vunpack.c.h.b16 %v3487
    %v3779 = vunpack.c.l.b16 %v3488
    %v3780 = vunpack.c.h.b16 %v3488
    %v3781 = vunpack.c.l.b16 %v3489
    %v3782 = vunpack.c.h.b16 %v3489
    %v3783 = vunpack.c.l.b16 %v3490
    %v3784 = vunpack.c.h.b16 %v3490
    %v3785 = vunpack.c.l.b16 %v3491
    %v3786 = vunpack.c.h.b16 %v3491
    %v3787 = vunpack.c.l.b16 %v3492
    %v3788 = vunpack.c.h.b16 %v3492
    %v3789 = vunpack.c.l.b16 %v3493
    %v3790 = vunpack.c.h.b16 %v3493
    %v3791 = vunpack.c.l.b16 %v3494
    %v3792 = vunpack.c.h.b16 %v3494
    %v3793 = vunpack.c.l.b16 %v3495
    %v3794 = vunpack.c.h.b16 %v3495
    %v3795 = vunpack.c.l.b16 %v3496
    %v3796 = vunpack.c.h.b16 %v3496
    %v3797 = vunpack.c.l.b16 %v3497
    %v3798 = vunpack.c.h.b16 %v3497
    %v3799 = vunpack.c.l.b16 %v3498
    %v3800 = vunpack.c.h.b16 %v3498
    %v3801 = vunpack.c.l.b16 %v3499
    %v3802 = vunpack.c.h.b16 %v3499
    %v3803 = vunpack.c.l.b16 %v3500
    %v3804 = vunpack.c.h.b16 %v3500
    %v3805 = vunpack.c.l.b16 %v3501
    %v3806 = vunpack.c.h.b16 %v3501
    %v3807 = vunpack.c.l.b16 %v3502
    %v3808 = vunpack.c.h.b16 %v3502
    %v3809 = vunpack.c.l.b16 %v3503
    %v3810 = vunpack.c.h.b16 %v3503
    %v3811 = vunpack.c.l.b16 %v3504
    %v3812 = vunpack.c.h.b16 %v3504
    %v3813 = vunpack.c.l.b16 %v3505
    %v3814 = vunpack.c.h.b16 %v3505
    %v3815 = vunpack.c.l.b16 %v3506
    %v3816 = vunpack.c.h.b16 %v3506
    %v3817 = vpack.c.b16 %v3629, %v3625
    %v3818 = vpack.c.b16 %v3630, %v3626
    %v3819 = vpack.c.b16 %v3631, %v3627
    %v3820 = vpack.c.b16 %v3632, %v3628
    %v3821 = vpack.c.b16 %v3637, %v3633
    %v3822 = vpack.c.b16 %v3638, %v3634
    %v3823 = vpack.c.b16 %v3639, %v3635
    %v3824 = vpack.c.b16 %v3640, %v3636
    %v3825 = vpack.c.b16 %v3645, %v3641
    %v3826 = vpack.c.b16 %v3646, %v3642
    %v3827 = vpack.c.b16 %v3647, %v3643
    %v3828 = vpack.c.b16 %v3648, %v3644
    %v3829 = vpack.c.b16 %v3653, %v3649
    %v3830 = vpack.c.b16 %v3654, %v3650
    %v3831 = vpack.c.b16 %v3655, %v3651
    %v3832 = vpack.c.b16 %v3656, %v3652
    %v3833 = vpack.c.b16 %v3661, %v3657
    %v3834 = vpack.c.b16 %v3662, %v3658
    %v3835 = vpack.c.b16 %v3663, %v3659
    %v3836 = vpack.c.b16 %v3664, %v3660
    %v3837 = vpack.c.b16 %v3669, %v3665
    %v3838 = vpack.c.b16 %v3670, %v3666
    %v3839 = vpack.c.b16 %v3671, %v3667
    %v3840 = vpack.c.b16 %v3672, %v3668
    %v3841 = vpack.c.b16 %v3677, %v3673
    %v3842 = vpack.c.b16 %v3678, %v3674
    %v3843 = vpack.c.b16 %v3679, %v3675
    %v3844 = vpack.c.b16 %v3680, %v3676
    %v3845 = vpack.c.b16 %v3685, %v3681
    %v3846 = vpack.c.b16 %v3686, %v3682
    %v3847 = vpack.c.b16 %v3687, %v3683
    %v3848 = vpack.c.b16 %v3688, %v3684
    %v3849 = vpack.c.b16 %v3693, %v3689
    %v3850 = vpack.c.b16 %v3694, %v3690
    %v3851 = vpack.c.b16 %v3695, %v3691
    %v3852 = vpack.c.b16 %v3696, %v3692
    %v3853 = vpack.c.b16 %v3701, %v3697
    %v3854 = vpack.c.b16 %v3702, %v3698
    %v3855 = vpack.c.b16 %v3703, %v3699
    %v3856 = vpack.c.b16 %v3704, %v3700
    %v3857 = vpack.c.b16 %v3709, %v3705
    %v3858 = vpack.c.b16 %v3710, %v3706
    %v3859 = vpack.c.b16 %v3711, %v3707
    %v3860 = vpack.c.b16 %v3712, %v3708
    %v3861 = vpack.c.b16 %v3717, %v3713
    %v3862 = vpack.c.b16 %v3718, %v3714
    %v3863 = vpack.c.b16 %v3719, %v3715
    %v3864 = vpack.c.b16 %v3720, %v3716
    %v3865 = vpack.c.b16 %v3725, %v3721
    %v3866 = vpack.c.b16 %v3726, %v3722
    %v3867 = vpack.c.b16 %v3727, %v3723
    %v3868 = vpack.c.b16 %v3728, %v3724
    %v3869 = vpack.c.b16 %v3733, %v3729
    %v3870 = vpack.c.b16 %v3734, %v3730
    %v3871 = vpack.c.b16 %v3735, %v3731
    %v3872 = vpack.c.b16 %v3736, %v3732
    %v3873 = vpack.c.b16 %v3741, %v3737
    %v3874 = vpack.c.b16 %v3742, %v3738
    %v3875 = vpack.c.b16 %v3743, %v3739
    %v3876 = vpack.c.b16 %v3744, %v3740
    %v3877 = vpack.c.b16 %v3749, %v3745
    %v3878 = vpack.c.b16 %v3750, %v3746
    %v3879 = vpack.c.b16 %v3751, %v3747
    %v3880 = vpack.c.b16 %v3752, %v3748
    %v3881 = vpack.c.b16 %v3757, %v3753
    %v3882 = vpack.c.b16 %v3758, %v3754
    %v3883 = vpack.c.b16 %v3759, %v3755
    %v3884 = vpack.c.b16 %v3760, %v3756
    %v3885 = vpack.c.b16 %v3765, %v3761
    %v3886 = vpack.c.b16 %v3766, %v3762
    %v3887 = vpack.c.b16 %v3767, %v3763
    %v3888 = vpack.c.b16 %v3768, %v3764
    %v3889 = vpack.c.b16 %v3773, %v3769
    %v3890 = vpack.c.b16 %v3774, %v3770
    %v3891 = vpack.c.b16 %v3775, %v3771
    %v3892 = vpack.c.b16 %v3776, %v3772
    %v3893 = vpack.c.b16 %v3781, %v3777
    %v3894 = vpack.c.b16 %v3782, %v3778
    %v3895 = vpack.c.b16 %v3783, %v3779
    %v3896 = vpack.c.b16 %v3784, %v3780
    %v3897 = vpack.c.b16 %v3789, %v3785
    %v3898 = vpack.c.b16 %v3790, %v3786
    %v3899 = vpack.c.b16 %v3791, %v3787
    %v3900 = vpack.c.b16 %v3792, %v3788
    %v3901 = vpack.c.b16 %v3797, %v3793
    %v3902 = vpack.c.b16 %v3798, %v3794
    %v3903 = vpack.c.b16 %v3799, %v3795
    %v3904 = vpack.c.b16 %v3800, %v3796
    %v3905 = vpack.c.b16 %v3805, %v3801
    %v3906 = vpack.c.b16 %v3806, %v3802
    %v3907 = vpack.c.b16 %v3807, %v3803
    %v3908 = vpack.c.b16 %v3808, %v3804
    %v3909 = vpack.c.b16 %v3813, %v3809
    %v3910 = vpack.c.b16 %v3814, %v3810
    %v3911 = vpack.c.b16 %v3815, %v3811
    %v3912 = vpack.c.b16 %v3816, %v3812
    %4009 = vmatprep.subr.bf16.mxu0 %v3818
    %4010 = vmatpush1.bf16.msra.mxu0 %v3817
    %4011 = vmatprep.subr.bf16.mxu0 %v3822
    %4012 = vmatpush1.bf16.msra.mxu0 %v3821
    %4013 = vmatprep.subr.bf16.mxu0 %v3826
    %4014 = vmatpush1.bf16.msra.mxu0 %v3825
    %4015 = vmatprep.subr.bf16.mxu0 %v3830
    %4016 = vmatpush1.bf16.msra.mxu0 %v3829
    %4017 = vmatprep.subr.bf16.mxu0 %v3834
    %4018 = vmatpush1.bf16.msra.mxu0 %v3833
    %4019 = vmatprep.subr.bf16.mxu0 %v3838
    %4020 = vmatpush1.bf16.msra.mxu0 %v3837
    %4021 = vmatprep.subr.bf16.mxu0 %v3842
    %4022 = vmatpush1.bf16.msra.mxu0 %v3841
    %4023 = vmatprep.subr.bf16.mxu0 %v3846
    %4024 = vmatpush1.bf16.msra.mxu0 %v3845
    %4025 = vmatprep.subr.bf16.mxu0 %v3850
    %4026 = vmatpush1.bf16.msra.mxu0 %v3849
    %4027 = vmatprep.subr.bf16.mxu0 %v3854
    %4028 = vmatpush1.bf16.msra.mxu0 %v3853
    %4029 = vmatprep.subr.bf16.mxu0 %v3858
    %4030 = vmatpush1.bf16.msra.mxu0 %v3857
    %4031 = vmatprep.subr.bf16.mxu0 %v3862
    %4032 = vmatpush1.bf16.msra.mxu0 %v3861
    %4033 = vmatprep.subr.bf16.mxu0 %v3866
    %4034 = vmatpush1.bf16.msra.mxu0 %v3865
    %4035 = vmatprep.subr.bf16.mxu0 %v3870
    %4036 = vmatpush1.bf16.msra.mxu0 %v3869
    %4037 = vmatprep.subr.bf16.mxu0 %v3874
    %4038 = vmatpush1.bf16.msra.mxu0 %v3873
    %4039 = vmatprep.subr.bf16.mxu0 %v3878
    %4040 = vmatpush1.bf16.msra.mxu0 %v3877
    %4041 = vmatprep.mubr.bf16.mxu0 %v101
    %4042 = vmatmul.mubr.bf16.gmra.mrb[0].mxu0 %v100
    %v4043 = vpop.f32.mrb[0].mxu0
    %v4044 = vadd.f32 %v3512, %v4043
    %v4045 = vpop.f32.mrb[0].mxu0
    %v4046 = vadd.f32 %v3516, %v4045
    %v4047 = vpop.f32.mrb[0].mxu0
    %v4048 = vadd.f32 %v3512, %v4047
    %v4049 = vpop.f32.mrb[0].mxu0
    %v4050 = vadd.f32 %v3516, %v4049
    %4051 = vdwg.mxu0
    %4052 = vmatprep.subr.bf16.mxu0 %v3882
    %4053 = vmatpush1.bf16.msra.mxu0 %v3881
    %4054 = vmatprep.subr.bf16.mxu0 %v3886
    %4055 = vmatpush1.bf16.msra.mxu0 %v3885
    %4056 = vmatprep.subr.bf16.mxu0 %v3890
    %4057 = vmatpush1.bf16.msra.mxu0 %v3889
    %4058 = vmatprep.subr.bf16.mxu0 %v3894
    %4059 = vmatpush1.bf16.msra.mxu0 %v3893
    %4060 = vmatprep.subr.bf16.mxu0 %v3898
    %4061 = vmatpush1.bf16.msra.mxu0 %v3897
    %4062 = vmatprep.subr.bf16.mxu0 %v3902
    %4063 = vmatpush1.bf16.msra.mxu0 %v3901
    %4064 = vmatprep.subr.bf16.mxu0 %v3906
    %4065 = vmatpush1.bf16.msra.mxu0 %v3905
    %4066 = vmatprep.subr.bf16.mxu0 %v3910
    %4067 = vmatpush1.bf16.msra.mxu0 %v3909
    %4068 = vmatprep.subr.bf16.mxu0 0
    %4069 = vmatpush1.bf16.msra.mxu0 0
    %4070 = vmatprep.subr.bf16.mxu0 0
    %4071 = vmatpush1.bf16.msra.mxu0 0
    %4072 = vmatprep.subr.bf16.mxu0 0
    %4073 = vmatpush1.bf16.msra.mxu0 0
    %4074 = vmatprep.subr.bf16.mxu0 0
    %4075 = vmatpush1.bf16.msra.mxu0 0
    %4076 = vmatprep.subr.bf16.mxu0 0
    %4077 = vmatpush1.bf16.msra.mxu0 0
    %4078 = vmatprep.subr.bf16.mxu0 0
    %4079 = vmatpush1.bf16.msra.mxu0 0
    %4080 = vmatprep.subr.bf16.mxu0 0
    %4081 = vmatpush1.bf16.msra.mxu0 0
    %4082 = vmatprep.subr.bf16.mxu0 0
    %4083 = vmatpush1.bf16.msra.mxu0 0
    %4084 = vmatprep.mubr.bf16.mxu0 0
    %4085 = vmatmul.mubr.bf16.gmra.mrb[0].mxu0 %v102
    %v4086 = vpop.f32.mrb[0].mxu0
    %v4087 = vadd.f32 %v4044, %v4086
    %v4088 = vpop.f32.mrb[0].mxu0
    %v4089 = vadd.f32 %v4046, %v4088
    %v4090 = vpop.f32.mrb[0].mxu0
    %v4091 = vadd.f32 %v4048, %v4090
    %v4092 = vpop.f32.mrb[0].mxu0
    %v4093 = vadd.f32 %v4050, %v4092
    %4094 = vdwg.mxu0
    %4095 = vmatprep.subr.bf16.mxu0 %v3820
    %4096 = vmatpush1.bf16.msra.mxu0 %v3819
    %4097 = vmatprep.subr.bf16.mxu0 %v3824
    %4098 = vmatpush1.bf16.msra.mxu0 %v3823
    %4099 = vmatprep.subr.bf16.mxu0 %v3828
    %4100 = vmatpush1.bf16.msra.mxu0 %v3827
    %4101 = vmatprep.subr.bf16.mxu0 %v3832
    %4102 = vmatpush1.bf16.msra.mxu0 %v3831
    %4103 = vmatprep.subr.bf16.mxu0 %v3836
    %4104 = vmatpush1.bf16.msra.mxu0 %v3835
    %4105 = vmatprep.subr.bf16.mxu0 %v3840
    %4106 = vmatpush1.bf16.msra.mxu0 %v3839
    %4107 = vmatprep.subr.bf16.mxu0 %v3844
    %4108 = vmatpush1.bf16.msra.mxu0 %v3843
    %4109 = vmatprep.subr.bf16.mxu0 %v3848
    %4110 = vmatpush1.bf16.msra.mxu0 %v3847
    %4111 = vmatprep.subr.bf16.mxu0 %v3852
    %4112 = vmatpush1.bf16.msra.mxu0 %v3851
    %4113 = vmatprep.subr.bf16.mxu0 %v3856
    %4114 = vmatpush1.bf16.msra.mxu0 %v3855
    %4115 = vmatprep.subr.bf16.mxu0 %v3860
    %4116 = vmatpush1.bf16.msra.mxu0 %v3859
    %4117 = vmatprep.subr.bf16.mxu0 %v3864
    %4118 = vmatpush1.bf16.msra.mxu0 %v3863
    %4119 = vmatprep.subr.bf16.mxu0 %v3868
    %4120 = vmatpush1.bf16.msra.mxu0 %v3867
    %4121 = vmatprep.subr.bf16.mxu0 %v3872
    %4122 = vmatpush1.bf16.msra.mxu0 %v3871
    %4123 = vmatprep.subr.bf16.mxu0 %v3876
    %4124 = vmatpush1.bf16.msra.mxu0 %v3875
    %4125 = vmatprep.subr.bf16.mxu0 %v3880
    %4126 = vmatpush1.bf16.msra.mxu0 %v3879
    %4127 = vmatprep.mubr.bf16.mxu0 %v101
    %4128 = vmatmul.mubr.bf16.gmra.mrb[0].mxu0 %v100
    %v4129 = vpop.f32.mrb[0].mxu0
    %v4130 = vadd.f32 %v3520, %v4129
    %v4131 = vpop.f32.mrb[0].mxu0
    %v4132 = vadd.f32 %v3524, %v4131
    %v4133 = vpop.f32.mrb[0].mxu0
    %v4134 = vadd.f32 %v3520, %v4133
    %v4135 = vpop.f32.mrb[0].mxu0
    %v4136 = vadd.f32 %v3524, %v4135
    %4137 = vdwg.mxu0
    %4138 = vmatprep.subr.bf16.mxu0 %v3884
    %4139 = vmatpush1.bf16.msra.mxu0 %v3883
    %4140 = vmatprep.subr.bf16.mxu0 %v3888
    %4141 = vmatpush1.bf16.msra.mxu0 %v3887
    %4142 = vmatprep.subr.bf16.mxu0 %v3892
    %4143 = vmatpush1.bf16.msra.mxu0 %v3891
    %4144 = vmatprep.subr.bf16.mxu0 %v3896
    %4145 = vmatpush1.bf16.msra.mxu0 %v3895
    %4146 = vmatprep.subr.bf16.mxu0 %v3900
    %4147 = vmatpush1.bf16.msra.mxu0 %v3899
    %4148 = vmatprep.subr.bf16.mxu0 %v3904
    %4149 = vmatpush1.bf16.msra.mxu0 %v3903
    %4150 = vmatprep.subr.bf16.mxu0 %v3908
    %4151 = vmatpush1.bf16.msra.mxu0 %v3907
    %4152 = vmatprep.subr.bf16.mxu0 %v3912
    %4153 = vmatpush1.bf16.msra.mxu0 %v3911
    %4154 = vmatprep.subr.bf16.mxu0 0
    %4155 = vmatpush1.bf16.msra.mxu0 0
    %4156 = vmatprep.subr.bf16.mxu0 0
    %4157 = vmatpush1.bf16.msra.mxu0 0
    %4158 = vmatprep.subr.bf16.mxu0 0
    %4159 = vmatpush1.bf16.msra.mxu0 0
    %4160 = vmatprep.subr.bf16.mxu0 0
    %4161 = vmatpush1.bf16.msra.mxu0 0
    %4162 = vmatprep.subr.bf16.mxu0 0
    %4163 = vmatpush1.bf16.msra.mxu0 0
    %4164 = vmatprep.subr.bf16.mxu0 0
    %4165 = vmatpush1.bf16.msra.mxu0 0
    %4166 = vmatprep.subr.bf16.mxu0 0
    %4167 = vmatpush1.bf16.msra.mxu0 0
    %4168 = vmatprep.subr.bf16.mxu0 0
    %4169 = vmatpush1.bf16.msra.mxu0 0
    %4170 = vmatprep.mubr.bf16.mxu0 0
    %4171 = vmatmul.mubr.bf16.gmra.mrb[0].mxu0 %v102
    %v4172 = vpop.f32.mrb[0].mxu0
    %v4173 = vadd.f32 %v4130, %v4172
    %v4174 = vpop.f32.mrb[0].mxu0
    %v4175 = vadd.f32 %v4132, %v4174
    %v4176 = vpop.f32.mrb[0].mxu0
    %v4177 = vadd.f32 %v4134, %v4176
    %v4178 = vpop.f32.mrb[0].mxu0
    %v4179 = vadd.f32 %v4136, %v4178
    %4180 = vdwg.mxu0
    %v4181 = vmul.f32 %v4087, 0.044715
    %v4182 = vmul.f32 %v4089, 0.044715
    %v4183 = vmul.f32 %v4173, 0.044715
    %v4184 = vmul.f32 %v4175, 0.044715
    %v4185 = vmul.f32 %v4091, 0.044715
    %v4186 = vmul.f32 %v4093, 0.044715
    %v4187 = vmul.f32 %v4177, 0.044715
    %v4188 = vmul.f32 %v4179, 0.044715
    %v4189 = vmul.f32 %v4181, %v4087
    %v4190 = vmul.f32 %v4182, %v4089
    %v4191 = vmul.f32 %v4183, %v4173
    %v4192 = vmul.f32 %v4184, %v4175
    %v4193 = vmul.f32 %v4185, %v4091
    %v4194 = vmul.f32 %v4186, %v4093
    %v4195 = vmul.f32 %v4187, %v4177
    %v4196 = vmul.f32 %v4188, %v4179
    %v4197 = vmul.f32 %v4189, %v4087
    %v4198 = vmul.f32 %v4190, %v4089
    %v4199 = vmul.f32 %v4191, %v4173
    %v4200 = vmul.f32 %v4192, %v4175
    %v4201 = vmul.f32 %v4193, %v4091
    %v4202 = vmul.f32 %v4194, %v4093
    %v4203 = vmul.f32 %v4195, %v4177
    %v4204 = vmul.f32 %v4196, %v4179
    %v4205 = vadd.f32 %v4087, %v4197
    %v4206 = vadd.f32 %v4089, %v4198
    %v4207 = vadd.f32 %v4173, %v4199
    %v4208 = vadd.f32 %v4175, %v4200
    %v4209 = vadd.f32 %v4091, %v4201
    %v4210 = vadd.f32 %v4093, %v4202
    %v4211 = vadd.f32 %v4177, %v4203
    %v4212 = vadd.f32 %v4179, %v4204
    %v4213 = vmul.f32 %v4205, 0.7978846
    %v4214 = vmul.f32 %v4206, 0.7978846
    %v4215 = vmul.f32 %v4207, 0.7978846
    %v4216 = vmul.f32 %v4208, 0.7978846
    %v4217 = vmul.f32 %v4209, 0.7978846
    %v4218 = vmul.f32 %v4210, 0.7978846
    %v4219 = vmul.f32 %v4211, 0.7978846
    %v4220 = vmul.f32 %v4212, 0.7978846
    %v4221 = vtanh.pop %v4213
    %v4222 = vtanh.pop %v4214
    %v4223 = vtanh.pop %v4215
    %v4224 = vtanh.pop %v4216
    %v4225 = vtanh.pop %v4217
    %v4226 = vtanh.pop %v4218
    %v4227 = vtanh.pop %v4219
    %v4228 = vtanh.pop %v4220
    %v4229 = vadd.f32 %v4221, 1.0
    %v4230 = vadd.f32 %v4222, 1.0
    %v4231 = vadd.f32 %v4223, 1.0
    %v4232 = vadd.f32 %v4224, 1.0
    %v4233 = vadd.f32 %v4225, 1.0
    %v4234 = vadd.f32 %v4226, 1.0
    %v4235 = vadd.f32 %v4227, 1.0
    %v4236 = vadd.f32 %v4228, 1.0
    %v4237 = vmul.f32 %v4229, 0.5
    %v4238 = vmul.f32 %v4230, 0.5
    %v4239 = vmul.f32 %v4231, 0.5
    %v4240 = vmul.f32 %v4232, 0.5
    %v4241 = vmul.f32 %v4233, 0.5
    %v4242 = vmul.f32 %v4234, 0.5
    %v4243 = vmul.f32 %v4235, 0.5
    %v4244 = vmul.f32 %v4236, 0.5
    %v4245 = vmul.f32 %v4087, %v4237
    %v4246 = vmul.f32 %v4089, %v4238
    %v4247 = vmul.f32 %v4173, %v4239
    %v4248 = vmul.f32 %v4175, %v4240
    %v4249 = vmul.f32 %v4091, %v4241
    %v4250 = vmul.f32 %v4093, %v4242
    %v4251 = vmul.f32 %v4177, %v4243
    %v4252 = vmul.f32 %v4179, %v4244
    %v4253 = vpack.c.bf16 %v4249, %v4245
    %v4254 = vpack.c.bf16 %v4250, %v4246
    %v4255 = vpack.c.bf16 %v4251, %v4247
    %v4256 = vpack.c.bf16 %v4252, %v4248
    %v4257 = vld [vmem:[#allocation10 + $0x600] sm:$0xff]
    %v4258 = vld [vmem:[#allocation10 + $0x608] sm:$0xf]
    %v4259 = vld [vmem:[#allocation10 + $0x60c] sm:$0xff]
    %v4260 = vld [vmem:[#allocation10 + $0x614] sm:$0xf]
    %v4261 = vld [vmem:[#allocation10 + $0x618] sm:$0xff]
    %v4262 = vld [vmem:[#allocation10 + $0x620] sm:$0xf]
    %v4263 = vld [vmem:[#allocation10 + $0x624] sm:$0xff]
    %v4264 = vld [vmem:[#allocation10 + $0x62c] sm:$0xf]
    %v4265 = vld [vmem:[#allocation10 + $0x630] sm:$0xff]
    %v4266 = vld [vmem:[#allocation10 + $0x638] sm:$0xf]
    %v4267 = vld [vmem:[#allocation10 + $0x63c] sm:$0xff]
    %v4268 = vld [vmem:[#allocation10 + $0x644] sm:$0xf]
    %v4269 = vld [vmem:[#allocation10 + $0x648] sm:$0xff]
    %v4270 = vld [vmem:[#allocation10 + $0x650] sm:$0xf]
    %v4271 = vld [vmem:[#allocation10 + $0x654] sm:$0xff]
    %v4272 = vld [vmem:[#allocation10 + $0x65c] sm:$0xf]
    %v4273 = vld [vmem:[#allocation10 + $0x660] sm:$0xff]
    %v4274 = vld [vmem:[#allocation10 + $0x668] sm:$0xf]
    %v4275 = vld [vmem:[#allocation10 + $0x66c] sm:$0xff]
    %v4276 = vld [vmem:[#allocation10 + $0x674] sm:$0xf]
    %v4277 = vld [vmem:[#allocation10 + $0x678] sm:$0xff]
    %v4278 = vld [vmem:[#allocation10 + $0x680] sm:$0xf]
    %v4279 = vld [vmem:[#allocation10 + $0x684] sm:$0xff]
    %v4280 = vld [vmem:[#allocation10 + $0x68c] sm:$0xf]
    %v4281 = vld [vmem:[#allocation10 + $0x690] sm:$0xff]
    %v4282 = vld [vmem:[#allocation10 + $0x698] sm:$0xf]
    %v4283 = vld [vmem:[#allocation10 + $0x69c] sm:$0xff]
    %v4284 = vld [vmem:[#allocation10 + $0x6a4] sm:$0xf]
    %v4285 = vld [vmem:[#allocation10 + $0x6a8] sm:$0xff]
    %v4286 = vld [vmem:[#allocation10 + $0x6b0] sm:$0xf]
    %v4287 = vld [vmem:[#allocation10 + $0x6b4] sm:$0xff]
    %v4288 = vld [vmem:[#allocation10 + $0x6bc] sm:$0xf]
    %v4289 = vld [vmem:[#allocation10 + $0x6c0] sm:$0xff]
    %v4290 = vld [vmem:[#allocation10 + $0x6c8] sm:$0xf]
    %v4291 = vld [vmem:[#allocation10 + $0x6cc] sm:$0xff]
    %v4292 = vld [vmem:[#allocation10 + $0x6d4] sm:$0xf]
    %v4293 = vld [vmem:[#allocation10 + $0x6d8] sm:$0xff]
    %v4294 = vld [vmem:[#allocation10 + $0x6e0] sm:$0xf]
    %v4295 = vld [vmem:[#allocation10 + $0x6e4] sm:$0xff]
    %v4296 = vld [vmem:[#allocation10 + $0x6ec] sm:$0xf]
    %v4297 = vld [vmem:[#allocation10 + $0x6f0] sm:$0xff]
    %v4298 = vld [vmem:[#allocation10 + $0x6f8] sm:$0xf]
    %v4299 = vld [vmem:[#allocation10 + $0x6fc] sm:$0xff]
    %v4300 = vld [vmem:[#allocation10 + $0x704] sm:$0xf]
    %v4301 = vld [vmem:[#allocation10 + $0x708] sm:$0xff]
    %v4302 = vld [vmem:[#allocation10 + $0x710] sm:$0xf]
    %v4303 = vld [vmem:[#allocation10 + $0x714] sm:$0xff]
    %v4304 = vld [vmem:[#allocation10 + $0x71c] sm:$0xf]
    %v4305 = vld [vmem:[#allocation10 + $0x720] sm:$0xff]
    %v4306 = vld [vmem:[#allocation10 + $0x728] sm:$0xf]
    %v4307 = vld [vmem:[#allocation10 + $0x72c] sm:$0xff]
    %v4308 = vld [vmem:[#allocation10 + $0x734] sm:$0xf]
    %v4309 = vld [vmem:[#allocation10 + $0x738] sm:$0xff]
    %v4310 = vld [vmem:[#allocation10 + $0x740] sm:$0xf]
    %v4311 = vld [vmem:[#allocation10 + $0x744] sm:$0xff]
    %v4312 = vld [vmem:[#allocation10 + $0x74c] sm:$0xf]
    %v4313 = vld [vmem:[#allocation10 + $0x750] sm:$0xff]
    %v4314 = vld [vmem:[#allocation10 + $0x758] sm:$0xf]
    %v4315 = vld [vmem:[#allocation10 + $0x75c] sm:$0xff]
    %v4316 = vld [vmem:[#allocation10 + $0x764] sm:$0xf]
    %v4317 = vld [vmem:[#allocation10 + $0x768] sm:$0xff]
    %v4318 = vld [vmem:[#allocation10 + $0x770] sm:$0xf]
    %v4319 = vld [vmem:[#allocation10 + $0x774] sm:$0xff]
    %v4320 = vld [vmem:[#allocation10 + $0x77c] sm:$0xf]
    %v4321 = vld [vmem:[#allocation10 + $0x780] sm:$0xff]
    %v4322 = vld [vmem:[#allocation10 + $0x788] sm:$0xf]
    %v4323 = vld [vmem:[#allocation10 + $0x78c] sm:$0xff]
    %v4324 = vld [vmem:[#allocation10 + $0x794] sm:$0xf]
    %v4325 = vld [vmem:[#allocation10 + $0x798] sm:$0xff]
    %v4326 = vld [vmem:[#allocation10 + $0x7a0] sm:$0xf]
    %v4327 = vld [vmem:[#allocation10 + $0x7a4] sm:$0xff]
    %v4328 = vld [vmem:[#allocation10 + $0x7ac] sm:$0xf]
    %v4329 = vld [vmem:[#allocation10 + $0x7b0] sm:$0xff]
    %v4330 = vld [vmem:[#allocation10 + $0x7b8] sm:$0xf]
    %v4331 = vld [vmem:[#allocation10 + $0x7bc] sm:$0xff]
    %v4332 = vld [vmem:[#allocation10 + $0x7c4] sm:$0xf]
    %v4333 = vld [vmem:[#allocation10 + $0x7c8] sm:$0xff]
    %v4334 = vld [vmem:[#allocation10 + $0x7d0] sm:$0xf]
    %v4335 = vld [vmem:[#allocation10 + $0x7d4] sm:$0xff]
    %v4336 = vld [vmem:[#allocation10 + $0x7dc] sm:$0xf]
    %v4337 = vld [vmem:[#allocation10 + $0x7e0] sm:$0xff]
    %v4338 = vld [vmem:[#allocation10 + $0x7e8] sm:$0xf]
    %v4339 = vld [vmem:[#allocation10 + $0x7ec] sm:$0xff]
    %v4340 = vld [vmem:[#allocation10 + $0x7f4] sm:$0xf]
    %v4341 = vld [vmem:[#allocation10 + $0x7f8] sm:$0xff]
    %v4342 = vld [vmem:[#allocation10 + $0x800] sm:$0xf]
    %v4343 = vld [vmem:[#allocation10 + $0x804] sm:$0xff]
    %v4344 = vld [vmem:[#allocation10 + $0x80c] sm:$0xf]
    %v4345 = vld [vmem:[#allocation10 + $0x810] sm:$0xff]
    %v4346 = vld [vmem:[#allocation10 + $0x818] sm:$0xf]
    %v4347 = vld [vmem:[#allocation10 + $0x81c] sm:$0xff]
    %v4348 = vld [vmem:[#allocation10 + $0x824] sm:$0xf]
    %v4349 = vld [vmem:[#allocation10 + $0x828] sm:$0xff]
    %v4350 = vld [vmem:[#allocation10 + $0x830] sm:$0xf]
    %v4351 = vld [vmem:[#allocation10 + $0x834] sm:$0xff]
    %v4352 = vld [vmem:[#allocation10 + $0x83c] sm:$0xf]
    %v4353 = vld [vmem:[#allocation10 + $0x840] sm:$0xff]
    %v4354 = vld [vmem:[#allocation10 + $0x848] sm:$0xf]
    %v4355 = vld [vmem:[#allocation10 + $0x84c] sm:$0xff]
    %v4356 = vld [vmem:[#allocation10 + $0x854] sm:$0xf]
    %v4357 = vld [vmem:[#allocation10 + $0x858] sm:$0xff]
    %v4358 = vld [vmem:[#allocation10 + $0x860] sm:$0xf]
    %v4359 = vld [vmem:[#allocation10 + $0x864] sm:$0xff]
    %v4360 = vld [vmem:[#allocation10 + $0x86c] sm:$0xf]
    %v4361 = vld [vmem:[#allocation10 + $0x870] sm:$0xff]
    %v4362 = vld [vmem:[#allocation10 + $0x878] sm:$0xf]
    %v4363 = vld [vmem:[#allocation10 + $0x87c] sm:$0xff]
    %v4364 = vld [vmem:[#allocation10 + $0x884] sm:$0xf]
    %v4365 = vld [vmem:[#allocation10 + $0x888] sm:$0xff]
    %v4366 = vld [vmem:[#allocation10 + $0x890] sm:$0xf]
    %v4367 = vld [vmem:[#allocation10 + $0x894] sm:$0xff]
    %v4368 = vld [vmem:[#allocation10 + $0x89c] sm:$0xf]
    %v4369 = vld [vmem:[#allocation10 + $0x8a0] sm:$0xff]
    %v4370 = vld [vmem:[#allocation10 + $0x8a8] sm:$0xf]
    %v4371 = vld [vmem:[#allocation10 + $0x8ac] sm:$0xff]
    %v4372 = vld [vmem:[#allocation10 + $0x8b4] sm:$0xf]
    %v4373 = vld [vmem:[#allocation10 + $0x8b8] sm:$0xff]
    %v4374 = vld [vmem:[#allocation10 + $0x8c0] sm:$0xf]
    %v4375 = vld [vmem:[#allocation10 + $0x8c4] sm:$0xff]
    %v4376 = vld [vmem:[#allocation10 + $0x8cc] sm:$0xf]
    %v4377 = vld [vmem:[#allocation10 + $0x8d0] sm:$0xff]
    %v4378 = vld [vmem:[#allocation10 + $0x8d8] sm:$0xf]
    %v4379 = vld [vmem:[#allocation10 + $0x8dc] sm:$0xff]
    %v4380 = vld [vmem:[#allocation10 + $0x8e4] sm:$0xf]
    %v4381 = vld [vmem:[#allocation10 + $0x8e8] sm:$0xff]
    %v4382 = vld [vmem:[#allocation10 + $0x8f0] sm:$0xf]
    %v4383 = vld [vmem:[#allocation10 + $0x8f4] sm:$0xff]
    %v4384 = vld [vmem:[#allocation10 + $0x8fc] sm:$0xf]
    %v4513 = vunpack.c.l.b16 %v4257
    %v4514 = vunpack.c.h.b16 %v4257
    %v4515 = vunpack.c.l.b16 %v4258
    %v4516 = vunpack.c.l.b16 %v4259
    %v4517 = vunpack.c.h.b16 %v4259
    %v4518 = vunpack.c.l.b16 %v4260
    %v4519 = vunpack.c.l.b16 %v4261
    %v4520 = vunpack.c.h.b16 %v4261
    %v4521 = vunpack.c.l.b16 %v4262
    %v4522 = vunpack.c.l.b16 %v4263
    %v4523 = vunpack.c.h.b16 %v4263
    %v4524 = vunpack.c.l.b16 %v4264
    %v4525 = vunpack.c.l.b16 %v4265
    %v4526 = vunpack.c.h.b16 %v4265
    %v4527 = vunpack.c.l.b16 %v4266
    %v4528 = vunpack.c.l.b16 %v4267
    %v4529 = vunpack.c.h.b16 %v4267
    %v4530 = vunpack.c.l.b16 %v4268
    %v4531 = vunpack.c.l.b16 %v4269
    %v4532 = vunpack.c.h.b16 %v4269
    %v4533 = vunpack.c.l.b16 %v4270
    %v4534 = vunpack.c.l.b16 %v4271
    %v4535 = vunpack.c.h.b16 %v4271
    %v4536 = vunpack.c.l.b16 %v4272
    %v4537 = vunpack.c.l.b16 %v4273
    %v4538 = vunpack.c.h.b16 %v4273
    %v4539 = vunpack.c.l.b16 %v4274
    %v4540 = vunpack.c.l.b16 %v4275
    %v4541 = vunpack.c.h.b16 %v4275
    %v4542 = vunpack.c.l.b16 %v4276
    %v4543 = vunpack.c.l.b16 %v4277
    %v4544 = vunpack.c.h.b16 %v4277
    %v4545 = vunpack.c.l.b16 %v4278
    %v4546 = vunpack.c.l.b16 %v4279
    %v4547 = vunpack.c.h.b16 %v4279
    %v4548 = vunpack.c.l.b16 %v4280
    %v4549 = vunpack.c.l.b16 %v4281
    %v4550 = vunpack.c.h.b16 %v4281
    %v4551 = vunpack.c.l.b16 %v4282
    %v4552 = vunpack.c.l.b16 %v4283
    %v4553 = vunpack.c.h.b16 %v4283
    %v4554 = vunpack.c.l.b16 %v4284
    %v4555 = vunpack.c.l.b16 %v4285
    %v4556 = vunpack.c.h.b16 %v4285
    %v4557 = vunpack.c.l.b16 %v4286
    %v4558 = vunpack.c.l.b16 %v4287
    %v4559 = vunpack.c.h.b16 %v4287
    %v4560 = vunpack.c.l.b16 %v4288
    %v4561 = vunpack.c.l.b16 %v4289
    %v4562 = vunpack.c.h.b16 %v4289
    %v4563 = vunpack.c.l.b16 %v4290
    %v4564 = vunpack.c.l.b16 %v4291
    %v4565 = vunpack.c.h.b16 %v4291
    %v4566 = vunpack.c.l.b16 %v4292
    %v4567 = vunpack.c.l.b16 %v4293
    %v4568 = vunpack.c.h.b16 %v4293
    %v4569 = vunpack.c.l.b16 %v4294
    %v4570 = vunpack.c.l.b16 %v4295
    %v4571 = vunpack.c.h.b16 %v4295
    %v4572 = vunpack.c.l.b16 %v4296
    %v4573 = vunpack.c.l.b16 %v4297
    %v4574 = vunpack.c.h.b16 %v4297
    %v4575 = vunpack.c.l.b16 %v4298
    %v4576 = vunpack.c.l.b16 %v4299
    %v4577 = vunpack.c.h.b16 %v4299
    %v4578 = vunpack.c.l.b16 %v4300
    %v4579 = vunpack.c.l.b16 %v4301
    %v4580 = vunpack.c.h.b16 %v4301
    %v4581 = vunpack.c.l.b16 %v4302
    %v4582 = vunpack.c.l.b16 %v4303
    %v4583 = vunpack.c.h.b16 %v4303
    %v4584 = vunpack.c.l.b16 %v4304
    %v4585 = vunpack.c.l.b16 %v4305
    %v4586 = vunpack.c.h.b16 %v4305
    %v4587 = vunpack.c.l.b16 %v4306
    %v4588 = vunpack.c.l.b16 %v4307
    %v4589 = vunpack.c.h.b16 %v4307
    %v4590 = vunpack.c.l.b16 %v4308
    %v4591 = vunpack.c.l.b16 %v4309
    %v4592 = vunpack.c.h.b16 %v4309
    %v4593 = vunpack.c.l.b16 %v4310
    %v4594 = vunpack.c.l.b16 %v4311
    %v4595 = vunpack.c.h.b16 %v4311
    %v4596 = vunpack.c.l.b16 %v4312
    %v4597 = vunpack.c.l.b16 %v4313
    %v4598 = vunpack.c.h.b16 %v4313
    %v4599 = vunpack.c.l.b16 %v4314
    %v4600 = vunpack.c.l.b16 %v4315
    %v4601 = vunpack.c.h.b16 %v4315
    %v4602 = vunpack.c.l.b16 %v4316
    %v4603 = vunpack.c.l.b16 %v4317
    %v4604 = vunpack.c.h.b16 %v4317
    %v4605 = vunpack.c.l.b16 %v4318
    %v4606 = vunpack.c.l.b16 %v4319
    %v4607 = vunpack.c.h.b16 %v4319
    %v4608 = vunpack.c.l.b16 %v4320
    %v4609 = vunpack.c.l.b16 %v4321
    %v4610 = vunpack.c.h.b16 %v4321
    %v4611 = vunpack.c.l.b16 %v4322
    %v4612 = vunpack.c.l.b16 %v4323
    %v4613 = vunpack.c.h.b16 %v4323
    %v4614 = vunpack.c.l.b16 %v4324
    %v4615 = vunpack.c.l.b16 %v4325
    %v4616 = vunpack.c.h.b16 %v4325
    %v4617 = vunpack.c.l.b16 %v4326
    %v4618 = vunpack.c.l.b16 %v4327
    %v4619 = vunpack.c.h.b16 %v4327
    %v4620 = vunpack.c.l.b16 %v4328
    %v4621 = vunpack.c.l.b16 %v4329
    %v4622 = vunpack.c.h.b16 %v4329
    %v4623 = vunpack.c.l.b16 %v4330
    %v4624 = vunpack.c.l.b16 %v4331
    %v4625 = vunpack.c.h.b16 %v4331
    %v4626 = vunpack.c.l.b16 %v4332
    %v4627 = vunpack.c.l.b16 %v4333
    %v4628 = vunpack.c.h.b16 %v4333
    %v4629 = vunpack.c.l.b16 %v4334
    %v4630 = vunpack.c.l.b16 %v4335
    %v4631 = vunpack.c.h.b16 %v4335
    %v4632 = vunpack.c.l.b16 %v4336
    %v4633 = vunpack.c.l.b16 %v4337
    %v4634 = vunpack.c.h.b16 %v4337
    %v4635 = vunpack.c.l.b16 %v4338
    %v4636 = vunpack.c.l.b16 %v4339
    %v4637 = vunpack.c.h.b16 %v4339
    %v4638 = vunpack.c.l.b16 %v4340
    %v4639 = vunpack.c.l.b16 %v4341
    %v4640 = vunpack.c.h.b16 %v4341
    %v4641 = vunpack.c.l.b16 %v4342
    %v4642 = vunpack.c.l.b16 %v4343
    %v4643 = vunpack.c.h.b16 %v4343
    %v4644 = vunpack.c.l.b16 %v4344
    %v4645 = vunpack.c.l.b16 %v4345
    %v4646 = vunpack.c.h.b16 %v4345
    %v4647 = vunpack.c.l.b16 %v4346
    %v4648 = vunpack.c.l.b16 %v4347
    %v4649 = vunpack.c.h.b16 %v4347
    %v4650 = vunpack.c.l.b16 %v4348
    %v4651 = vunpack.c.l.b16 %v4349
    %v4652 = vunpack.c.h.b16 %v4349
    %v4653 = vunpack.c.l.b16 %v4350
    %v4654 = vunpack.c.l.b16 %v4351
    %v4655 = vunpack.c.h.b16 %v4351
    %v4656 = vunpack.c.l.b16 %v4352
    %v4657 = vunpack.c.l.b16 %v4353
    %v4658 = vunpack.c.h.b16 %v4353
    %v4659 = vunpack.c.l.b16 %v4354
    %v4660 = vunpack.c.l.b16 %v4355
    %v4661 = vunpack.c.h.b16 %v4355
    %v4662 = vunpack.c.l.b16 %v4356
    %v4663 = vunpack.c.l.b16 %v4357
    %v4664 = vunpack.c.h.b16 %v4357
    %v4665 = vunpack.c.l.b16 %v4358
    %v4666 = vunpack.c.l.b16 %v4359
    %v4667 = vunpack.c.h.b16 %v4359
    %v4668 = vunpack.c.l.b16 %v4360
    %v4669 = vunpack.c.l.b16 %v4361
    %v4670 = vunpack.c.h.b16 %v4361
    %v4671 = vunpack.c.l.b16 %v4362
    %v4672 = vunpack.c.l.b16 %v4363
    %v4673 = vunpack.c.h.b16 %v4363
    %v4674 = vunpack.c.l.b16 %v4364
    %v4675 = vunpack.c.l.b16 %v4365
    %v4676 = vunpack.c.h.b16 %v4365
    %v4677 = vunpack.c.l.b16 %v4366
    %v4678 = vunpack.c.l.b16 %v4367
    %v4679 = vunpack.c.h.b16 %v4367
    %v4680 = vunpack.c.l.b16 %v4368
    %v4681 = vunpack.c.l.b16 %v4369
    %v4682 = vunpack.c.h.b16 %v4369
    %v4683 = vunpack.c.l.b16 %v4370
    %v4684 = vunpack.c.l.b16 %v4371
    %v4685 = vunpack.c.h.b16 %v4371
    %v4686 = vunpack.c.l.b16 %v4372
    %v4687 = vunpack.c.l.b16 %v4373
    %v4688 = vunpack.c.h.b16 %v4373
    %v4689 = vunpack.c.l.b16 %v4374
    %v4690 = vunpack.c.l.b16 %v4375
    %v4691 = vunpack.c.h.b16 %v4375
    %v4692 = vunpack.c.l.b16 %v4376
    %v4693 = vunpack.c.l.b16 %v4377
    %v4694 = vunpack.c.h.b16 %v4377
    %v4695 = vunpack.c.l.b16 %v4378
    %v4696 = vunpack.c.l.b16 %v4379
    %v4697 = vunpack.c.h.b16 %v4379
    %v4698 = vunpack.c.l.b16 %v4380
    %v4699 = vunpack.c.l.b16 %v4381
    %v4700 = vunpack.c.h.b16 %v4381
    %v4701 = vunpack.c.l.b16 %v4382
    %v4702 = vunpack.c.l.b16 %v4383
    %v4703 = vunpack.c.h.b16 %v4383
    %v4704 = vunpack.c.l.b16 %v4384
    %v4705 = vpack.c.b16 %v4516, %v4513
    %v4706 = vpack.c.b16 %v4517, %v4514
    %v4707 = vpack.c.b16 %v4518, %v4515
    %v4708 = vpack.c.b16 %v4522, %v4519
    %v4709 = vpack.c.b16 %v4523, %v4520
    %v4710 = vpack.c.b16 %v4524, %v4521
    %v4711 = vpack.c.b16 %v4528, %v4525
    %v4712 = vpack.c.b16 %v4529, %v4526
    %v4713 = vpack.c.b16 %v4530, %v4527
    %v4714 = vpack.c.b16 %v4534, %v4531
    %v4715 = vpack.c.b16 %v4535, %v4532
    %v4716 = vpack.c.b16 %v4536, %v4533
    %v4717 = vpack.c.b16 %v4540, %v4537
    %v4718 = vpack.c.b16 %v4541, %v4538
    %v4719 = vpack.c.b16 %v4542, %v4539
    %v4720 = vpack.c.b16 %v4546, %v4543
    %v4721 = vpack.c.b16 %v4547, %v4544
    %v4722 = vpack.c.b16 %v4548, %v4545
    %v4723 = vpack.c.b16 %v4552, %v4549
    %v4724 = vpack.c.b16 %v4553, %v4550
    %v4725 = vpack.c.b16 %v4554, %v4551
    %v4726 = vpack.c.b16 %v4558, %v4555
    %v4727 = vpack.c.b16 %v4559, %v4556
    %v4728 = vpack.c.b16 %v4560, %v4557
    %v4729 = vpack.c.b16 %v4564, %v4561
    %v4730 = vpack.c.b16 %v4565, %v4562
    %v4731 = vpack.c.b16 %v4566, %v4563
    %v4732 = vpack.c.b16 %v4570, %v4567
    %v4733 = vpack.c.b16 %v4571, %v4568
    %v4734 = vpack.c.b16 %v4572, %v4569
    %v4735 = vpack.c.b16 %v4576, %v4573
    %v4736 = vpack.c.b16 %v4577, %v4574
    %v4737 = vpack.c.b16 %v4578, %v4575
    %v4738 = vpack.c.b16 %v4582, %v4579
    %v4739 = vpack.c.b16 %v4583, %v4580
    %v4740 = vpack.c.b16 %v4584, %v4581
    %v4741 = vpack.c.b16 %v4588, %v4585
    %v4742 = vpack.c.b16 %v4589, %v4586
    %v4743 = vpack.c.b16 %v4590, %v4587
    %v4744 = vpack.c.b16 %v4594, %v4591
    %v4745 = vpack.c.b16 %v4595, %v4592
    %v4746 = vpack.c.b16 %v4596, %v4593
    %v4747 = vpack.c.b16 %v4600, %v4597
    %v4748 = vpack.c.b16 %v4601, %v4598
    %v4749 = vpack.c.b16 %v4602, %v4599
    %v4750 = vpack.c.b16 %v4606, %v4603
    %v4751 = vpack.c.b16 %v4607, %v4604
    %v4752 = vpack.c.b16 %v4608, %v4605
    %v4753 = vpack.c.b16 %v4612, %v4609
    %v4754 = vpack.c.b16 %v4613, %v4610
    %v4755 = vpack.c.b16 %v4614, %v4611
    %v4756 = vpack.c.b16 %v4618, %v4615
    %v4757 = vpack.c.b16 %v4619, %v4616
    %v4758 = vpack.c.b16 %v4620, %v4617
    %v4759 = vpack.c.b16 %v4624, %v4621
    %v4760 = vpack.c.b16 %v4625, %v4622
    %v4761 = vpack.c.b16 %v4626, %v4623
    %v4762 = vpack.c.b16 %v4630, %v4627
    %v4763 = vpack.c.b16 %v4631, %v4628
    %v4764 = vpack.c.b16 %v4632, %v4629
    %v4765 = vpack.c.b16 %v4636, %v4633
    %v4766 = vpack.c.b16 %v4637, %v4634
    %v4767 = vpack.c.b16 %v4638, %v4635
    %v4768 = vpack.c.b16 %v4642, %v4639
    %v4769 = vpack.c.b16 %v4643, %v4640
    %v4770 = vpack.c.b16 %v4644, %v4641
    %v4771 = vpack.c.b16 %v4648, %v4645
    %v4772 = vpack.c.b16 %v4649, %v4646
    %v4773 = vpack.c.b16 %v4650, %v4647
    %v4774 = vpack.c.b16 %v4654, %v4651
    %v4775 = vpack.c.b16 %v4655, %v4652
    %v4776 = vpack.c.b16 %v4656, %v4653
    %v4777 = vpack.c.b16 %v4660, %v4657
    %v4778 = vpack.c.b16 %v4661, %v4658
    %v4779 = vpack.c.b16 %v4662, %v4659
    %v4780 = vpack.c.b16 %v4666, %v4663
    %v4781 = vpack.c.b16 %v4667, %v4664
    %v4782 = vpack.c.b16 %v4668, %v4665
    %v4783 = vpack.c.b16 %v4672, %v4669
    %v4784 = vpack.c.b16 %v4673, %v4670
    %v4785 = vpack.c.b16 %v4674, %v4671
    %v4786 = vpack.c.b16 %v4678, %v4675
    %v4787 = vpack.c.b16 %v4679, %v4676
    %v4788 = vpack.c.b16 %v4680, %v4677
    %v4789 = vpack.c.b16 %v4684, %v4681
    %v4790 = vpack.c.b16 %v4685, %v4682
    %v4791 = vpack.c.b16 %v4686, %v4683
    %v4792 = vpack.c.b16 %v4690, %v4687
    %v4793 = vpack.c.b16 %v4691, %v4688
    %v4794 = vpack.c.b16 %v4692, %v4689
    %v4795 = vpack.c.b16 %v4696, %v4693
    %v4796 = vpack.c.b16 %v4697, %v4694
    %v4797 = vpack.c.b16 %v4698, %v4695
    %v4798 = vpack.c.b16 %v4702, %v4699
    %v4799 = vpack.c.b16 %v4703, %v4700
    %v4800 = vpack.c.b16 %v4704, %v4701
    %4897 = vmatprep.subr.bf16.mxu0 %v4706
    %4898 = vmatpush1.bf16.msra.mxu0 %v4705
    %4899 = vmatprep.subr.bf16.mxu0 %v4709
    %4900 = vmatpush1.bf16.msra.mxu0 %v4708
    %4901 = vmatprep.subr.bf16.mxu0 %v4712
    %4902 = vmatpush1.bf16.msra.mxu0 %v4711
    %4903 = vmatprep.subr.bf16.mxu0 %v4715
    %4904 = vmatpush1.bf16.msra.mxu0 %v4714
    %4905 = vmatprep.subr.bf16.mxu0 %v4718
    %4906 = vmatpush1.bf16.msra.mxu0 %v4717
    %4907 = vmatprep.subr.bf16.mxu0 %v4721
    %4908 = vmatpush1.bf16.msra.mxu0 %v4720
    %4909 = vmatprep.subr.bf16.mxu0 %v4724
    %4910 = vmatpush1.bf16.msra.mxu0 %v4723
    %4911 = vmatprep.subr.bf16.mxu0 %v4727
    %4912 = vmatpush1.bf16.msra.mxu0 %v4726
    %4913 = vmatprep.subr.bf16.mxu0 %v4730
    %4914 = vmatpush1.bf16.msra.mxu0 %v4729
    %4915 = vmatprep.subr.bf16.mxu0 %v4733
    %4916 = vmatpush1.bf16.msra.mxu0 %v4732
    %4917 = vmatprep.subr.bf16.mxu0 %v4736
    %4918 = vmatpush1.bf16.msra.mxu0 %v4735
    %4919 = vmatprep.subr.bf16.mxu0 %v4739
    %4920 = vmatpush1.bf16.msra.mxu0 %v4738
    %4921 = vmatprep.subr.bf16.mxu0 %v4742
    %4922 = vmatpush1.bf16.msra.mxu0 %v4741
    %4923 = vmatprep.subr.bf16.mxu0 %v4745
    %4924 = vmatpush1.bf16.msra.mxu0 %v4744
    %4925 = vmatprep.subr.bf16.mxu0 %v4748
    %4926 = vmatpush1.bf16.msra.mxu0 %v4747
    %4927 = vmatprep.subr.bf16.mxu0 %v4751
    %4928 = vmatpush1.bf16.msra.mxu0 %v4750
    %4929 = vmatprep.mubr.bf16.mxu0 %v4254
    %4930 = vmatmul.mubr.bf16.gmra.mrb[0].mxu0 %v4253
    %v4931 = vpop.f32.mrb[0].mxu0
    %v4932 = vadd.f32 0.0, %v4931
    %v4933 = vpop.f32.mrb[0].mxu0
    %v4934 = vadd.f32 0.0, %v4933
    %v4935 = vpop.f32.mrb[0].mxu0
    %v4936 = vadd.f32 0.0, %v4935
    %v4937 = vpop.f32.mrb[0].mxu0
    %v4938 = vadd.f32 0.0, %v4937
    %4939 = vdwg.mxu0
    %4940 = vmatprep.subr.bf16.mxu0 %v4754
    %4941 = vmatpush1.bf16.msra.mxu0 %v4753
    %4942 = vmatprep.subr.bf16.mxu0 %v4757
    %4943 = vmatpush1.bf16.msra.mxu0 %v4756
    %4944 = vmatprep.subr.bf16.mxu0 %v4760
    %4945 = vmatpush1.bf16.msra.mxu0 %v4759
    %4946 = vmatprep.subr.bf16.mxu0 %v4763
    %4947 = vmatpush1.bf16.msra.mxu0 %v4762
    %4948 = vmatprep.subr.bf16.mxu0 %v4766
    %4949 = vmatpush1.bf16.msra.mxu0 %v4765
    %4950 = vmatprep.subr.bf16.mxu0 %v4769
    %4951 = vmatpush1.bf16.msra.mxu0 %v4768
    %4952 = vmatprep.subr.bf16.mxu0 %v4772
    %4953 = vmatpush1.bf16.msra.mxu0 %v4771
    %4954 = vmatprep.subr.bf16.mxu0 %v4775
    %4955 = vmatpush1.bf16.msra.mxu0 %v4774
    %4956 = vmatprep.subr.bf16.mxu0 %v4778
    %4957 = vmatpush1.bf16.msra.mxu0 %v4777
    %4958 = vmatprep.subr.bf16.mxu0 %v4781
    %4959 = vmatpush1.bf16.msra.mxu0 %v4780
    %4960 = vmatprep.subr.bf16.mxu0 %v4784
    %4961 = vmatpush1.bf16.msra.mxu0 %v4783
    %4962 = vmatprep.subr.bf16.mxu0 %v4787
    %4963 = vmatpush1.bf16.msra.mxu0 %v4786
    %4964 = vmatprep.subr.bf16.mxu0 %v4790
    %4965 = vmatpush1.bf16.msra.mxu0 %v4789
    %4966 = vmatprep.subr.bf16.mxu0 %v4793
    %4967 = vmatpush1.bf16.msra.mxu0 %v4792
    %4968 = vmatprep.subr.bf16.mxu0 %v4796
    %4969 = vmatpush1.bf16.msra.mxu0 %v4795
    %4970 = vmatprep.subr.bf16.mxu0 %v4799
    %4971 = vmatpush1.bf16.msra.mxu0 %v4798
    %4972 = vmatprep.mubr.bf16.mxu0 %v4256
    %4973 = vmatmul.mubr.bf16.gmra.mrb[0].mxu0 %v4255
    %v4974 = vpop.f32.mrb[0].mxu0
    %v4975 = vadd.f32 %v4932, %v4974
    %v4976 = vpop.f32.mrb[0].mxu0
    %v4977 = vadd.f32 %v4934, %v4976
    %v4978 = vpop.f32.mrb[0].mxu0
    %v4979 = vadd.f32 %v4936, %v4978
    %v4980 = vpop.f32.mrb[0].mxu0
    %v4981 = vadd.f32 %v4938, %v4980
    %4982 = vdwg.mxu0
    %4983 = vmatprep.subr.bf16.mxu0 0
    %4984 = vmatpush1.bf16.msra.mxu0 %v4707
    %4985 = vmatprep.subr.bf16.mxu0 0
    %4986 = vmatpush1.bf16.msra.mxu0 %v4710
    %4987 = vmatprep.subr.bf16.mxu0 0
    %4988 = vmatpush1.bf16.msra.mxu0 %v4713
    %4989 = vmatprep.subr.bf16.mxu0 0
    %4990 = vmatpush1.bf16.msra.mxu0 %v4716
    %4991 = vmatprep.subr.bf16.mxu0 0
    %4992 = vmatpush1.bf16.msra.mxu0 %v4719
    %4993 = vmatprep.subr.bf16.mxu0 0
    %4994 = vmatpush1.bf16.msra.mxu0 %v4722
    %4995 = vmatprep.subr.bf16.mxu0 0
    %4996 = vmatpush1.bf16.msra.mxu0 %v4725
    %4997 = vmatprep.subr.bf16.mxu0 0
    %4998 = vmatpush1.bf16.msra.mxu0 %v4728
    %4999 = vmatprep.subr.bf16.mxu0 0
    %5000 = vmatpush1.bf16.msra.mxu0 %v4731
    %5001 = vmatprep.subr.bf16.mxu0 0
    %5002 = vmatpush1.bf16.msra.mxu0 %v4734
    %5003 = vmatprep.subr.bf16.mxu0 0
    %5004 = vmatpush1.bf16.msra.mxu0 %v4737
    %5005 = vmatprep.subr.bf16.mxu0 0
    %5006 = vmatpush1.bf16.msra.mxu0 %v4740
    %5007 = vmatprep.subr.bf16.mxu0 0
    %5008 = vmatpush1.bf16.msra.mxu0 %v4743
    %5009 = vmatprep.subr.bf16.mxu0 0
    %5010 = vmatpush1.bf16.msra.mxu0 %v4746
    %5011 = vmatprep.subr.bf16.mxu0 0
    %5012 = vmatpush1.bf16.msra.mxu0 %v4749
    %5013 = vmatprep.subr.bf16.mxu0 0
    %5014 = vmatpush1.bf16.msra.mxu0 %v4752
    %5015 = vmatprep.mubr.bf16.mxu0 %v4254
    %5016 = vmatmul.mubr.bf16.gmra.mrb[0].mxu0 %v4253
    %v5017 = vpop.f32.mrb[0].mxu0
    %v5018 = vadd.f32 0.0, %v5017
    %v5019 = vpop.f32.mrb[0].mxu0
    %v5020 = vpop.f32.mrb[0].mxu0
    %v5021 = vadd.f32 0.0, %v5020
    %v5022 = vpop.f32.mrb[0].mxu0
    %5023 = vdwg.mxu0
    %5024 = vmatprep.subr.bf16.mxu0 0
    %5025 = vmatpush1.bf16.msra.mxu0 %v4755
    %5026 = vmatprep.subr.bf16.mxu0 0
    %5027 = vmatpush1.bf16.msra.mxu0 %v4758
    %5028 = vmatprep.subr.bf16.mxu0 0
    %5029 = vmatpush1.bf16.msra.mxu0 %v4761
    %5030 = vmatprep.subr.bf16.mxu0 0
    %5031 = vmatpush1.bf16.msra.mxu0 %v4764
    %5032 = vmatprep.subr.bf16.mxu0 0
    %5033 = vmatpush1.bf16.msra.mxu0 %v4767
    %5034 = vmatprep.subr.bf16.mxu0 0
    %5035 = vmatpush1.bf16.msra.mxu0 %v4770
    %5036 = vmatprep.subr.bf16.mxu0 0
    %5037 = vmatpush1.bf16.msra.mxu0 %v4773
    %5038 = vmatprep.subr.bf16.mxu0 0
    %5039 = vmatpush1.bf16.msra.mxu0 %v4776
    %5040 = vmatprep.subr.bf16.mxu0 0
    %5041 = vmatpush1.bf16.msra.mxu0 %v4779
    %5042 = vmatprep.subr.bf16.mxu0 0
    %5043 = vmatpush1.bf16.msra.mxu0 %v4782
    %5044 = vmatprep.subr.bf16.mxu0 0
    %5045 = vmatpush1.bf16.msra.mxu0 %v4785
    %5046 = vmatprep.subr.bf16.mxu0 0
    %5047 = vmatpush1.bf16.msra.mxu0 %v4788
    %5048 = vmatprep.subr.bf16.mxu0 0
    %5049 = vmatpush1.bf16.msra.mxu0 %v4791
    %5050 = vmatprep.subr.bf16.mxu0 0
    %5051 = vmatpush1.bf16.msra.mxu0 %v4794
    %5052 = vmatprep.subr.bf16.mxu0 0
    %5053 = vmatpush1.bf16.msra.mxu0 %v4797
    %5054 = vmatprep.subr.bf16.mxu0 0
    %5055 = vmatpush1.bf16.msra.mxu0 %v4800
    %5056 = vmatprep.mubr.bf16.mxu0 %v4256
    %5057 = vmatmul.mubr.bf16.gmra.mrb[0].mxu0 %v4255
    %v5058 = vpop.f32.mrb[0].mxu0
    %v5059 = vadd.f32 %v5018, %v5058
    %v5060 = vpop.f32.mrb[0].mxu0
    %v5061 = vpop.f32.mrb[0].mxu0
    %v5062 = vadd.f32 %v5021, %v5061
    %v5063 = vpop.f32.mrb[0].mxu0
    %5064 = vdwg.mxu0
    %v5065 = vadd.f32 %v3321, %v4975
    %v5066 = vadd.f32 %v3323, %v4977
    %v5067 = vadd.f32 %v3405, %v5059
    %v5068 = vadd.f32 %v3325, %v4979
    %v5069 = vadd.f32 %v3327, %v4981
    %v5070 = vadd.f32 %v3408, %v5062
    %v5071 = vld [vmem:[#allocation12] sm:$0x7]
    %v5073 = vlaneseq
    %v5074 = vshrl.u32 %v5073, 7
    %v5075 = vsub.s32 0, %v5074
    %v5076 = vrot.slane %v5071, %v5075
    %v5077 = vlaneseq
    %v5078 = vshrl.u32 %v5077, 7
    %v5079 = vsub.s32 1, %v5078
    %v5080 = vrot.slane %v5071, %v5079
    %v5081 = vlaneseq
    %v5082 = vshrl.u32 %v5081, 7
    %v5083 = vsub.s32 2, %v5082
    %v5084 = vrot.slane %v5071, %v5083
    %v5088 = vadd.f32 %v5065, %v5076
    %v5089 = vadd.f32 %v5066, %v5080
    %v5090 = vadd.f32 %v5067, %v5084
    %v5091 = vadd.f32 %v5068, %v5076
    %v5092 = vadd.f32 %v5069, %v5080
    %v5093 = vadd.f32 %v5070, %v5084
    %v5094 = vadd.f32 %v5088, %v94
    %v5095 = vadd.f32 %v5089, %v95
    %v5096 = vadd.f32 %v5090, %v96
    %v5097 = vadd.f32 %v5091, %v97
    %v5098 = vadd.f32 %v5092, %v98
    %v5099 = vadd.f32 %v5093, %v99
    %v5100 = vadd.f32 %v5094, %v5095
    %v5101 = vadd.f32 %v5100, %v5096
    %5102 = vadd.xlane.f32.xlu0 %v5101
    %v5103 = vpop.xlane.xlu0 %5102
    %v5104 = vadd.f32 %v5097, %v5098
    %v5105 = vadd.f32 %v5104, %v5099
    %5106 = vadd.xlane.f32.xlu0 %v5105
    %v5107 = vpop.xlane.xlu0 %5106
    %v5108 = vrcp.pop 384.0
    %v5109 = vmul.f32 %v5103, %v5108
    %v5110 = vmul.f32 %v5107, %v5108
    %v5111 = vsub.f32 %v5094, %v5109
    %v5112 = vsub.f32 %v5095, %v5109
    %v5113 = vsub.f32 %v5096, %v5109
    %v5114 = vsub.f32 %v5097, %v5110
    %v5115 = vsub.f32 %v5098, %v5110
    %v5116 = vsub.f32 %v5099, %v5110
    %v5117 = vmul.f32 %v5111, %v5111
    %v5118 = vmul.f32 %v5112, %v5112
    %v5119 = vmul.f32 %v5113, %v5113
    %v5120 = vmul.f32 %v5114, %v5114
    %v5121 = vmul.f32 %v5115, %v5115
    %v5122 = vmul.f32 %v5116, %v5116
    %v5123 = vadd.f32 %v5117, %v5118
    %v5124 = vadd.f32 %v5123, %v5119
    %5125 = vadd.xlane.f32.xlu0 %v5124
    %v5126 = vpop.xlane.xlu0 %5125
    %v5127 = vadd.f32 %v5120, %v5121
    %v5128 = vadd.f32 %v5127, %v5122
    %5129 = vadd.xlane.f32.xlu0 %v5128
    %v5130 = vpop.xlane.xlu0 %5129
    %v5131 = vmul.f32 %v5126, 0.002610966
    %v5132 = vmul.f32 %v5130, 0.002610966
    %v5133 = vadd.f32 %v5131, 1e-08
    %v5134 = vadd.f32 %v5132, 1e-08
    %v5135 = vrsqrt.pop %v5133
    %v5136 = vrsqrt.pop %v5134
    %s5137 = sld [smem:[#allocation2]]
    %s5138 = sld [smem:[#allocation3]]
    %v5139 = vmul.f32 %v5111, %v5135
    %v5140 = vmul.f32 %v5112, %v5135
    %v5141 = vmul.f32 %v5113, %v5135
    %v5142 = vmul.f32 %v5114, %v5136
    %v5143 = vmul.f32 %v5115, %v5136
    %v5144 = vmul.f32 %v5116, %v5136
    %v5145 = vstv %s5137
    %v5146 = vmul.f32 %v5145, %v5139
    %v5147 = vmul.f32 %v5145, %v5140
    %v5148 = vmul.f32 %v5145, %v5141
    %v5149 = vmul.f32 %v5145, %v5142
    %v5150 = vmul.f32 %v5145, %v5143
    %v5151 = vmul.f32 %v5145, %v5144
    %v5152 = vstv %s5138
    %v5153 = vadd.f32 %v5146, %v5152
    %v5154 = vadd.f32 %v5147, %v5152
    %v5155 = vadd.f32 %v5148, %v5152
    %v5156 = vadd.f32 %v5149, %v5152
    %v5157 = vadd.f32 %v5150, %v5152
    %v5158 = vadd.f32 %v5151, %v5152
    %5159 = vst [vmem:[#allocation13] sm:$0xff] %v5153
    %5160 = vst [vmem:[#allocation13 + $0x8] sm:$0xff] %v5154
    %5161 = vst [vmem:[#allocation13 + $0x10] sm:$0xff] %v5155
    %5162 = vst [vmem:[#allocation13 + $0x18] sm:$0xff] %v5156
    %5163 = vst [vmem:[#allocation13 + $0x20] sm:$0xff] %v5157
    %5164 = vst [vmem:[#allocation13 + $0x28] sm:$0xff] %v5158
    // Predicated region
    $region50: #{tpu_custom_call.1} parent=1 // pred_check
      _
    $region51: #{tpu_custom_call.1} parent=1 // pred_check_branch
      %5166 = sbr.rel (0) target = $region53
    $region52: #{tpu_custom_call.1} parent=1 // pred_region
      %s5168 = ssub.s32 768, 768
      %5169 = vsyncadd [#allocation6], %s5168
      %s5170 = sshll.u32 [#allocation13], 4
      %s5171 = int_to_ptr.vmem [resolvable:$true] %s5170
      %5176 = dma.vmem_to_hbm [thread:$0]  %s5171, 768, %s7, [#allocation6], 384, 384, 24
    $region53: #{tpu_custom_call.1} parent=1 // pred_fallthru
      _
    // Predicated region
    $region54: #{tpu_custom_call.1} parent=1 // pred_check
      _
    $region55: #{tpu_custom_call.1} parent=1 // pred_check_branch
      %5178 = sbr.rel (0) target = $region57
    $region56: #{tpu_custom_call.1} parent=1 // pred_region
      %5179 = dma.done [#allocation6], 768
    $region57: #{tpu_custom_call.1} parent=1 // pred_fallthru
      _
    %5180 = vsyncpa [#allocation5], 1
    %5181 = vsyncpa [#allocation8], 1
    %5182 = vsyncpa [#allocation11], 1
    %5183 = vsyncpa [#allocation6], 1

</llo_original>
